<compile_context>
chip_gen: v6e
topology: v6e:2x2x1
jax: 0.10.0
libtpu: 0.0.40
codegen_flags: <defaults>
</compile_context>

<pallas_src>
import functools

import jax
import jax.numpy as jnp
from jax.experimental import pallas as pl
from jax.experimental.pallas import tpu as pltpu

BN_EPS = 1e-5


# ----------------------------------------------------------------------------
# Fused UNetConv kernel (Bt batch elements per grid step)
# ----------------------------------------------------------------------------
def _unet_conv_kernel(x_ref, w1_ref, b1_ref, w2_ref, b2_ref, o_ref,
                      xcat_ref, col1_ref, hp_ref, col2_ref,
                      *, K, pad, Bt, L1, L2):
    """conv1 -> BN/ReLU -> reflect-pad -> conv2 -> BN/ReLU for Bt elements.

    x_ref : (Bt, C_in, Lp0)  bf16   reflect-padded input (padded in the wrapper)
    w1_ref: (C_out, K*C_in)  bf16   conv1 weights, BN scale folded, im2col layout
    b1_ref: (C_out, 1)       f32    conv1 bias + BN shift
    w2_ref: (C_out, K*C_out) bf16   conv2 weights, BN scale folded
    b2_ref: (C_out, 1)       f32
    o_ref : (Bt, C_out, L2)  f32    output block
    xcat/col1/hp/col2 : bf16 VMEM scratch (lane-concatenated sequences / slabs)
    """
    C_in = x_ref.shape[1]
    C_out = o_ref.shape[1]
    Lp0 = x_ref.shape[2]                 # padded input length per element
    Lp1 = L1 + 2 * pad                   # padded hidden length per element
    n1 = Bt * Lp0 - (K - 1)              # conv1 matmul N (incl. junk between elems)
    n2 = Bt * Lp1 - (K - 1)              # conv2 matmul N

    # -- lay the Bt padded sequences side by side along the lane axis ---------
    for b in range(Bt):                                      # static unroll
        xcat_ref[:, b * Lp0:(b + 1) * Lp0] = x_ref[b]

    # -- conv1: im2col slab (one big slice per tap) + ONE MXU matmul ----------
    for k in range(K):
        col1_ref[k * C_in:(k + 1) * C_in, :] = xcat_ref[:, k:k + n1]
    h = jnp.dot(w1_ref[...], col1_ref[...], preferred_element_type=jnp.float32)
    h = jnp.maximum(h + b1_ref[...], 0.0).astype(jnp.bfloat16)      # (C_out, n1)

    # -- reflect-pad the hidden activation in VMEM (never touches HBM) --------
    if Lp1 == Lp0:
        # "same"-size conv (2*pad == K-1): a single store places every element's
        # valid columns at its padded center; junk columns land in the edge gaps
        # and are overwritten by the reflect columns below.
        hp_ref[:, pad:pad + n1] = h
    else:
        for b in range(Bt):
            hp_ref[:, b * Lp1 + pad:b * Lp1 + pad + L1] = h[:, b * Lp0:b * Lp0 + L1]
    for b in range(Bt):
        lo = b * Lp1                      # dest start of this element in hp
        src = b * Lp0                     # src start of its valid columns in h
        for j in range(pad):              # TODO(synk): coalesce (lane reversal)
            hp_ref[:, lo + j:lo + j + 1] = \
                h[:, src + pad - j:src + pad - j + 1]                       # left
            hp_ref[:, lo + pad + L1 + j:lo + pad + L1 + j + 1] = \
                h[:, src + L1 - 2 - j:src + L1 - 1 - j]                     # right

    # -- conv2: im2col slab + ONE MXU matmul ----------------------------------
    for k in range(K):
        col2_ref[k * C_out:(k + 1) * C_out, :] = hp_ref[:, k:k + n2]
    y = jnp.dot(w2_ref[...], col2_ref[...], preferred_element_type=jnp.float32)
    y = jnp.maximum(y + b2_ref[...], 0.0)                            # (C_out, n2)

    # -- scatter each element's valid columns to the output block -------------
    for b in range(Bt):
        o_ref[b] = y[:, b * Lp1:b * Lp1 + L2].astype(o_ref.dtype)


# ----------------------------------------------------------------------------
# Wrapper: fold eval-mode BatchNorm, pad input in XLA, call the kernel
# ----------------------------------------------------------------------------
def _fold_conv_bn(p):
    """Fold BN(eval) into the conv. Returns (bf16 im2col weights, f32 shift)."""
    C_out, C_in, K = p["w"].shape
    scale = p["gamma"] * jax.lax.rsqrt(p["var"] + BN_EPS)             # (C_out,)
    w = p["w"] * scale[:, None, None]                                 # (C_out, C_in, K)
    # im2col slab row index = k*C_in + c_in  ->  weight column order (k, c_in)
    w_mat = jnp.transpose(w, (0, 2, 1)).reshape(C_out, K * C_in).astype(jnp.bfloat16)
    shift = (p["beta"] + (p["b"] - p["mean"]) * scale).reshape(C_out, 1)
    return w_mat, shift.astype(jnp.float32)


def unet_conv_forward(params, x, *, kernel_size=9, padding=4, batch_tile=8):
    B, C_in, L0 = x.shape
    K, pad = kernel_size, padding
    C_out = params["c1"]["w"].shape[0]
    L1 = L0 + 2 * pad - (K - 1)           # length after conv1
    L2 = L1 + 2 * pad - (K - 1)           # length after conv2
    assert L1 >= 1 and L2 >= 1
    assert pad < L0 and pad < L1, "reflect padding requires pad < length"
    Lp0 = L0 + 2 * pad
    Lp1 = L1 + 2 * pad

    w1, b1 = _fold_conv_bn(params["c1"])
    w2, b2 = _fold_conv_bn(params["c2"])

    # bf16 HBM input (half the DMA bytes); conv1 reflect padding done once in XLA
    # so the kernel never issues per-column edge stores for conv1.
    xp = jnp.pad(x.astype(jnp.bfloat16), ((0, 0), (0, 0), (pad, pad)), mode="reflect")

    # Batch tiling: Bt elements per grid step; zero-pad the batch to a multiple.
    Bt = max(1, min(batch_tile, B))
    Bp = ((B + Bt - 1) // Bt) * Bt
    if Bp != B:
        xp = jnp.pad(xp, ((0, Bp - B), (0, 0), (0, 0)))

    n1 = Bt * Lp0 - (K - 1)
    n2 = Bt * Lp1 - (K - 1)
    kernel = functools.partial(_unet_conv_kernel, K=K, pad=pad, Bt=Bt, L1=L1, L2=L2)

    out = pl.pallas_call(
        kernel,
        out_shape=jax.ShapeDtypeStruct((Bp, C_out, L2), jnp.float32),
        grid=(Bp // Bt,),
        in_specs=[
            pl.BlockSpec((Bt, C_in, Lp0), lambda i: (i, 0, 0)),
            pl.BlockSpec((C_out, K * C_in), lambda i: (0, 0)),
            pl.BlockSpec((C_out, 1), lambda i: (0, 0)),
            pl.BlockSpec((C_out, K * C_out), lambda i: (0, 0)),
            pl.BlockSpec((C_out, 1), lambda i: (0, 0)),
        ],
        out_specs=pl.BlockSpec((Bt, C_out, L2), lambda i: (i, 0, 0)),
        scratch_shapes=[
            pltpu.VMEM((C_in, Bt * Lp0), jnp.bfloat16),     # lane-concat padded input
            pltpu.VMEM((K * C_in, n1), jnp.bfloat16),       # conv1 im2col slab
            pltpu.VMEM((C_out, Bt * Lp1), jnp.bfloat16),    # padded hidden activation
            pltpu.VMEM((K * C_out, n2), jnp.bfloat16),      # conv2 im2col slab
        ],
        compiler_params=pltpu.CompilerParams(
            dimension_semantics=("parallel",),
            vmem_limit_bytes=32 * 1024 * 1024,
        ),
    )(xp, w1, b1, w2, b2)
    return out[:B] if Bp != B else out


# ----------------------------------------------------------------------------
# Deterministic parameter init (shapes match the PyTorch module __init__)
# ----------------------------------------------------------------------------
def _init_conv_bn(key, c_in, c_out, k):
    kw, kb = jax.random.split(key)
    bound = 1.0 / (c_in * k) ** 0.5
    return {
        "w": jax.random.uniform(kw, (c_out, c_in, k), jnp.float32, -bound, bound),
        "b": jax.random.uniform(kb, (c_out,), jnp.float32, -bound, bound),
        "gamma": jnp.ones((c_out,), jnp.float32),
        "beta": jnp.zeros((c_out,), jnp.float32),
        "mean": jnp.zeros((c_out,), jnp.float32),
        "var": jnp.ones((c_out,), jnp.float32),
    }


def init_params(key, c_in, c_out, k):
    k1, k2 = jax.random.split(key)
    return {"c1": _init_conv_bn(k1, c_in, c_out, k),
            "c2": _init_conv_bn(k2, c_out, c_out, k)}


# ----------------------------------------------------------------------------
# Pure-JAX reference (f32) for correctness check
# ----------------------------------------------------------------------------
def _reference_forward(params, x, *, kernel_size=9, padding=4):
    def conv_bn_relu(x, p):
        xp = jnp.pad(x, ((0, 0), (0, 0), (padding, padding)), mode="reflect")
        y = jax.lax.conv_general_dilated(
            xp, p["w"], window_strides=(1,), padding="VALID",
            dimension_numbers=("NCH", "OIH", "NCH"),
            precision=jax.lax.Precision.HIGHEST)
        scale = p["gamma"] / jnp.sqrt(p["var"] + BN_EPS)
        shift = p["beta"] + (p["b"] - p["mean"]) * scale
        return jnp.maximum(y * scale[None, :, None] + shift[None, :, None], 0.0)
    return conv_bn_relu(conv_bn_relu(x, params["c1"]), params["c2"])


if __name__ == "__main__":
    key = jax.random.PRNGKey(0)
    pkey, xkey, xkey2 = jax.random.split(key, 3)

    # Small shapes consistent with the module defaults (kernel_size=9, padding=4).
    B, C_IN, C_OUT, L = 16, 4, 8, 128     # L multiple of 128 -> lane-dense output
    params = init_params(pkey, C_IN, C_OUT, 9)
    x = jax.random.normal(xkey, (B, C_IN, L), jnp.float32)

    fwd = jax.jit(functools.partial(unet_conv_forward,
                                    kernel_size=9, padding=4, batch_tile=8))
    y = jax.block_until_ready(fwd(params, x))
    assert y.shape == (B, C_OUT, L), y.shape
    assert bool(jnp.all(jnp.isfinite(y)))

    # Correctness vs. f32 reference (bf16 MXU operands -> small, bounded drift).
    y_ref = _reference_forward(params, x, kernel_size=9, padding=4)
    err = float(jnp.max(jnp.abs(y - y_ref)))
    assert err < 5e-2, f"max abs error vs reference = {err}"

    # Second config: batch not divisible by the batch tile (exercises padding +
    # a multi-step "parallel" grid).
    B2 = 6
    x2 = jax.random.normal(xkey2, (B2, C_IN, L), jnp.float32)
    fwd2 = jax.jit(functools.partial(unet_conv_forward,
                                     kernel_size=9, padding=4, batch_tile=4))
    y2 = jax.block_until_ready(fwd2(params, x2))
    assert y2.shape == (B2, C_OUT, L), y2.shape
    y2_ref = _reference_forward(params, x2, kernel_size=9, padding=4)
    err2 = float(jnp.max(jnp.abs(y2 - y2_ref)))
    assert err2 < 5e-2, f"max abs error vs reference (ragged batch) = {err2}"

    print("KERNEL_OK")
</pallas_src>

<mosaic_0001>
module attributes {stable_mosaic.version = 11 : i64} {
  func.func @_unet_conv_kernel(%arg0: i32, %arg1: memref<8x4x136xbf16, #tpu.memory_space<vmem>>, %arg2: memref<8x36xbf16, #tpu.memory_space<vmem>>, %arg3: memref<8x1xf32, #tpu.memory_space<vmem>>, %arg4: memref<8x72xbf16, #tpu.memory_space<vmem>>, %arg5: memref<8x1xf32, #tpu.memory_space<vmem>>, %arg6: memref<8x8x128xf32, #tpu.memory_space<vmem>>, %arg7: memref<4x1088xbf16, #tpu.memory_space<vmem>>, %arg8: memref<36x1080xbf16, #tpu.memory_space<vmem>>, %arg9: memref<8x1088xbf16, #tpu.memory_space<vmem>>, %arg10: memref<72x1080xbf16, #tpu.memory_space<vmem>>) attributes {dimension_semantics = [#tpu.dimension_semantics<parallel>], iteration_bounds = array<i64: 2>, scalar_prefetch = 0 : i64, scratch_operands = 4 : i64, tpu.core_type = #tpu.core_type<tc>, window_params = [{transform_indices = @transform_0, window_bounds = array<i64: 8, 4, 136>}, {pipeline_mode = #tpu.pipeline_mode<synchronous>, transform_indices = @transform_1, window_bounds = array<i64: 8, 36>}, {pipeline_mode = #tpu.pipeline_mode<synchronous>, transform_indices = @transform_2, window_bounds = array<i64: 8, 1>}, {pipeline_mode = #tpu.pipeline_mode<synchronous>, transform_indices = @transform_3, window_bounds = array<i64: 8, 72>}, {pipeline_mode = #tpu.pipeline_mode<synchronous>, transform_indices = @transform_4, window_bounds = array<i64: 8, 1>}, {transform_indices = @transform_5, window_bounds = array<i64: 8, 8, 128>}]} {
    %c0 = arith.constant 0 : index
    %c0_0 = arith.constant 0 : index
    %c0_1 = arith.constant 0 : index
    %0 = vector.load %arg1[%c0, %c0_0, %c0_1] : memref<8x4x136xbf16, #tpu.memory_space<vmem>>, vector<1x4x136xbf16>
    %1 = vector.shape_cast %0 : vector<1x4x136xbf16> to vector<4x136xbf16>
    %c0_2 = arith.constant 0 : index
    %c0_3 = arith.constant 0 : index
    %2 = vector.load %arg7[%c0_2, %c0_3] : memref<4x1088xbf16, #tpu.memory_space<vmem>>, vector<4x136xbf16>
    tpu.vector_store %arg7[%c0_2, %c0_3], %1 {strides = array<i32>} : memref<4x1088xbf16, #tpu.memory_space<vmem>>, vector<4x136xbf16>,
    %c1 = arith.constant 1 : index
    %c0_4 = arith.constant 0 : index
    %c0_5 = arith.constant 0 : index
    %3 = vector.load %arg1[%c1, %c0_4, %c0_5] : memref<8x4x136xbf16, #tpu.memory_space<vmem>>, vector<1x4x136xbf16>
    %4 = vector.shape_cast %3 : vector<1x4x136xbf16> to vector<4x136xbf16>
    %c0_6 = arith.constant 0 : index
    %c136 = arith.constant 136 : index
    %5 = vector.load %arg7[%c0_6, %c136] : memref<4x1088xbf16, #tpu.memory_space<vmem>>, vector<4x136xbf16>
    tpu.vector_store %arg7[%c0_6, %c136], %4 {strides = array<i32>} : memref<4x1088xbf16, #tpu.memory_space<vmem>>, vector<4x136xbf16>,
    %c2 = arith.constant 2 : index
    %c0_7 = arith.constant 0 : index
    %c0_8 = arith.constant 0 : index
    %6 = vector.load %arg1[%c2, %c0_7, %c0_8] : memref<8x4x136xbf16, #tpu.memory_space<vmem>>, vector<1x4x136xbf16>
    %7 = vector.shape_cast %6 : vector<1x4x136xbf16> to vector<4x136xbf16>
    %c0_9 = arith.constant 0 : index
    %c272 = arith.constant 272 : index
    %8 = vector.load %arg7[%c0_9, %c272] : memref<4x1088xbf16, #tpu.memory_space<vmem>>, vector<4x136xbf16>
    tpu.vector_store %arg7[%c0_9, %c272], %7 {strides = array<i32>} : memref<4x1088xbf16, #tpu.memory_space<vmem>>, vector<4x136xbf16>,
    %c3 = arith.constant 3 : index
    %c0_10 = arith.constant 0 : index
    %c0_11 = arith.constant 0 : index
    %9 = vector.load %arg1[%c3, %c0_10, %c0_11] : memref<8x4x136xbf16, #tpu.memory_space<vmem>>, vector<1x4x136xbf16>
    %10 = vector.shape_cast %9 : vector<1x4x136xbf16> to vector<4x136xbf16>
    %c0_12 = arith.constant 0 : index
    %c408 = arith.constant 408 : index
    %11 = vector.load %arg7[%c0_12, %c408] : memref<4x1088xbf16, #tpu.memory_space<vmem>>, vector<4x136xbf16>
    tpu.vector_store %arg7[%c0_12, %c408], %10 {strides = array<i32>} : memref<4x1088xbf16, #tpu.memory_space<vmem>>, vector<4x136xbf16>,
    %c4 = arith.constant 4 : index
    %c0_13 = arith.constant 0 : index
    %c0_14 = arith.constant 0 : index
    %12 = vector.load %arg1[%c4, %c0_13, %c0_14] : memref<8x4x136xbf16, #tpu.memory_space<vmem>>, vector<1x4x136xbf16>
    %13 = vector.shape_cast %12 : vector<1x4x136xbf16> to vector<4x136xbf16>
    %c0_15 = arith.constant 0 : index
    %c544 = arith.constant 544 : index
    %14 = vector.load %arg7[%c0_15, %c544] : memref<4x1088xbf16, #tpu.memory_space<vmem>>, vector<4x136xbf16>
    tpu.vector_store %arg7[%c0_15, %c544], %13 {strides = array<i32>} : memref<4x1088xbf16, #tpu.memory_space<vmem>>, vector<4x136xbf16>,
    %c5 = arith.constant 5 : index
    %c0_16 = arith.constant 0 : index
    %c0_17 = arith.constant 0 : index
    %15 = vector.load %arg1[%c5, %c0_16, %c0_17] : memref<8x4x136xbf16, #tpu.memory_space<vmem>>, vector<1x4x136xbf16>
    %16 = vector.shape_cast %15 : vector<1x4x136xbf16> to vector<4x136xbf16>
    %c0_18 = arith.constant 0 : index
    %c680 = arith.constant 680 : index
    %17 = vector.load %arg7[%c0_18, %c680] : memref<4x1088xbf16, #tpu.memory_space<vmem>>, vector<4x136xbf16>
    tpu.vector_store %arg7[%c0_18, %c680], %16 {strides = array<i32>} : memref<4x1088xbf16, #tpu.memory_space<vmem>>, vector<4x136xbf16>,
    %c6 = arith.constant 6 : index
    %c0_19 = arith.constant 0 : index
    %c0_20 = arith.constant 0 : index
    %18 = vector.load %arg1[%c6, %c0_19, %c0_20] : memref<8x4x136xbf16, #tpu.memory_space<vmem>>, vector<1x4x136xbf16>
    %19 = vector.shape_cast %18 : vector<1x4x136xbf16> to vector<4x136xbf16>
    %c0_21 = arith.constant 0 : index
    %c816 = arith.constant 816 : index
    %20 = vector.load %arg7[%c0_21, %c816] : memref<4x1088xbf16, #tpu.memory_space<vmem>>, vector<4x136xbf16>
    tpu.vector_store %arg7[%c0_21, %c816], %19 {strides = array<i32>} : memref<4x1088xbf16, #tpu.memory_space<vmem>>, vector<4x136xbf16>,
    %c7 = arith.constant 7 : index
    %c0_22 = arith.constant 0 : index
    %c0_23 = arith.constant 0 : index
    %21 = vector.load %arg1[%c7, %c0_22, %c0_23] : memref<8x4x136xbf16, #tpu.memory_space<vmem>>, vector<1x4x136xbf16>
    %22 = vector.shape_cast %21 : vector<1x4x136xbf16> to vector<4x136xbf16>
    %c0_24 = arith.constant 0 : index
    %c952 = arith.constant 952 : index
    %23 = vector.load %arg7[%c0_24, %c952] : memref<4x1088xbf16, #tpu.memory_space<vmem>>, vector<4x136xbf16>
    tpu.vector_store %arg7[%c0_24, %c952], %22 {strides = array<i32>} : memref<4x1088xbf16, #tpu.memory_space<vmem>>, vector<4x136xbf16>,
    %c0_25 = arith.constant 0 : index
    %c0_26 = arith.constant 0 : index
    %24 = vector.load %arg7[%c0_25, %c0_26] : memref<4x1088xbf16, #tpu.memory_space<vmem>>, vector<4x1080xbf16>
    %c0_27 = arith.constant 0 : index
    %c0_28 = arith.constant 0 : index
    %25 = vector.load %arg8[%c0_27, %c0_28] : memref<36x1080xbf16, #tpu.memory_space<vmem>>, vector<4x1080xbf16>
    tpu.vector_store %arg8[%c0_27, %c0_28], %24 {strides = array<i32>} : memref<36x1080xbf16, #tpu.memory_space<vmem>>, vector<4x1080xbf16>,
    %c0_29 = arith.constant 0 : index
    %c1_30 = arith.constant 1 : index
    %26 = vector.load %arg7[%c0_29, %c1_30] : memref<4x1088xbf16, #tpu.memory_space<vmem>>, vector<4x1080xbf16>
    %c4_31 = arith.constant 4 : index
    %c0_32 = arith.constant 0 : index
    %27 = vector.load %arg8[%c4_31, %c0_32] : memref<36x1080xbf16, #tpu.memory_space<vmem>>, vector<4x1080xbf16>
    tpu.vector_store %arg8[%c4_31, %c0_32], %26 {strides = array<i32>} : memref<36x1080xbf16, #tpu.memory_space<vmem>>, vector<4x1080xbf16>,
    %c0_33 = arith.constant 0 : index
    %c2_34 = arith.constant 2 : index
    %28 = vector.load %arg7[%c0_33, %c2_34] : memref<4x1088xbf16, #tpu.memory_space<vmem>>, vector<4x1080xbf16>
    %c8 = arith.constant 8 : index
    %c0_35 = arith.constant 0 : index
    %29 = vector.load %arg8[%c8, %c0_35] : memref<36x1080xbf16, #tpu.memory_space<vmem>>, vector<4x1080xbf16>
    tpu.vector_store %arg8[%c8, %c0_35], %28 {strides = array<i32>} : memref<36x1080xbf16, #tpu.memory_space<vmem>>, vector<4x1080xbf16>,
    %c0_36 = arith.constant 0 : index
    %c3_37 = arith.constant 3 : index
    %30 = vector.load %arg7[%c0_36, %c3_37] : memref<4x1088xbf16, #tpu.memory_space<vmem>>, vector<4x1080xbf16>
    %c12 = arith.constant 12 : index
    %c0_38 = arith.constant 0 : index
    %31 = vector.load %arg8[%c12, %c0_38] : memref<36x1080xbf16, #tpu.memory_space<vmem>>, vector<4x1080xbf16>
    tpu.vector_store %arg8[%c12, %c0_38], %30 {strides = array<i32>} : memref<36x1080xbf16, #tpu.memory_space<vmem>>, vector<4x1080xbf16>,
    %c0_39 = arith.constant 0 : index
    %c4_40 = arith.constant 4 : index
    %32 = vector.load %arg7[%c0_39, %c4_40] : memref<4x1088xbf16, #tpu.memory_space<vmem>>, vector<4x1080xbf16>
    %c16 = arith.constant 16 : index
    %c0_41 = arith.constant 0 : index
    %33 = vector.load %arg8[%c16, %c0_41] : memref<36x1080xbf16, #tpu.memory_space<vmem>>, vector<4x1080xbf16>
    tpu.vector_store %arg8[%c16, %c0_41], %32 {strides = array<i32>} : memref<36x1080xbf16, #tpu.memory_space<vmem>>, vector<4x1080xbf16>,
    %c0_42 = arith.constant 0 : index
    %c5_43 = arith.constant 5 : index
    %34 = vector.load %arg7[%c0_42, %c5_43] : memref<4x1088xbf16, #tpu.memory_space<vmem>>, vector<4x1080xbf16>
    %c20 = arith.constant 20 : index
    %c0_44 = arith.constant 0 : index
    %35 = vector.load %arg8[%c20, %c0_44] : memref<36x1080xbf16, #tpu.memory_space<vmem>>, vector<4x1080xbf16>
    tpu.vector_store %arg8[%c20, %c0_44], %34 {strides = array<i32>} : memref<36x1080xbf16, #tpu.memory_space<vmem>>, vector<4x1080xbf16>,
    %c0_45 = arith.constant 0 : index
    %c6_46 = arith.constant 6 : index
    %36 = vector.load %arg7[%c0_45, %c6_46] : memref<4x1088xbf16, #tpu.memory_space<vmem>>, vector<4x1080xbf16>
    %c24 = arith.constant 24 : index
    %c0_47 = arith.constant 0 : index
    %37 = vector.load %arg8[%c24, %c0_47] : memref<36x1080xbf16, #tpu.memory_space<vmem>>, vector<4x1080xbf16>
    tpu.vector_store %arg8[%c24, %c0_47], %36 {strides = array<i32>} : memref<36x1080xbf16, #tpu.memory_space<vmem>>, vector<4x1080xbf16>,
    %c0_48 = arith.constant 0 : index
    %c7_49 = arith.constant 7 : index
    %38 = vector.load %arg7[%c0_48, %c7_49] : memref<4x1088xbf16, #tpu.memory_space<vmem>>, vector<4x1080xbf16>
    %c28 = arith.constant 28 : index
    %c0_50 = arith.constant 0 : index
    %39 = vector.load %arg8[%c28, %c0_50] : memref<36x1080xbf16, #tpu.memory_space<vmem>>, vector<4x1080xbf16>
    tpu.vector_store %arg8[%c28, %c0_50], %38 {strides = array<i32>} : memref<36x1080xbf16, #tpu.memory_space<vmem>>, vector<4x1080xbf16>,
    %c0_51 = arith.constant 0 : index
    %c8_52 = arith.constant 8 : index
    %40 = vector.load %arg7[%c0_51, %c8_52] : memref<4x1088xbf16, #tpu.memory_space<vmem>>, vector<4x1080xbf16>
    %c32 = arith.constant 32 : index
    %c0_53 = arith.constant 0 : index
    %41 = vector.load %arg8[%c32, %c0_53] : memref<36x1080xbf16, #tpu.memory_space<vmem>>, vector<4x1080xbf16>
    tpu.vector_store %arg8[%c32, %c0_53], %40 {strides = array<i32>} : memref<36x1080xbf16, #tpu.memory_space<vmem>>, vector<4x1080xbf16>,
    %c0_54 = arith.constant 0 : index
    %c0_55 = arith.constant 0 : index
    %42 = vector.load %arg2[%c0_54, %c0_55] : memref<8x36xbf16, #tpu.memory_space<vmem>>, vector<8x36xbf16>
    %c0_56 = arith.constant 0 : index
    %c0_57 = arith.constant 0 : index
    %43 = vector.load %arg8[%c0_56, %c0_57] : memref<36x1080xbf16, #tpu.memory_space<vmem>>, vector<36x1080xbf16>
    %cst = arith.constant dense<0.000000e+00> : vector<8x1080xf32>
    %44 = tpu.matmul %42, %43, %cst {dimension_numbers = #tpu.dot_dimension_numbers<[1], [0], [0], [1], [0, 0, 1, 1], [], []>} : vector<8x36xbf16>, vector<36x1080xbf16>, vector<8x1080xf32> -> vector<8x1080xf32>
    %c0_58 = arith.constant 0 : index
    %c0_59 = arith.constant 0 : index
    %45 = vector.load %arg3[%c0_58, %c0_59] : memref<8x1xf32, #tpu.memory_space<vmem>>, vector<8x1xf32>
    %46 = vector.broadcast %45 : vector<8x1xf32> to vector<8x1080xf32>
    %47 = arith.addf %44, %46 : vector<8x1080xf32>
    %cst_60 = arith.constant 0.000000e+00 : f32
    %48 = vector.broadcast %cst_60 : f32 to vector<8x1080xf32>
    %49 = arith.maximumf %47, %48 : vector<8x1080xf32>
    %50 = arith.truncf %49 : vector<8x1080xf32> to vector<8x1080xbf16>
    %c0_61 = arith.constant 0 : index
    %c4_62 = arith.constant 4 : index
    %51 = vector.load %arg9[%c0_61, %c4_62] : memref<8x1088xbf16, #tpu.memory_space<vmem>>, vector<8x1080xbf16>
    tpu.vector_store %arg9[%c0_61, %c4_62], %50 {strides = array<i32>} : memref<8x1088xbf16, #tpu.memory_space<vmem>>, vector<8x1080xbf16>,
    %52 = vector.extract_strided_slice %50 {offsets = [0, 4], sizes = [8, 1], strides = [1, 1]} : vector<8x1080xbf16> to vector<8x1xbf16>
    %c0_63 = arith.constant 0 : index
    %c0_64 = arith.constant 0 : index
    %53 = vector.load %arg9[%c0_63, %c0_64] : memref<8x1088xbf16, #tpu.memory_space<vmem>>, vector<8x1xbf16>
    tpu.vector_store %arg9[%c0_63, %c0_64], %52 {strides = array<i32>} : memref<8x1088xbf16, #tpu.memory_space<vmem>>, vector<8x1xbf16>,
    %54 = vector.extract_strided_slice %50 {offsets = [0, 126], sizes = [8, 1], strides = [1, 1]} : vector<8x1080xbf16> to vector<8x1xbf16>
    %c0_65 = arith.constant 0 : index
    %c132 = arith.constant 132 : index
    %55 = vector.load %arg9[%c0_65, %c132] : memref<8x1088xbf16, #tpu.memory_space<vmem>>, vector<8x1xbf16>
    tpu.vector_store %arg9[%c0_65, %c132], %54 {strides = array<i32>} : memref<8x1088xbf16, #tpu.memory_space<vmem>>, vector<8x1xbf16>,
    %56 = vector.extract_strided_slice %50 {offsets = [0, 3], sizes = [8, 1], strides = [1, 1]} : vector<8x1080xbf16> to vector<8x1xbf16>
    %c0_66 = arith.constant 0 : index
    %c1_67 = arith.constant 1 : index
    %57 = vector.load %arg9[%c0_66, %c1_67] : memref<8x1088xbf16, #tpu.memory_space<vmem>>, vector<8x1xbf16>
    tpu.vector_store %arg9[%c0_66, %c1_67], %56 {strides = array<i32>} : memref<8x1088xbf16, #tpu.memory_space<vmem>>, vector<8x1xbf16>,
    %58 = vector.extract_strided_slice %50 {offsets = [0, 125], sizes = [8, 1], strides = [1, 1]} : vector<8x1080xbf16> to vector<8x1xbf16>
    %c0_68 = arith.constant 0 : index
    %c133 = arith.constant 133 : index
    %59 = vector.load %arg9[%c0_68, %c133] : memref<8x1088xbf16, #tpu.memory_space<vmem>>, vector<8x1xbf16>
    tpu.vector_store %arg9[%c0_68, %c133], %58 {strides = array<i32>} : memref<8x1088xbf16, #tpu.memory_space<vmem>>, vector<8x1xbf16>,
    %60 = vector.extract_strided_slice %50 {offsets = [0, 2], sizes = [8, 1], strides = [1, 1]} : vector<8x1080xbf16> to vector<8x1xbf16>
    %c0_69 = arith.constant 0 : index
    %c2_70 = arith.constant 2 : index
    %61 = vector.load %arg9[%c0_69, %c2_70] : memref<8x1088xbf16, #tpu.memory_space<vmem>>, vector<8x1xbf16>
    tpu.vector_store %arg9[%c0_69, %c2_70], %60 {strides = array<i32>} : memref<8x1088xbf16, #tpu.memory_space<vmem>>, vector<8x1xbf16>,
    %62 = vector.extract_strided_slice %50 {offsets = [0, 124], sizes = [8, 1], strides = [1, 1]} : vector<8x1080xbf16> to vector<8x1xbf16>
    %c0_71 = arith.constant 0 : index
    %c134 = arith.constant 134 : index
    %63 = vector.load %arg9[%c0_71, %c134] : memref<8x1088xbf16, #tpu.memory_space<vmem>>, vector<8x1xbf16>
    tpu.vector_store %arg9[%c0_71, %c134], %62 {strides = array<i32>} : memref<8x1088xbf16, #tpu.memory_space<vmem>>, vector<8x1xbf16>,
    %64 = vector.extract_strided_slice %50 {offsets = [0, 1], sizes = [8, 1], strides = [1, 1]} : vector<8x1080xbf16> to vector<8x1xbf16>
    %c0_72 = arith.constant 0 : index
    %c3_73 = arith.constant 3 : index
    %65 = vector.load %arg9[%c0_72, %c3_73] : memref<8x1088xbf16, #tpu.memory_space<vmem>>, vector<8x1xbf16>
    tpu.vector_store %arg9[%c0_72, %c3_73], %64 {strides = array<i32>} : memref<8x1088xbf16, #tpu.memory_space<vmem>>, vector<8x1xbf16>,
    %66 = vector.extract_strided_slice %50 {offsets = [0, 123], sizes = [8, 1], strides = [1, 1]} : vector<8x1080xbf16> to vector<8x1xbf16>
    %c0_74 = arith.constant 0 : index
    %c135 = arith.constant 135 : index
    %67 = vector.load %arg9[%c0_74, %c135] : memref<8x1088xbf16, #tpu.memory_space<vmem>>, vector<8x1xbf16>
    tpu.vector_store %arg9[%c0_74, %c135], %66 {strides = array<i32>} : memref<8x1088xbf16, #tpu.memory_space<vmem>>, vector<8x1xbf16>,
    %68 = vector.extract_strided_slice %50 {offsets = [0, 140], sizes = [8, 1], strides = [1, 1]} : vector<8x1080xbf16> to vector<8x1xbf16>
    %c0_75 = arith.constant 0 : index
    %c136_76 = arith.constant 136 : index
    %69 = vector.load %arg9[%c0_75, %c136_76] : memref<8x1088xbf16, #tpu.memory_space<vmem>>, vector<8x1xbf16>
    tpu.vector_store %arg9[%c0_75, %c136_76], %68 {strides = array<i32>} : memref<8x1088xbf16, #tpu.memory_space<vmem>>, vector<8x1xbf16>,
    %70 = vector.extract_strided_slice %50 {offsets = [0, 262], sizes = [8, 1], strides = [1, 1]} : vector<8x1080xbf16> to vector<8x1xbf16>
    %c0_77 = arith.constant 0 : index
    %c268 = arith.constant 268 : index
    %71 = vector.load %arg9[%c0_77, %c268] : memref<8x1088xbf16, #tpu.memory_space<vmem>>, vector<8x1xbf16>
    tpu.vector_store %arg9[%c0_77, %c268], %70 {strides = array<i32>} : memref<8x1088xbf16, #tpu.memory_space<vmem>>, vector<8x1xbf16>,
    %72 = vector.extract_strided_slice %50 {offsets = [0, 139], sizes = [8, 1], strides = [1, 1]} : vector<8x1080xbf16> to vector<8x1xbf16>
    %c0_78 = arith.constant 0 : index
    %c137 = arith.constant 137 : index
    %73 = vector.load %arg9[%c0_78, %c137] : memref<8x1088xbf16, #tpu.memory_space<vmem>>, vector<8x1xbf16>
    tpu.vector_store %arg9[%c0_78, %c137], %72 {strides = array<i32>} : memref<8x1088xbf16, #tpu.memory_space<vmem>>, vector<8x1xbf16>,
    %74 = vector.extract_strided_slice %50 {offsets = [0, 261], sizes = [8, 1], strides = [1, 1]} : vector<8x1080xbf16> to vector<8x1xbf16>
    %c0_79 = arith.constant 0 : index
    %c269 = arith.constant 269 : index
    %75 = vector.load %arg9[%c0_79, %c269] : memref<8x1088xbf16, #tpu.memory_space<vmem>>, vector<8x1xbf16>
    tpu.vector_store %arg9[%c0_79, %c269], %74 {strides = array<i32>} : memref<8x1088xbf16, #tpu.memory_space<vmem>>, vector<8x1xbf16>,
    %76 = vector.extract_strided_slice %50 {offsets = [0, 138], sizes = [8, 1], strides = [1, 1]} : vector<8x1080xbf16> to vector<8x1xbf16>
    %c0_80 = arith.constant 0 : index
    %c138 = arith.constant 138 : index
    %77 = vector.load %arg9[%c0_80, %c138] : memref<8x1088xbf16, #tpu.memory_space<vmem>>, vector<8x1xbf16>
    tpu.vector_store %arg9[%c0_80, %c138], %76 {strides = array<i32>} : memref<8x1088xbf16, #tpu.memory_space<vmem>>, vector<8x1xbf16>,
    %78 = vector.extract_strided_slice %50 {offsets = [0, 260], sizes = [8, 1], strides = [1, 1]} : vector<8x1080xbf16> to vector<8x1xbf16>
    %c0_81 = arith.constant 0 : index
    %c270 = arith.constant 270 : index
    %79 = vector.load %arg9[%c0_81, %c270] : memref<8x1088xbf16, #tpu.memory_space<vmem>>, vector<8x1xbf16>
    tpu.vector_store %arg9[%c0_81, %c270], %78 {strides = array<i32>} : memref<8x1088xbf16, #tpu.memory_space<vmem>>, vector<8x1xbf16>,
    %80 = vector.extract_strided_slice %50 {offsets = [0, 137], sizes = [8, 1], strides = [1, 1]} : vector<8x1080xbf16> to vector<8x1xbf16>
    %c0_82 = arith.constant 0 : index
    %c139 = arith.constant 139 : index
    %81 = vector.load %arg9[%c0_82, %c139] : memref<8x1088xbf16, #tpu.memory_space<vmem>>, vector<8x1xbf16>
    tpu.vector_store %arg9[%c0_82, %c139], %80 {strides = array<i32>} : memref<8x1088xbf16, #tpu.memory_space<vmem>>, vector<8x1xbf16>,
    %82 = vector.extract_strided_slice %50 {offsets = [0, 259], sizes = [8, 1], strides = [1, 1]} : vector<8x1080xbf16> to vector<8x1xbf16>
    %c0_83 = arith.constant 0 : index
    %c271 = arith.constant 271 : index
    %83 = vector.load %arg9[%c0_83, %c271] : memref<8x1088xbf16, #tpu.memory_space<vmem>>, vector<8x1xbf16>
    tpu.vector_store %arg9[%c0_83, %c271], %82 {strides = array<i32>} : memref<8x1088xbf16, #tpu.memory_space<vmem>>, vector<8x1xbf16>,
    %84 = vector.extract_strided_slice %50 {offsets = [0, 276], sizes = [8, 1], strides = [1, 1]} : vector<8x1080xbf16> to vector<8x1xbf16>
    %c0_84 = arith.constant 0 : index
    %c272_85 = arith.constant 272 : index
    %85 = vector.load %arg9[%c0_84, %c272_85] : memref<8x1088xbf16, #tpu.memory_space<vmem>>, vector<8x1xbf16>
    tpu.vector_store %arg9[%c0_84, %c272_85], %84 {strides = array<i32>} : memref<8x1088xbf16, #tpu.memory_space<vmem>>, vector<8x1xbf16>,
    %86 = vector.extract_strided_slice %50 {offsets = [0, 398], sizes = [8, 1], strides = [1, 1]} : vector<8x1080xbf16> to vector<8x1xbf16>
    %c0_86 = arith.constant 0 : index
    %c404 = arith.constant 404 : index
    %87 = vector.load %arg9[%c0_86, %c404] : memref<8x1088xbf16, #tpu.memory_space<vmem>>, vector<8x1xbf16>
    tpu.vector_store %arg9[%c0_86, %c404], %86 {strides = array<i32>} : memref<8x1088xbf16, #tpu.memory_space<vmem>>, vector<8x1xbf16>,
    %88 = vector.extract_strided_slice %50 {offsets = [0, 275], sizes = [8, 1], strides = [1, 1]} : vector<8x1080xbf16> to vector<8x1xbf16>
    %c0_87 = arith.constant 0 : index
    %c273 = arith.constant 273 : index
    %89 = vector.load %arg9[%c0_87, %c273] : memref<8x1088xbf16, #tpu.memory_space<vmem>>, vector<8x1xbf16>
    tpu.vector_store %arg9[%c0_87, %c273], %88 {strides = array<i32>} : memref<8x1088xbf16, #tpu.memory_space<vmem>>, vector<8x1xbf16>,
    %90 = vector.extract_strided_slice %50 {offsets = [0, 397], sizes = [8, 1], strides = [1, 1]} : vector<8x1080xbf16> to vector<8x1xbf16>
    %c0_88 = arith.constant 0 : index
    %c405 = arith.constant 405 : index
    %91 = vector.load %arg9[%c0_88, %c405] : memref<8x1088xbf16, #tpu.memory_space<vmem>>, vector<8x1xbf16>
    tpu.vector_store %arg9[%c0_88, %c405], %90 {strides = array<i32>} : memref<8x1088xbf16, #tpu.memory_space<vmem>>, vector<8x1xbf16>,
    %92 = vector.extract_strided_slice %50 {offsets = [0, 274], sizes = [8, 1], strides = [1, 1]} : vector<8x1080xbf16> to vector<8x1xbf16>
    %c0_89 = arith.constant 0 : index
    %c274 = arith.constant 274 : index
    %93 = vector.load %arg9[%c0_89, %c274] : memref<8x1088xbf16, #tpu.memory_space<vmem>>, vector<8x1xbf16>
    tpu.vector_store %arg9[%c0_89, %c274], %92 {strides = array<i32>} : memref<8x1088xbf16, #tpu.memory_space<vmem>>, vector<8x1xbf16>,
    %94 = vector.extract_strided_slice %50 {offsets = [0, 396], sizes = [8, 1], strides = [1, 1]} : vector<8x1080xbf16> to vector<8x1xbf16>
    %c0_90 = arith.constant 0 : index
    %c406 = arith.constant 406 : index
    %95 = vector.load %arg9[%c0_90, %c406] : memref<8x1088xbf16, #tpu.memory_space<vmem>>, vector<8x1xbf16>
    tpu.vector_store %arg9[%c0_90, %c406], %94 {strides = array<i32>} : memref<8x1088xbf16, #tpu.memory_space<vmem>>, vector<8x1xbf16>,
    %96 = vector.extract_strided_slice %50 {offsets = [0, 273], sizes = [8, 1], strides = [1, 1]} : vector<8x1080xbf16> to vector<8x1xbf16>
    %c0_91 = arith.constant 0 : index
    %c275 = arith.constant 275 : index
    %97 = vector.load %arg9[%c0_91, %c275] : memref<8x1088xbf16, #tpu.memory_space<vmem>>, vector<8x1xbf16>
    tpu.vector_store %arg9[%c0_91, %c275], %96 {strides = array<i32>} : memref<8x1088xbf16, #tpu.memory_space<vmem>>, vector<8x1xbf16>,
    %98 = vector.extract_strided_slice %50 {offsets = [0, 395], sizes = [8, 1], strides = [1, 1]} : vector<8x1080xbf16> to vector<8x1xbf16>
    %c0_92 = arith.constant 0 : index
    %c407 = arith.constant 407 : index
    %99 = vector.load %arg9[%c0_92, %c407] : memref<8x1088xbf16, #tpu.memory_space<vmem>>, vector<8x1xbf16>
    tpu.vector_store %arg9[%c0_92, %c407], %98 {strides = array<i32>} : memref<8x1088xbf16, #tpu.memory_space<vmem>>, vector<8x1xbf16>,
    %100 = vector.extract_strided_slice %50 {offsets = [0, 412], sizes = [8, 1], strides = [1, 1]} : vector<8x1080xbf16> to vector<8x1xbf16>
    %c0_93 = arith.constant 0 : index
    %c408_94 = arith.constant 408 : index
    %101 = vector.load %arg9[%c0_93, %c408_94] : memref<8x1088xbf16, #tpu.memory_space<vmem>>, vector<8x1xbf16>
    tpu.vector_store %arg9[%c0_93, %c408_94], %100 {strides = array<i32>} : memref<8x1088xbf16, #tpu.memory_space<vmem>>, vector<8x1xbf16>,
    %102 = vector.extract_strided_slice %50 {offsets = [0, 534], sizes = [8, 1], strides = [1, 1]} : vector<8x1080xbf16> to vector<8x1xbf16>
    %c0_95 = arith.constant 0 : index
    %c540 = arith.constant 540 : index
    %103 = vector.load %arg9[%c0_95, %c540] : memref<8x1088xbf16, #tpu.memory_space<vmem>>, vector<8x1xbf16>
    tpu.vector_store %arg9[%c0_95, %c540], %102 {strides = array<i32>} : memref<8x1088xbf16, #tpu.memory_space<vmem>>, vector<8x1xbf16>,
    %104 = vector.extract_strided_slice %50 {offsets = [0, 411], sizes = [8, 1], strides = [1, 1]} : vector<8x1080xbf16> to vector<8x1xbf16>
    %c0_96 = arith.constant 0 : index
    %c409 = arith.constant 409 : index
    %105 = vector.load %arg9[%c0_96, %c409] : memref<8x1088xbf16, #tpu.memory_space<vmem>>, vector<8x1xbf16>
    tpu.vector_store %arg9[%c0_96, %c409], %104 {strides = array<i32>} : memref<8x1088xbf16, #tpu.memory_space<vmem>>, vector<8x1xbf16>,
    %106 = vector.extract_strided_slice %50 {offsets = [0, 533], sizes = [8, 1], strides = [1, 1]} : vector<8x1080xbf16> to vector<8x1xbf16>
    %c0_97 = arith.constant 0 : index
    %c541 = arith.constant 541 : index
    %107 = vector.load %arg9[%c0_97, %c541] : memref<8x1088xbf16, #tpu.memory_space<vmem>>, vector<8x1xbf16>
    tpu.vector_store %arg9[%c0_97, %c541], %106 {strides = array<i32>} : memref<8x1088xbf16, #tpu.memory_space<vmem>>, vector<8x1xbf16>,
    %108 = vector.extract_strided_slice %50 {offsets = [0, 410], sizes = [8, 1], strides = [1, 1]} : vector<8x1080xbf16> to vector<8x1xbf16>
    %c0_98 = arith.constant 0 : index
    %c410 = arith.constant 410 : index
    %109 = vector.load %arg9[%c0_98, %c410] : memref<8x1088xbf16, #tpu.memory_space<vmem>>, vector<8x1xbf16>
    tpu.vector_store %arg9[%c0_98, %c410], %108 {strides = array<i32>} : memref<8x1088xbf16, #tpu.memory_space<vmem>>, vector<8x1xbf16>,
    %110 = vector.extract_strided_slice %50 {offsets = [0, 532], sizes = [8, 1], strides = [1, 1]} : vector<8x1080xbf16> to vector<8x1xbf16>
    %c0_99 = arith.constant 0 : index
    %c542 = arith.constant 542 : index
    %111 = vector.load %arg9[%c0_99, %c542] : memref<8x1088xbf16, #tpu.memory_space<vmem>>, vector<8x1xbf16>
    tpu.vector_store %arg9[%c0_99, %c542], %110 {strides = array<i32>} : memref<8x1088xbf16, #tpu.memory_space<vmem>>, vector<8x1xbf16>,
    %112 = vector.extract_strided_slice %50 {offsets = [0, 409], sizes = [8, 1], strides = [1, 1]} : vector<8x1080xbf16> to vector<8x1xbf16>
    %c0_100 = arith.constant 0 : index
    %c411 = arith.constant 411 : index
    %113 = vector.load %arg9[%c0_100, %c411] : memref<8x1088xbf16, #tpu.memory_space<vmem>>, vector<8x1xbf16>
    tpu.vector_store %arg9[%c0_100, %c411], %112 {strides = array<i32>} : memref<8x1088xbf16, #tpu.memory_space<vmem>>, vector<8x1xbf16>,
    %114 = vector.extract_strided_slice %50 {offsets = [0, 531], sizes = [8, 1], strides = [1, 1]} : vector<8x1080xbf16> to vector<8x1xbf16>
    %c0_101 = arith.constant 0 : index
    %c543 = arith.constant 543 : index
    %115 = vector.load %arg9[%c0_101, %c543] : memref<8x1088xbf16, #tpu.memory_space<vmem>>, vector<8x1xbf16>
    tpu.vector_store %arg9[%c0_101, %c543], %114 {strides = array<i32>} : memref<8x1088xbf16, #tpu.memory_space<vmem>>, vector<8x1xbf16>,
    %116 = vector.extract_strided_slice %50 {offsets = [0, 548], sizes = [8, 1], strides = [1, 1]} : vector<8x1080xbf16> to vector<8x1xbf16>
    %c0_102 = arith.constant 0 : index
    %c544_103 = arith.constant 544 : index
    %117 = vector.load %arg9[%c0_102, %c544_103] : memref<8x1088xbf16, #tpu.memory_space<vmem>>, vector<8x1xbf16>
    tpu.vector_store %arg9[%c0_102, %c544_103], %116 {strides = array<i32>} : memref<8x1088xbf16, #tpu.memory_space<vmem>>, vector<8x1xbf16>,
    %118 = vector.extract_strided_slice %50 {offsets = [0, 670], sizes = [8, 1], strides = [1, 1]} : vector<8x1080xbf16> to vector<8x1xbf16>
    %c0_104 = arith.constant 0 : index
    %c676 = arith.constant 676 : index
    %119 = vector.load %arg9[%c0_104, %c676] : memref<8x1088xbf16, #tpu.memory_space<vmem>>, vector<8x1xbf16>
    tpu.vector_store %arg9[%c0_104, %c676], %118 {strides = array<i32>} : memref<8x1088xbf16, #tpu.memory_space<vmem>>, vector<8x1xbf16>,
    %120 = vector.extract_strided_slice %50 {offsets = [0, 547], sizes = [8, 1], strides = [1, 1]} : vector<8x1080xbf16> to vector<8x1xbf16>
    %c0_105 = arith.constant 0 : index
    %c545 = arith.constant 545 : index
    %121 = vector.load %arg9[%c0_105, %c545] : memref<8x1088xbf16, #tpu.memory_space<vmem>>, vector<8x1xbf16>
    tpu.vector_store %arg9[%c0_105, %c545], %120 {strides = array<i32>} : memref<8x1088xbf16, #tpu.memory_space<vmem>>, vector<8x1xbf16>,
    %122 = vector.extract_strided_slice %50 {offsets = [0, 669], sizes = [8, 1], strides = [1, 1]} : vector<8x1080xbf16> to vector<8x1xbf16>
    %c0_106 = arith.constant 0 : index
    %c677 = arith.constant 677 : index
    %123 = vector.load %arg9[%c0_106, %c677] : memref<8x1088xbf16, #tpu.memory_space<vmem>>, vector<8x1xbf16>
    tpu.vector_store %arg9[%c0_106, %c677], %122 {strides = array<i32>} : memref<8x1088xbf16, #tpu.memory_space<vmem>>, vector<8x1xbf16>,
    %124 = vector.extract_strided_slice %50 {offsets = [0, 546], sizes = [8, 1], strides = [1, 1]} : vector<8x1080xbf16> to vector<8x1xbf16>
    %c0_107 = arith.constant 0 : index
    %c546 = arith.constant 546 : index
    %125 = vector.load %arg9[%c0_107, %c546] : memref<8x1088xbf16, #tpu.memory_space<vmem>>, vector<8x1xbf16>
    tpu.vector_store %arg9[%c0_107, %c546], %124 {strides = array<i32>} : memref<8x1088xbf16, #tpu.memory_space<vmem>>, vector<8x1xbf16>,
    %126 = vector.extract_strided_slice %50 {offsets = [0, 668], sizes = [8, 1], strides = [1, 1]} : vector<8x1080xbf16> to vector<8x1xbf16>
    %c0_108 = arith.constant 0 : index
    %c678 = arith.constant 678 : index
    %127 = vector.load %arg9[%c0_108, %c678] : memref<8x1088xbf16, #tpu.memory_space<vmem>>, vector<8x1xbf16>
    tpu.vector_store %arg9[%c0_108, %c678], %126 {strides = array<i32>} : memref<8x1088xbf16, #tpu.memory_space<vmem>>, vector<8x1xbf16>,
    %128 = vector.extract_strided_slice %50 {offsets = [0, 545], sizes = [8, 1], strides = [1, 1]} : vector<8x1080xbf16> to vector<8x1xbf16>
    %c0_109 = arith.constant 0 : index
    %c547 = arith.constant 547 : index
    %129 = vector.load %arg9[%c0_109, %c547] : memref<8x1088xbf16, #tpu.memory_space<vmem>>, vector<8x1xbf16>
    tpu.vector_store %arg9[%c0_109, %c547], %128 {strides = array<i32>} : memref<8x1088xbf16, #tpu.memory_space<vmem>>, vector<8x1xbf16>,
    %130 = vector.extract_strided_slice %50 {offsets = [0, 667], sizes = [8, 1], strides = [1, 1]} : vector<8x1080xbf16> to vector<8x1xbf16>
    %c0_110 = arith.constant 0 : index
    %c679 = arith.constant 679 : index
    %131 = vector.load %arg9[%c0_110, %c679] : memref<8x1088xbf16, #tpu.memory_space<vmem>>, vector<8x1xbf16>
    tpu.vector_store %arg9[%c0_110, %c679], %130 {strides = array<i32>} : memref<8x1088xbf16, #tpu.memory_space<vmem>>, vector<8x1xbf16>,
    %132 = vector.extract_strided_slice %50 {offsets = [0, 684], sizes = [8, 1], strides = [1, 1]} : vector<8x1080xbf16> to vector<8x1xbf16>
    %c0_111 = arith.constant 0 : index
    %c680_112 = arith.constant 680 : index
    %133 = vector.load %arg9[%c0_111, %c680_112] : memref<8x1088xbf16, #tpu.memory_space<vmem>>, vector<8x1xbf16>
    tpu.vector_store %arg9[%c0_111, %c680_112], %132 {strides = array<i32>} : memref<8x1088xbf16, #tpu.memory_space<vmem>>, vector<8x1xbf16>,
    %134 = vector.extract_strided_slice %50 {offsets = [0, 806], sizes = [8, 1], strides = [1, 1]} : vector<8x1080xbf16> to vector<8x1xbf16>
    %c0_113 = arith.constant 0 : index
    %c812 = arith.constant 812 : index
    %135 = vector.load %arg9[%c0_113, %c812] : memref<8x1088xbf16, #tpu.memory_space<vmem>>, vector<8x1xbf16>
    tpu.vector_store %arg9[%c0_113, %c812], %134 {strides = array<i32>} : memref<8x1088xbf16, #tpu.memory_space<vmem>>, vector<8x1xbf16>,
    %136 = vector.extract_strided_slice %50 {offsets = [0, 683], sizes = [8, 1], strides = [1, 1]} : vector<8x1080xbf16> to vector<8x1xbf16>
    %c0_114 = arith.constant 0 : index
    %c681 = arith.constant 681 : index
    %137 = vector.load %arg9[%c0_114, %c681] : memref<8x1088xbf16, #tpu.memory_space<vmem>>, vector<8x1xbf16>
    tpu.vector_store %arg9[%c0_114, %c681], %136 {strides = array<i32>} : memref<8x1088xbf16, #tpu.memory_space<vmem>>, vector<8x1xbf16>,
    %138 = vector.extract_strided_slice %50 {offsets = [0, 805], sizes = [8, 1], strides = [1, 1]} : vector<8x1080xbf16> to vector<8x1xbf16>
    %c0_115 = arith.constant 0 : index
    %c813 = arith.constant 813 : index
    %139 = vector.load %arg9[%c0_115, %c813] : memref<8x1088xbf16, #tpu.memory_space<vmem>>, vector<8x1xbf16>
    tpu.vector_store %arg9[%c0_115, %c813], %138 {strides = array<i32>} : memref<8x1088xbf16, #tpu.memory_space<vmem>>, vector<8x1xbf16>,
    %140 = vector.extract_strided_slice %50 {offsets = [0, 682], sizes = [8, 1], strides = [1, 1]} : vector<8x1080xbf16> to vector<8x1xbf16>
    %c0_116 = arith.constant 0 : index
    %c682 = arith.constant 682 : index
    %141 = vector.load %arg9[%c0_116, %c682] : memref<8x1088xbf16, #tpu.memory_space<vmem>>, vector<8x1xbf16>
    tpu.vector_store %arg9[%c0_116, %c682], %140 {strides = array<i32>} : memref<8x1088xbf16, #tpu.memory_space<vmem>>, vector<8x1xbf16>,
    %142 = vector.extract_strided_slice %50 {offsets = [0, 804], sizes = [8, 1], strides = [1, 1]} : vector<8x1080xbf16> to vector<8x1xbf16>
    %c0_117 = arith.constant 0 : index
    %c814 = arith.constant 814 : index
    %143 = vector.load %arg9[%c0_117, %c814] : memref<8x1088xbf16, #tpu.memory_space<vmem>>, vector<8x1xbf16>
    tpu.vector_store %arg9[%c0_117, %c814], %142 {strides = array<i32>} : memref<8x1088xbf16, #tpu.memory_space<vmem>>, vector<8x1xbf16>,
    %144 = vector.extract_strided_slice %50 {offsets = [0, 681], sizes = [8, 1], strides = [1, 1]} : vector<8x1080xbf16> to vector<8x1xbf16>
    %c0_118 = arith.constant 0 : index
    %c683 = arith.constant 683 : index
    %145 = vector.load %arg9[%c0_118, %c683] : memref<8x1088xbf16, #tpu.memory_space<vmem>>, vector<8x1xbf16>
    tpu.vector_store %arg9[%c0_118, %c683], %144 {strides = array<i32>} : memref<8x1088xbf16, #tpu.memory_space<vmem>>, vector<8x1xbf16>,
    %146 = vector.extract_strided_slice %50 {offsets = [0, 803], sizes = [8, 1], strides = [1, 1]} : vector<8x1080xbf16> to vector<8x1xbf16>
    %c0_119 = arith.constant 0 : index
    %c815 = arith.constant 815 : index
    %147 = vector.load %arg9[%c0_119, %c815] : memref<8x1088xbf16, #tpu.memory_space<vmem>>, vector<8x1xbf16>
    tpu.vector_store %arg9[%c0_119, %c815], %146 {strides = array<i32>} : memref<8x1088xbf16, #tpu.memory_space<vmem>>, vector<8x1xbf16>,
    %148 = vector.extract_strided_slice %50 {offsets = [0, 820], sizes = [8, 1], strides = [1, 1]} : vector<8x1080xbf16> to vector<8x1xbf16>
    %c0_120 = arith.constant 0 : index
    %c816_121 = arith.constant 816 : index
    %149 = vector.load %arg9[%c0_120, %c816_121] : memref<8x1088xbf16, #tpu.memory_space<vmem>>, vector<8x1xbf16>
    tpu.vector_store %arg9[%c0_120, %c816_121], %148 {strides = array<i32>} : memref<8x1088xbf16, #tpu.memory_space<vmem>>, vector<8x1xbf16>,
    %150 = vector.extract_strided_slice %50 {offsets = [0, 942], sizes = [8, 1], strides = [1, 1]} : vector<8x1080xbf16> to vector<8x1xbf16>
    %c0_122 = arith.constant 0 : index
    %c948 = arith.constant 948 : index
    %151 = vector.load %arg9[%c0_122, %c948] : memref<8x1088xbf16, #tpu.memory_space<vmem>>, vector<8x1xbf16>
    tpu.vector_store %arg9[%c0_122, %c948], %150 {strides = array<i32>} : memref<8x1088xbf16, #tpu.memory_space<vmem>>, vector<8x1xbf16>,
    %152 = vector.extract_strided_slice %50 {offsets = [0, 819], sizes = [8, 1], strides = [1, 1]} : vector<8x1080xbf16> to vector<8x1xbf16>
    %c0_123 = arith.constant 0 : index
    %c817 = arith.constant 817 : index
    %153 = vector.load %arg9[%c0_123, %c817] : memref<8x1088xbf16, #tpu.memory_space<vmem>>, vector<8x1xbf16>
    tpu.vector_store %arg9[%c0_123, %c817], %152 {strides = array<i32>} : memref<8x1088xbf16, #tpu.memory_space<vmem>>, vector<8x1xbf16>,
    %154 = vector.extract_strided_slice %50 {offsets = [0, 941], sizes = [8, 1], strides = [1, 1]} : vector<8x1080xbf16> to vector<8x1xbf16>
    %c0_124 = arith.constant 0 : index
    %c949 = arith.constant 949 : index
    %155 = vector.load %arg9[%c0_124, %c949] : memref<8x1088xbf16, #tpu.memory_space<vmem>>, vector<8x1xbf16>
    tpu.vector_store %arg9[%c0_124, %c949], %154 {strides = array<i32>} : memref<8x1088xbf16, #tpu.memory_space<vmem>>, vector<8x1xbf16>,
    %156 = vector.extract_strided_slice %50 {offsets = [0, 818], sizes = [8, 1], strides = [1, 1]} : vector<8x1080xbf16> to vector<8x1xbf16>
    %c0_125 = arith.constant 0 : index
    %c818 = arith.constant 818 : index
    %157 = vector.load %arg9[%c0_125, %c818] : memref<8x1088xbf16, #tpu.memory_space<vmem>>, vector<8x1xbf16>
    tpu.vector_store %arg9[%c0_125, %c818], %156 {strides = array<i32>} : memref<8x1088xbf16, #tpu.memory_space<vmem>>, vector<8x1xbf16>,
    %158 = vector.extract_strided_slice %50 {offsets = [0, 940], sizes = [8, 1], strides = [1, 1]} : vector<8x1080xbf16> to vector<8x1xbf16>
    %c0_126 = arith.constant 0 : index
    %c950 = arith.constant 950 : index
    %159 = vector.load %arg9[%c0_126, %c950] : memref<8x1088xbf16, #tpu.memory_space<vmem>>, vector<8x1xbf16>
    tpu.vector_store %arg9[%c0_126, %c950], %158 {strides = array<i32>} : memref<8x1088xbf16, #tpu.memory_space<vmem>>, vector<8x1xbf16>,
    %160 = vector.extract_strided_slice %50 {offsets = [0, 817], sizes = [8, 1], strides = [1, 1]} : vector<8x1080xbf16> to vector<8x1xbf16>
    %c0_127 = arith.constant 0 : index
    %c819 = arith.constant 819 : index
    %161 = vector.load %arg9[%c0_127, %c819] : memref<8x1088xbf16, #tpu.memory_space<vmem>>, vector<8x1xbf16>
    tpu.vector_store %arg9[%c0_127, %c819], %160 {strides = array<i32>} : memref<8x1088xbf16, #tpu.memory_space<vmem>>, vector<8x1xbf16>,
    %162 = vector.extract_strided_slice %50 {offsets = [0, 939], sizes = [8, 1], strides = [1, 1]} : vector<8x1080xbf16> to vector<8x1xbf16>
    %c0_128 = arith.constant 0 : index
    %c951 = arith.constant 951 : index
    %163 = vector.load %arg9[%c0_128, %c951] : memref<8x1088xbf16, #tpu.memory_space<vmem>>, vector<8x1xbf16>
    tpu.vector_store %arg9[%c0_128, %c951], %162 {strides = array<i32>} : memref<8x1088xbf16, #tpu.memory_space<vmem>>, vector<8x1xbf16>,
    %164 = vector.extract_strided_slice %50 {offsets = [0, 956], sizes = [8, 1], strides = [1, 1]} : vector<8x1080xbf16> to vector<8x1xbf16>
    %c0_129 = arith.constant 0 : index
    %c952_130 = arith.constant 952 : index
    %165 = vector.load %arg9[%c0_129, %c952_130] : memref<8x1088xbf16, #tpu.memory_space<vmem>>, vector<8x1xbf16>
    tpu.vector_store %arg9[%c0_129, %c952_130], %164 {strides = array<i32>} : memref<8x1088xbf16, #tpu.memory_space<vmem>>, vector<8x1xbf16>,
    %166 = vector.extract_strided_slice %50 {offsets = [0, 1078], sizes = [8, 1], strides = [1, 1]} : vector<8x1080xbf16> to vector<8x1xbf16>
    %c0_131 = arith.constant 0 : index
    %c1084 = arith.constant 1084 : index
    %167 = vector.load %arg9[%c0_131, %c1084] : memref<8x1088xbf16, #tpu.memory_space<vmem>>, vector<8x1xbf16>
    tpu.vector_store %arg9[%c0_131, %c1084], %166 {strides = array<i32>} : memref<8x1088xbf16, #tpu.memory_space<vmem>>, vector<8x1xbf16>,
    %168 = vector.extract_strided_slice %50 {offsets = [0, 955], sizes = [8, 1], strides = [1, 1]} : vector<8x1080xbf16> to vector<8x1xbf16>
    %c0_132 = arith.constant 0 : index
    %c953 = arith.constant 953 : index
    %169 = vector.load %arg9[%c0_132, %c953] : memref<8x1088xbf16, #tpu.memory_space<vmem>>, vector<8x1xbf16>
    tpu.vector_store %arg9[%c0_132, %c953], %168 {strides = array<i32>} : memref<8x1088xbf16, #tpu.memory_space<vmem>>, vector<8x1xbf16>,
    %170 = vector.extract_strided_slice %50 {offsets = [0, 1077], sizes = [8, 1], strides = [1, 1]} : vector<8x1080xbf16> to vector<8x1xbf16>
    %c0_133 = arith.constant 0 : index
    %c1085 = arith.constant 1085 : index
    %171 = vector.load %arg9[%c0_133, %c1085] : memref<8x1088xbf16, #tpu.memory_space<vmem>>, vector<8x1xbf16>
    tpu.vector_store %arg9[%c0_133, %c1085], %170 {strides = array<i32>} : memref<8x1088xbf16, #tpu.memory_space<vmem>>, vector<8x1xbf16>,
    %172 = vector.extract_strided_slice %50 {offsets = [0, 954], sizes = [8, 1], strides = [1, 1]} : vector<8x1080xbf16> to vector<8x1xbf16>
    %c0_134 = arith.constant 0 : index
    %c954 = arith.constant 954 : index
    %173 = vector.load %arg9[%c0_134, %c954] : memref<8x1088xbf16, #tpu.memory_space<vmem>>, vector<8x1xbf16>
    tpu.vector_store %arg9[%c0_134, %c954], %172 {strides = array<i32>} : memref<8x1088xbf16, #tpu.memory_space<vmem>>, vector<8x1xbf16>,
    %174 = vector.extract_strided_slice %50 {offsets = [0, 1076], sizes = [8, 1], strides = [1, 1]} : vector<8x1080xbf16> to vector<8x1xbf16>
    %c0_135 = arith.constant 0 : index
    %c1086 = arith.constant 1086 : index
    %175 = vector.load %arg9[%c0_135, %c1086] : memref<8x1088xbf16, #tpu.memory_space<vmem>>, vector<8x1xbf16>
    tpu.vector_store %arg9[%c0_135, %c1086], %174 {strides = array<i32>} : memref<8x1088xbf16, #tpu.memory_space<vmem>>, vector<8x1xbf16>,
    %176 = vector.extract_strided_slice %50 {offsets = [0, 953], sizes = [8, 1], strides = [1, 1]} : vector<8x1080xbf16> to vector<8x1xbf16>
    %c0_136 = arith.constant 0 : index
    %c955 = arith.constant 955 : index
    %177 = vector.load %arg9[%c0_136, %c955] : memref<8x1088xbf16, #tpu.memory_space<vmem>>, vector<8x1xbf16>
    tpu.vector_store %arg9[%c0_136, %c955], %176 {strides = array<i32>} : memref<8x1088xbf16, #tpu.memory_space<vmem>>, vector<8x1xbf16>,
    %178 = vector.extract_strided_slice %50 {offsets = [0, 1075], sizes = [8, 1], strides = [1, 1]} : vector<8x1080xbf16> to vector<8x1xbf16>
    %c0_137 = arith.constant 0 : index
    %c1087 = arith.constant 1087 : index
    %179 = vector.load %arg9[%c0_137, %c1087] : memref<8x1088xbf16, #tpu.memory_space<vmem>>, vector<8x1xbf16>
    tpu.vector_store %arg9[%c0_137, %c1087], %178 {strides = array<i32>} : memref<8x1088xbf16, #tpu.memory_space<vmem>>, vector<8x1xbf16>,
    %c0_138 = arith.constant 0 : index
    %c0_139 = arith.constant 0 : index
    %180 = vector.load %arg9[%c0_138, %c0_139] : memref<8x1088xbf16, #tpu.memory_space<vmem>>, vector<8x1080xbf16>
    %c0_140 = arith.constant 0 : index
    %c0_141 = arith.constant 0 : index
    %181 = vector.load %arg10[%c0_140, %c0_141] : memref<72x1080xbf16, #tpu.memory_space<vmem>>, vector<8x1080xbf16>
    tpu.vector_store %arg10[%c0_140, %c0_141], %180 {strides = array<i32>} : memref<72x1080xbf16, #tpu.memory_space<vmem>>, vector<8x1080xbf16>,
    %c0_142 = arith.constant 0 : index
    %c1_143 = arith.constant 1 : index
    %182 = vector.load %arg9[%c0_142, %c1_143] : memref<8x1088xbf16, #tpu.memory_space<vmem>>, vector<8x1080xbf16>
    %c8_144 = arith.constant 8 : index
    %c0_145 = arith.constant 0 : index
    %183 = vector.load %arg10[%c8_144, %c0_145] : memref<72x1080xbf16, #tpu.memory_space<vmem>>, vector<8x1080xbf16>
    tpu.vector_store %arg10[%c8_144, %c0_145], %182 {strides = array<i32>} : memref<72x1080xbf16, #tpu.memory_space<vmem>>, vector<8x1080xbf16>,
    %c0_146 = arith.constant 0 : index
    %c2_147 = arith.constant 2 : index
    %184 = vector.load %arg9[%c0_146, %c2_147] : memref<8x1088xbf16, #tpu.memory_space<vmem>>, vector<8x1080xbf16>
    %c16_148 = arith.constant 16 : index
    %c0_149 = arith.constant 0 : index
    %185 = vector.load %arg10[%c16_148, %c0_149] : memref<72x1080xbf16, #tpu.memory_space<vmem>>, vector<8x1080xbf16>
    tpu.vector_store %arg10[%c16_148, %c0_149], %184 {strides = array<i32>} : memref<72x1080xbf16, #tpu.memory_space<vmem>>, vector<8x1080xbf16>,
    %c0_150 = arith.constant 0 : index
    %c3_151 = arith.constant 3 : index
    %186 = vector.load %arg9[%c0_150, %c3_151] : memref<8x1088xbf16, #tpu.memory_space<vmem>>, vector<8x1080xbf16>
    %c24_152 = arith.constant 24 : index
    %c0_153 = arith.constant 0 : index
    %187 = vector.load %arg10[%c24_152, %c0_153] : memref<72x1080xbf16, #tpu.memory_space<vmem>>, vector<8x1080xbf16>
    tpu.vector_store %arg10[%c24_152, %c0_153], %186 {strides = array<i32>} : memref<72x1080xbf16, #tpu.memory_space<vmem>>, vector<8x1080xbf16>,
    %c0_154 = arith.constant 0 : index
    %c4_155 = arith.constant 4 : index
    %188 = vector.load %arg9[%c0_154, %c4_155] : memref<8x1088xbf16, #tpu.memory_space<vmem>>, vector<8x1080xbf16>
    %c32_156 = arith.constant 32 : index
    %c0_157 = arith.constant 0 : index
    %189 = vector.load %arg10[%c32_156, %c0_157] : memref<72x1080xbf16, #tpu.memory_space<vmem>>, vector<8x1080xbf16>
    tpu.vector_store %arg10[%c32_156, %c0_157], %188 {strides = array<i32>} : memref<72x1080xbf16, #tpu.memory_space<vmem>>, vector<8x1080xbf16>,
    %c0_158 = arith.constant 0 : index
    %c5_159 = arith.constant 5 : index
    %190 = vector.load %arg9[%c0_158, %c5_159] : memref<8x1088xbf16, #tpu.memory_space<vmem>>, vector<8x1080xbf16>
    %c40 = arith.constant 40 : index
    %c0_160 = arith.constant 0 : index
    %191 = vector.load %arg10[%c40, %c0_160] : memref<72x1080xbf16, #tpu.memory_space<vmem>>, vector<8x1080xbf16>
    tpu.vector_store %arg10[%c40, %c0_160], %190 {strides = array<i32>} : memref<72x1080xbf16, #tpu.memory_space<vmem>>, vector<8x1080xbf16>,
    %c0_161 = arith.constant 0 : index
    %c6_162 = arith.constant 6 : index
    %192 = vector.load %arg9[%c0_161, %c6_162] : memref<8x1088xbf16, #tpu.memory_space<vmem>>, vector<8x1080xbf16>
    %c48 = arith.constant 48 : index
    %c0_163 = arith.constant 0 : index
    %193 = vector.load %arg10[%c48, %c0_163] : memref<72x1080xbf16, #tpu.memory_space<vmem>>, vector<8x1080xbf16>
    tpu.vector_store %arg10[%c48, %c0_163], %192 {strides = array<i32>} : memref<72x1080xbf16, #tpu.memory_space<vmem>>, vector<8x1080xbf16>,
    %c0_164 = arith.constant 0 : index
    %c7_165 = arith.constant 7 : index
    %194 = vector.load %arg9[%c0_164, %c7_165] : memref<8x1088xbf16, #tpu.memory_space<vmem>>, vector<8x1080xbf16>
    %c56 = arith.constant 56 : index
    %c0_166 = arith.constant 0 : index
    %195 = vector.load %arg10[%c56, %c0_166] : memref<72x1080xbf16, #tpu.memory_space<vmem>>, vector<8x1080xbf16>
    tpu.vector_store %arg10[%c56, %c0_166], %194 {strides = array<i32>} : memref<72x1080xbf16, #tpu.memory_space<vmem>>, vector<8x1080xbf16>,
    %c0_167 = arith.constant 0 : index
    %c8_168 = arith.constant 8 : index
    %196 = vector.load %arg9[%c0_167, %c8_168] : memref<8x1088xbf16, #tpu.memory_space<vmem>>, vector<8x1080xbf16>
    %c64 = arith.constant 64 : index
    %c0_169 = arith.constant 0 : index
    %197 = vector.load %arg10[%c64, %c0_169] : memref<72x1080xbf16, #tpu.memory_space<vmem>>, vector<8x1080xbf16>
    tpu.vector_store %arg10[%c64, %c0_169], %196 {strides = array<i32>} : memref<72x1080xbf16, #tpu.memory_space<vmem>>, vector<8x1080xbf16>,
    %c0_170 = arith.constant 0 : index
    %c0_171 = arith.constant 0 : index
    %198 = vector.load %arg4[%c0_170, %c0_171] : memref<8x72xbf16, #tpu.memory_space<vmem>>, vector<8x72xbf16>
    %c0_172 = arith.constant 0 : index
    %c0_173 = arith.constant 0 : index
    %199 = vector.load %arg10[%c0_172, %c0_173] : memref<72x1080xbf16, #tpu.memory_space<vmem>>, vector<72x1080xbf16>
    %cst_174 = arith.constant dense<0.000000e+00> : vector<8x1080xf32>
    %200 = tpu.matmul %198, %199, %cst_174 {dimension_numbers = #tpu.dot_dimension_numbers<[1], [0], [0], [1], [0, 0, 1, 1], [], []>} : vector<8x72xbf16>, vector<72x1080xbf16>, vector<8x1080xf32> -> vector<8x1080xf32>
    %c0_175 = arith.constant 0 : index
    %c0_176 = arith.constant 0 : index
    %201 = vector.load %arg5[%c0_175, %c0_176] : memref<8x1xf32, #tpu.memory_space<vmem>>, vector<8x1xf32>
    %202 = vector.broadcast %201 : vector<8x1xf32> to vector<8x1080xf32>
    %203 = arith.addf %200, %202 : vector<8x1080xf32>
    %cst_177 = arith.constant 0.000000e+00 : f32
    %204 = vector.broadcast %cst_177 : f32 to vector<8x1080xf32>
    %205 = arith.maximumf %203, %204 : vector<8x1080xf32>
    %206 = vector.extract_strided_slice %205 {offsets = [0, 0], sizes = [8, 128], strides = [1, 1]} : vector<8x1080xf32> to vector<8x128xf32>
    %c0_178 = arith.constant 0 : index
    %c0_179 = arith.constant 0 : index
    %c0_180 = arith.constant 0 : index
    %207 = vector.load %arg6[%c0_178, %c0_179, %c0_180] : memref<8x8x128xf32, #tpu.memory_space<vmem>>, vector<1x8x128xf32>
    %208 = vector.shape_cast %207 : vector<1x8x128xf32> to vector<8x128xf32>
    %209 = vector.shape_cast %206 : vector<8x128xf32> to vector<1x8x128xf32>
    tpu.vector_store %arg6[%c0_178, %c0_179, %c0_180], %209 {strides = array<i32>} : memref<8x8x128xf32, #tpu.memory_space<vmem>>, vector<1x8x128xf32>,
    %210 = vector.extract_strided_slice %205 {offsets = [0, 136], sizes = [8, 128], strides = [1, 1]} : vector<8x1080xf32> to vector<8x128xf32>
    %c1_181 = arith.constant 1 : index
    %c0_182 = arith.constant 0 : index
    %c0_183 = arith.constant 0 : index
    %211 = vector.load %arg6[%c1_181, %c0_182, %c0_183] : memref<8x8x128xf32, #tpu.memory_space<vmem>>, vector<1x8x128xf32>
    %212 = vector.shape_cast %211 : vector<1x8x128xf32> to vector<8x128xf32>
    %213 = vector.shape_cast %210 : vector<8x128xf32> to vector<1x8x128xf32>
    tpu.vector_store %arg6[%c1_181, %c0_182, %c0_183], %213 {strides = array<i32>} : memref<8x8x128xf32, #tpu.memory_space<vmem>>, vector<1x8x128xf32>,
    %214 = vector.extract_strided_slice %205 {offsets = [0, 272], sizes = [8, 128], strides = [1, 1]} : vector<8x1080xf32> to vector<8x128xf32>
    %c2_184 = arith.constant 2 : index
    %c0_185 = arith.constant 0 : index
    %c0_186 = arith.constant 0 : index
    %215 = vector.load %arg6[%c2_184, %c0_185, %c0_186] : memref<8x8x128xf32, #tpu.memory_space<vmem>>, vector<1x8x128xf32>
    %216 = vector.shape_cast %215 : vector<1x8x128xf32> to vector<8x128xf32>
    %217 = vector.shape_cast %214 : vector<8x128xf32> to vector<1x8x128xf32>
    tpu.vector_store %arg6[%c2_184, %c0_185, %c0_186], %217 {strides = array<i32>} : memref<8x8x128xf32, #tpu.memory_space<vmem>>, vector<1x8x128xf32>,
    %218 = vector.extract_strided_slice %205 {offsets = [0, 408], sizes = [8, 128], strides = [1, 1]} : vector<8x1080xf32> to vector<8x128xf32>
    %c3_187 = arith.constant 3 : index
    %c0_188 = arith.constant 0 : index
    %c0_189 = arith.constant 0 : index
    %219 = vector.load %arg6[%c3_187, %c0_188, %c0_189] : memref<8x8x128xf32, #tpu.memory_space<vmem>>, vector<1x8x128xf32>
    %220 = vector.shape_cast %219 : vector<1x8x128xf32> to vector<8x128xf32>
    %221 = vector.shape_cast %218 : vector<8x128xf32> to vector<1x8x128xf32>
    tpu.vector_store %arg6[%c3_187, %c0_188, %c0_189], %221 {strides = array<i32>} : memref<8x8x128xf32, #tpu.memory_space<vmem>>, vector<1x8x128xf32>,
    %222 = vector.extract_strided_slice %205 {offsets = [0, 544], sizes = [8, 128], strides = [1, 1]} : vector<8x1080xf32> to vector<8x128xf32>
    %c4_190 = arith.constant 4 : index
    %c0_191 = arith.constant 0 : index
    %c0_192 = arith.constant 0 : index
    %223 = vector.load %arg6[%c4_190, %c0_191, %c0_192] : memref<8x8x128xf32, #tpu.memory_space<vmem>>, vector<1x8x128xf32>
    %224 = vector.shape_cast %223 : vector<1x8x128xf32> to vector<8x128xf32>
    %225 = vector.shape_cast %222 : vector<8x128xf32> to vector<1x8x128xf32>
    tpu.vector_store %arg6[%c4_190, %c0_191, %c0_192], %225 {strides = array<i32>} : memref<8x8x128xf32, #tpu.memory_space<vmem>>, vector<1x8x128xf32>,
    %226 = vector.extract_strided_slice %205 {offsets = [0, 680], sizes = [8, 128], strides = [1, 1]} : vector<8x1080xf32> to vector<8x128xf32>
    %c5_193 = arith.constant 5 : index
    %c0_194 = arith.constant 0 : index
    %c0_195 = arith.constant 0 : index
    %227 = vector.load %arg6[%c5_193, %c0_194, %c0_195] : memref<8x8x128xf32, #tpu.memory_space<vmem>>, vector<1x8x128xf32>
    %228 = vector.shape_cast %227 : vector<1x8x128xf32> to vector<8x128xf32>
    %229 = vector.shape_cast %226 : vector<8x128xf32> to vector<1x8x128xf32>
    tpu.vector_store %arg6[%c5_193, %c0_194, %c0_195], %229 {strides = array<i32>} : memref<8x8x128xf32, #tpu.memory_space<vmem>>, vector<1x8x128xf32>,
    %230 = vector.extract_strided_slice %205 {offsets = [0, 816], sizes = [8, 128], strides = [1, 1]} : vector<8x1080xf32> to vector<8x128xf32>
    %c6_196 = arith.constant 6 : index
    %c0_197 = arith.constant 0 : index
    %c0_198 = arith.constant 0 : index
    %231 = vector.load %arg6[%c6_196, %c0_197, %c0_198] : memref<8x8x128xf32, #tpu.memory_space<vmem>>, vector<1x8x128xf32>
    %232 = vector.shape_cast %231 : vector<1x8x128xf32> to vector<8x128xf32>
    %233 = vector.shape_cast %230 : vector<8x128xf32> to vector<1x8x128xf32>
    tpu.vector_store %arg6[%c6_196, %c0_197, %c0_198], %233 {strides = array<i32>} : memref<8x8x128xf32, #tpu.memory_space<vmem>>, vector<1x8x128xf32>,
    %234 = vector.extract_strided_slice %205 {offsets = [0, 952], sizes = [8, 128], strides = [1, 1]} : vector<8x1080xf32> to vector<8x128xf32>
    %c7_199 = arith.constant 7 : index
    %c0_200 = arith.constant 0 : index
    %c0_201 = arith.constant 0 : index
    %235 = vector.load %arg6[%c7_199, %c0_200, %c0_201] : memref<8x8x128xf32, #tpu.memory_space<vmem>>, vector<1x8x128xf32>
    %236 = vector.shape_cast %235 : vector<1x8x128xf32> to vector<8x128xf32>
    %237 = vector.shape_cast %234 : vector<8x128xf32> to vector<1x8x128xf32>
    tpu.vector_store %arg6[%c7_199, %c0_200, %c0_201], %237 {strides = array<i32>} : memref<8x8x128xf32, #tpu.memory_space<vmem>>, vector<1x8x128xf32>,
    return
  }
  func.func @transform_0(%arg0: i32) -> (i32, i32, i32) {
    %c0_i32 = arith.constant 0 : i32
    %c0_i32_0 = arith.constant 0 : i32
    %c0_i32_1 = arith.constant 0 : i32
    return %arg0, %c0_i32, %c0_i32_0 : i32, i32, i32
  }
  func.func @transform_1(%arg0: i32) -> (i32, i32) {
    %c0_i32 = arith.constant 0 : i32
    %c0_i32_0 = arith.constant 0 : i32
    %c0_i32_1 = arith.constant 0 : i32
    return %c0_i32, %c0_i32_0 : i32, i32
  }
  func.func @transform_2(%arg0: i32) -> (i32, i32) {
    %c0_i32 = arith.constant 0 : i32
    %c0_i32_0 = arith.constant 0 : i32
    %c0_i32_1 = arith.constant 0 : i32
    return %c0_i32, %c0_i32_0 : i32, i32
  }
  func.func @transform_3(%arg0: i32) -> (i32, i32) {
    %c0_i32 = arith.constant 0 : i32
    %c0_i32_0 = arith.constant 0 : i32
    %c0_i32_1 = arith.constant 0 : i32
    return %c0_i32, %c0_i32_0 : i32, i32
  }
  func.func @transform_4(%arg0: i32) -> (i32, i32) {
    %c0_i32 = arith.constant 0 : i32
    %c0_i32_0 = arith.constant 0 : i32
    %c0_i32_1 = arith.constant 0 : i32
    return %c0_i32, %c0_i32_0 : i32, i32
  }
  func.func @transform_5(%arg0: i32) -> (i32, i32, i32) {
    %c0_i32 = arith.constant 0 : i32
    %c0_i32_0 = arith.constant 0 : i32
    %c0_i32_1 = arith.constant 0 : i32
    return %arg0, %c0_i32, %c0_i32_0 : i32, i32, i32
  }
}

</mosaic_0001>

<llo_original>
// kernel: unet_conv_forward.1
$region0: #{unet_conv_forward.1}
  #allocation0 [shape = 'u32[]', space=smem, size = 0x4, offset = 0x4, fixed_abs, tag = 'smem constant byte address 0x4 - core index']
  #allocation1 [shape = 'u32[144,128]{1,0:T(1,128)}', space=vmem, size = 0x12000, scoped, tag = 'internal scratch']
  #allocation2 [shape = 'bf16[4,1088]{1,0:T(4,128)(2,1)}', space=vmem, size = 0x2400, scoped, tag = 'scratch operand']
  #allocation3 [shape = 'bf16[36,1080]{1,0:T(8,128)(2,1)}', space=vmem, size = 0x16800, scoped, tag = 'scratch operand']
  #allocation4 [shape = 'bf16[8,1088]{1,0:T(8,128)(2,1)}', space=vmem, size = 0x4800, scoped, tag = 'scratch operand']
  #allocation5 [shape = 'bf16[72,1080]{1,0:T(8,128)(2,1)}', space=vmem, size = 0x28800, scoped, tag = 'scratch operand']
  %s0 = inlined_call_operand.vmem [shape: bf16[16,4,136], index: 0, kind: input, shape index: {}]
  %s1 = inlined_call_operand.vmem [shape: bf16[8,36], index: 1, kind: input, shape index: {}]
  %s2 = inlined_call_operand.vmem [shape: f32[8,1], index: 2, kind: input, shape index: {}]
  %s3 = inlined_call_operand.vmem [shape: bf16[8,72], index: 3, kind: input, shape index: {}]
  %s4 = inlined_call_operand.vmem [shape: f32[8,1], index: 4, kind: input, shape index: {}]
  %s5 = inlined_call_operand.hbm [shape: f32[16,8,128], index: 5, kind: output, shape index: {}]
  %s6 = sld [smem:[#allocation0]]
  $region53: #{unet_conv_forward.1} parent=0
    _
  %s8 = ssub.s32 1, %s6
  %s9 = scalar_select 0, %s8, %s6
  $region1: #{unet_conv_forward.1} parent=0
    #allocation6 [shape = 'u8[65536]{0}', space=vmem, size = 0x10000, scoped, tag = 'output window, operand 0']
    #allocation7 [shape = 's32[2]{0}', space=sflag, size = 0x8, scoped, tag = 'scoped memory for unet_conv_forward.1']
    %10 = vsyncpa [#allocation7], 0
    %s11 = scalar_lea.sflag [#allocation7], 1
    %12 = vsyncpa %s11, 0
    loop: start=0, step=1, limit=4
    $region2: #{unet_conv_forward.1} parent=1 // loop_pre_header
      _
    $region3: #{unet_conv_forward.1} parent=1 // loop_header
      %s14 = sphi 0, %s18
      %p15 = scmp.ge.s32.totalorder %s14, 4
      %s24 = sphi 0, %s26
      %s27 = sphi 0, %s24
      %s28 = sphi 0, %s27
      %s44 = sphi 0, %s28
      %s48 = sphi 0, %s48
      %s50 = sphi 0, %s48
      %s51 = sphi 0, %s50
      %s65 = sphi 0, %s51
      %s69 = sphi 0, %s69
      %s71 = sphi 0, %s69
      %s72 = sphi 0, %s71
      %s86 = sphi 0, %s72
      %s90 = sphi 0, %s90
      %s92 = sphi 0, %s90
      %s93 = sphi 0, %s92
      %s107 = sphi 0, %s93
      %s111 = sphi 0, %s111
      %s113 = sphi 0, %s111
      %s114 = sphi 0, %s113
      %s128 = sphi 0, %s114
      %s134 = sphi 0, %s136
      %s137 = sphi 0, %s134
      %s138 = sphi 0, %s137
      %s154 = sphi 0, %s138
    $region4: #{unet_conv_forward.1} parent=1 // loop_header_branch
      %17 = sbr.rel (%p15) target = $region8
    $region5: #{unet_conv_forward.1} parent=1 // loop_body
      %s19 = ssub.s32 %s14, 1
      %s20 = ssub.s32 %s14, 2
      %s21 = sadd.s32 %s14, 1
      %s22 = ssub.s32 %s14, %s21
      %p23 = scmp.eq.s32.totalorder %s22, 0
      %s25 = sadd.s32 %s24, 1
      %s26 = scalar_select %p23, %s24, %s25
      %p29 = pneg %p23
      %p30 = scmp.eq.s32.totalorder %s14, 1
      %p31 = por %p29, %p30
      %p32 = scmp.ne.s32.totalorder %s24, %s27
      %p33 = scmp.eq.s32.totalorder %s14, 0
      %p34 = por %p32, %p33
      %p35 = scmp.ne.s32.totalorder %s24, %s27
      %p36 = scmp.eq.s32.totalorder %s19, 1
      %p37 = por %p35, %p36
      %p38 = scmp.ne.s32.totalorder %s27, %s28
      %p39 = scmp.eq.s32.totalorder %s19, 0
      %p40 = por %p38, %p39
      %p41 = scmp.ne.s32.totalorder %s27, %s28
      %p42 = scmp.eq.s32.totalorder %s20, 1
      %p43 = por %p41, %p42
      %p45 = scmp.ne.s32.totalorder %s28, %s44
      %p46 = scmp.eq.s32.totalorder %s20, 0
      %p47 = por %p45, %p46
      %s49 = sadd.s32 %s48, 1
      %p52 = scmp.eq.s32.totalorder %s14, 1
      %p53 = scmp.ne.s32.totalorder %s48, %s50
      %p54 = scmp.eq.s32.totalorder %s14, 0
      %p55 = por %p53, %p54
      %p56 = scmp.ne.s32.totalorder %s48, %s50
      %p57 = scmp.eq.s32.totalorder %s19, 1
      %p58 = por %p56, %p57
      %p59 = scmp.ne.s32.totalorder %s50, %s51
      %p60 = scmp.eq.s32.totalorder %s19, 0
      %p61 = por %p59, %p60
      %p62 = scmp.ne.s32.totalorder %s50, %s51
      %p63 = scmp.eq.s32.totalorder %s20, 1
      %p64 = por %p62, %p63
      %p66 = scmp.ne.s32.totalorder %s51, %s65
      %p67 = scmp.eq.s32.totalorder %s20, 0
      %p68 = por %p66, %p67
      %s70 = sadd.s32 %s69, 1
      %p73 = scmp.eq.s32.totalorder %s14, 1
      %p74 = scmp.ne.s32.totalorder %s69, %s71
      %p75 = scmp.eq.s32.totalorder %s14, 0
      %p76 = por %p74, %p75
      %p77 = scmp.ne.s32.totalorder %s69, %s71
      %p78 = scmp.eq.s32.totalorder %s19, 1
      %p79 = por %p77, %p78
      %p80 = scmp.ne.s32.totalorder %s71, %s72
      %p81 = scmp.eq.s32.totalorder %s19, 0
      %p82 = por %p80, %p81
      %p83 = scmp.ne.s32.totalorder %s71, %s72
      %p84 = scmp.eq.s32.totalorder %s20, 1
      %p85 = por %p83, %p84
      %p87 = scmp.ne.s32.totalorder %s72, %s86
      %p88 = scmp.eq.s32.totalorder %s20, 0
      %p89 = por %p87, %p88
      %s91 = sadd.s32 %s90, 1
      %p94 = scmp.eq.s32.totalorder %s14, 1
      %p95 = scmp.ne.s32.totalorder %s90, %s92
      %p96 = scmp.eq.s32.totalorder %s14, 0
      %p97 = por %p95, %p96
      %p98 = scmp.ne.s32.totalorder %s90, %s92
      %p99 = scmp.eq.s32.totalorder %s19, 1
      %p100 = por %p98, %p99
      %p101 = scmp.ne.s32.totalorder %s92, %s93
      %p102 = scmp.eq.s32.totalorder %s19, 0
      %p103 = por %p101, %p102
      %p104 = scmp.ne.s32.totalorder %s92, %s93
      %p105 = scmp.eq.s32.totalorder %s20, 1
      %p106 = por %p104, %p105
      %p108 = scmp.ne.s32.totalorder %s93, %s107
      %p109 = scmp.eq.s32.totalorder %s20, 0
      %p110 = por %p108, %p109
      %s112 = sadd.s32 %s111, 1
      %p115 = scmp.eq.s32.totalorder %s14, 1
      %p116 = scmp.ne.s32.totalorder %s111, %s113
      %p117 = scmp.eq.s32.totalorder %s14, 0
      %p118 = por %p116, %p117
      %p119 = scmp.ne.s32.totalorder %s111, %s113
      %p120 = scmp.eq.s32.totalorder %s19, 1
      %p121 = por %p119, %p120
      %p122 = scmp.ne.s32.totalorder %s113, %s114
      %p123 = scmp.eq.s32.totalorder %s19, 0
      %p124 = por %p122, %p123
      %p125 = scmp.ne.s32.totalorder %s113, %s114
      %p126 = scmp.eq.s32.totalorder %s20, 1
      %p127 = por %p125, %p126
      %p129 = scmp.ne.s32.totalorder %s114, %s128
      %p130 = scmp.eq.s32.totalorder %s20, 0
      %p131 = por %p129, %p130
      %s132 = ssub.s32 %s14, %s21
      %p133 = scmp.eq.s32.totalorder %s132, 0
      %s135 = sadd.s32 %s134, 1
      %s136 = scalar_select %p133, %s134, %s135
      %p139 = pneg %p133
      %p140 = scmp.eq.s32.totalorder %s14, 1
      %p141 = por %p139, %p140
      %p142 = scmp.ne.s32.totalorder %s134, %s137
      %p143 = scmp.eq.s32.totalorder %s14, 0
      %p144 = por %p142, %p143
      %p145 = scmp.ne.s32.totalorder %s134, %s137
      %p146 = scmp.eq.s32.totalorder %s19, 1
      %p147 = por %p145, %p146
      %p148 = scmp.ne.s32.totalorder %s137, %s138
      %p149 = scmp.eq.s32.totalorder %s19, 0
      %p150 = por %p148, %p149
      %p151 = scmp.ne.s32.totalorder %s137, %s138
      %p152 = scmp.eq.s32.totalorder %s20, 1
      %p153 = por %p151, %p152
      %p155 = scmp.ne.s32.totalorder %s138, %s154
      %p156 = scmp.eq.s32.totalorder %s20, 0
      %p157 = por %p155, %p156
      %p158 = scmp.le.s32.totalorder 1, %s14
      %p159 = scmp.lt.s32.totalorder %s14, 3
      %p160 = pnand %p158, %p159
      %p161 = pneg %p160
      // Predicated region
      $region9: #{unet_conv_forward.1} parent=5 // pred_check
        _
      $region10: #{unet_conv_forward.1} parent=5 // pred_check_branch
        %163 = sbr.rel (%p160) target = $region12
      $region11: #{unet_conv_forward.1} parent=5 // pred_region
        %s164 = ssub.s32 %s14, 1
        // Predicated region
        $region13: #{unet_conv_forward.1} parent=11 // pred_check
          %p165 = pneg %p61
        $region14: #{unet_conv_forward.1} parent=11 // pred_check_branch
          %167 = sbr.rel (%p165) target = $region16
        $region15: #{unet_conv_forward.1} parent=11 // pred_region
          _
        $region16: #{unet_conv_forward.1} parent=11 // pred_fallthru
          _
        // Predicated region
        $region17: #{unet_conv_forward.1} parent=11 // pred_check
          %p168 = pneg %p82
        $region18: #{unet_conv_forward.1} parent=11 // pred_check_branch
          %170 = sbr.rel (%p168) target = $region20
        $region19: #{unet_conv_forward.1} parent=11 // pred_region
          _
        $region20: #{unet_conv_forward.1} parent=11 // pred_fallthru
          _
        // Predicated region
        $region21: #{unet_conv_forward.1} parent=11 // pred_check
          %p171 = pneg %p103
        $region22: #{unet_conv_forward.1} parent=11 // pred_check_branch
          %173 = sbr.rel (%p171) target = $region24
        $region23: #{unet_conv_forward.1} parent=11 // pred_region
          _
        $region24: #{unet_conv_forward.1} parent=11 // pred_fallthru
          _
        // Predicated region
        $region25: #{unet_conv_forward.1} parent=11 // pred_check
          %p174 = pneg %p124
        $region26: #{unet_conv_forward.1} parent=11 // pred_check_branch
          %176 = sbr.rel (%p174) target = $region28
        $region27: #{unet_conv_forward.1} parent=11 // pred_region
          _
        $region28: #{unet_conv_forward.1} parent=11 // pred_fallthru
          _
      $region12: #{unet_conv_forward.1} parent=5 // pred_fallthru
        _
      %p177 = scmp.lt.s32.totalorder %s14, 2
      // Predicated region
      $region29: #{unet_conv_forward.1} parent=5 // pred_check
        %p178 = pneg %p177
      $region30: #{unet_conv_forward.1} parent=5 // pred_check_branch
        %180 = sbr.rel (%p178) target = $region32
      $region31: #{unet_conv_forward.1} parent=5 // pred_region
        // Predicated region
        $region33: #{unet_conv_forward.1} parent=31 // pred_check
          %p181 = pneg %p34
        $region34: #{unet_conv_forward.1} parent=31 // pred_check_branch
          %183 = sbr.rel (%p181) target = $region36
        $region35: #{unet_conv_forward.1} parent=31 // pred_region
          %s184 = smul.u32 8, %s14
          %p185 = scmp.lt.s32.totalorder %s184, 15
          %s186 = scalar_select %p185, %s184, 15
          %s187 = smul.addr %s186, 2
          %s188 = smul.addr %s187, 2
          %s189 = scalar_lea.vmem %s0, %s188
          %s190 = smul.u32 8, %s14
        $region36: #{unet_conv_forward.1} parent=31 // pred_fallthru
          _
      $region32: #{unet_conv_forward.1} parent=5 // pred_fallthru
        _
      %p191 = scmp.le.s32.totalorder 1, %s14
      %p192 = scmp.lt.s32.totalorder %s14, 3
      %p193 = pnand %p191, %p192
      %p194 = pneg %p193
      // Predicated region
      $region37: #{unet_conv_forward.1} parent=5 // pred_check
        _
      $region38: #{unet_conv_forward.1} parent=5 // pred_check_branch
        %196 = sbr.rel (%p193) target = $region40
      $region39: #{unet_conv_forward.1} parent=5 // pred_region
        %s197 = ssub.s32 %s14, 1
        %s198 = smul.u32 8, %s19
        %p199 = scmp.lt.s32.totalorder %s198, 15
        %s200 = scalar_select %p199, %s198, 15
        %s201 = smul.addr %s200, 2
        %s202 = smul.addr %s201, 2
        %s203 = scalar_lea.vmem %s0, %s202
        %p204 = pneg %p40
        %p205 = pneg %p37
        %p206 = pneg %p61
        %p207 = pneg %p58
        %p208 = pneg %p82
        %p209 = pneg %p79
        %p210 = pneg %p103
        %p211 = pneg %p100
        %p212 = pneg %p124
        %p213 = pneg %p121
        %p214 = pneg %p150
        %p215 = pneg %p147
        %s216 = sand.u32 %s137, 1
        %s217 = scalar_lea.sflag [#allocation7], %s216
        %s218 = sand.u32 %s137, 1
        %s219 = smul.addr %s218, 64
        %s220 = scalar_lea.vmem [#allocation6], %s219
        %s221 = smul.u32 8, %s19
        %p222 = scmp.lt.s32.totalorder %s221, 15
        %s223 = scalar_select %p222, %s221, 15
        %s224 = smul.addr %s223, 2
        %s225 = smul.addr %s224, 2
        %s226 = scalar_lea.vmem %s0, %s225
        %s227 = smul.u32 8, %s19
        %s228 = smul.u32 8, %s19
        %v230 = vld [vmem:[%s226] sm:$0xf]
        %vm231 = vcmask 1041408
        %vm232 = vcmask 60418
        %vm233 = vmor %vm232, %vm231
        %234 = vst.msk [vmem:[#allocation2] sm:$0xf] %vm233, %v230
        %s235 = scalar_lea.vmem %s226, 4
        %v236 = vld [vmem:[%s235] sm:$0xf]
        %238 = vrot.lane.b32.xlu0 %v236, 8
        %v239 = vpop.permute.xlu0 %238
        %v240 = vrot.slane %v239, 6
        %vm241 = vcmask 64512
        %v242 = vsel %vm241, %v240, %v239
        %vm244 = vcmask 1041472
        %vm245 = vcmask 125954
        %vm246 = vmor %vm245, %vm244
        %247 = vst.msk [vmem:[#allocation2 + $0x2] sm:$0xf] %vm246, %v242
        %s248 = scalar_lea.vmem %s226, 8
        %v249 = vld [vmem:[%s248] sm:$0xf]
        %251 = vrot.lane.b32.xlu0 %v249, 16
        %v252 = vpop.permute.xlu0 %251
        %v253 = vrot.slane %v252, 6
        %vm254 = vcmask 130048
        %v255 = vsel %vm254, %v253, %v252
        %vm257 = vcmask 1041536
        %vm258 = vcmask 191490
        %vm259 = vmor %vm258, %vm257
        %260 = vst.msk [vmem:[#allocation2 + $0x4] sm:$0xf] %vm259, %v255
        %s261 = scalar_lea.vmem %s226, 12
        %v262 = vld [vmem:[%s261] sm:$0xf]
        %264 = vrot.lane.b32.xlu0 %v262, 24
        %v265 = vpop.permute.xlu0 %264
        %v266 = vrot.slane %v265, 6
        %vm267 = vcmask 195584
        %v268 = vsel %vm267, %v266, %v265
        %vm270 = vcmask 1041600
        %vm271 = vcmask 257026
        %vm272 = vmor %vm271, %vm270
        %273 = vst.msk [vmem:[#allocation2 + $0x6] sm:$0xf] %vm272, %v268
        %s274 = scalar_lea.vmem %s226, 16
        %v275 = vld [vmem:[%s274] sm:$0xf]
        %277 = vrot.lane.b32.xlu0 %v275, 32
        %v278 = vpop.permute.xlu0 %277
        %v279 = vrot.slane %v278, 6
        %vm280 = vcmask 261120
        %v281 = vsel %vm280, %v279, %v278
        %vm283 = vcmask 1041664
        %vm284 = vcmask 322562
        %vm285 = vmor %vm284, %vm283
        %286 = vst.msk [vmem:[#allocation2 + $0x8] sm:$0xf] %vm285, %v281
        %s287 = scalar_lea.vmem %s226, 20
        %v288 = vld [vmem:[%s287] sm:$0xf]
        %290 = vrot.lane.b32.xlu0 %v288, 40
        %v291 = vpop.permute.xlu0 %290
        %v292 = vrot.slane %v291, 6
        %vm293 = vcmask 326656
        %v294 = vsel %vm293, %v292, %v291
        %vm296 = vcmask 1041728
        %vm297 = vcmask 388098
        %vm298 = vmor %vm297, %vm296
        %299 = vst.msk [vmem:[#allocation2 + $0xa] sm:$0xf] %vm298, %v294
        %s300 = scalar_lea.vmem %s226, 24
        %v301 = vld [vmem:[%s300] sm:$0xf]
        %303 = vrot.lane.b32.xlu0 %v301, 48
        %v304 = vpop.permute.xlu0 %303
        %v305 = vrot.slane %v304, 6
        %vm306 = vcmask 392192
        %v307 = vsel %vm306, %v305, %v304
        %vm309 = vcmask 1041792
        %vm310 = vcmask 453634
        %vm311 = vmor %vm310, %vm309
        %312 = vst.msk [vmem:[#allocation2 + $0xc] sm:$0xf] %vm311, %v307
        %s313 = scalar_lea.vmem %s226, 28
        %v314 = vld [vmem:[%s313] sm:$0xf]
        %316 = vrot.lane.b32.xlu0 %v314, 56
        %v317 = vpop.permute.xlu0 %316
        %v318 = vrot.slane %v317, 6
        %vm319 = vcmask 457728
        %v320 = vsel %vm319, %v318, %v317
        %vm322 = vcmask 1041856
        %vm323 = vcmask 519170
        %vm324 = vmor %vm323, %vm322
        %325 = vst.msk [vmem:[#allocation2 + $0xe] sm:$0xf] %vm324, %v320
        %v326 = vld [vmem:[#allocation2] sm:$0xff]
        %v327 = vld [vmem:[#allocation2 + $0x8] sm:$0xff]
        %v328 = vld [vmem:[#allocation2 + $0x10] sm:$0x3]
        %v332 = vcombine.high %v326, %v326
        %v334 = vunpack.c.l.s4 1983009808
        %v335 = vunpack.c.0.s8 %v334
        %v336 = vlaneseq
        %v337 = vshrl.u32 %v336, 7
        %v338 = vsub.s32 %v335, %v337
        %v339 = vrot.slane %v326, %v338
        %v341 = vunpack.c.l.s4 1983009808
        %v342 = vunpack.c.0.s8 %v341
        %v343 = vlaneseq
        %v344 = vshrl.u32 %v343, 7
        %v345 = vsub.s32 %v342, %v344
        %v346 = vrot.slane %v332, %v345
        %v347 = vcombine.high %v327, %v327
        %v349 = vunpack.c.l.s4 1983009808
        %v350 = vunpack.c.0.s8 %v349
        %v351 = vlaneseq
        %v352 = vshrl.u32 %v351, 7
        %v353 = vsub.s32 %v350, %v352
        %v354 = vrot.slane %v327, %v353
        %v356 = vunpack.c.l.s4 1983009808
        %v357 = vunpack.c.0.s8 %v356
        %v358 = vlaneseq
        %v359 = vshrl.u32 %v358, 7
        %v360 = vsub.s32 %v357, %v359
        %v361 = vrot.slane %v347, %v360
        %v363 = vunpack.c.l.s4 1983009808
        %v364 = vunpack.c.0.s8 %v363
        %v365 = vlaneseq
        %v366 = vshrl.u32 %v365, 7
        %v367 = vsub.s32 %v364, %v366
        %v368 = vrot.slane %v328, %v367
        %374 = vst [vmem:[#allocation3] sm:$0x33] %v339
        %375 = vst [vmem:[#allocation3 + $0x8] sm:$0x33] %v346
        %376 = vst [vmem:[#allocation3 + $0x10] sm:$0x33] %v354
        %377 = vst [vmem:[#allocation3 + $0x18] sm:$0x33] %v361
        %vm378 = vcmask 451584
        %379 = vst.msk [vmem:[#allocation3 + $0x20] sm:$0x3] %vm378, %v368
        %v380 = vld [vmem:[#allocation2] sm:$0xff]
        %v381 = vld [vmem:[#allocation2 + $0x8] sm:$0xff]
        %v382 = vld [vmem:[#allocation2 + $0x10] sm:$0x3]
        %v386 = vcombine.low %v380, %v380
        %v388 = vunpack.c.l.s4 1983009808
        %v389 = vunpack.c.0.s8 %v388
        %v390 = vlaneseq
        %v391 = vshrl.u32 %v390, 7
        %v392 = vsub.s32 %v389, %v391
        %v393 = vrot.slane %v386, %v392
        %v395 = vunpack.c.l.s4 1983009808
        %v396 = vunpack.c.0.s8 %v395
        %v397 = vlaneseq
        %v398 = vshrl.u32 %v397, 7
        %v399 = vsub.s32 %v396, %v398
        %v400 = vrot.slane %v380, %v399
        %v401 = vcombine.low %v381, %v381
        %v403 = vunpack.c.l.s4 1983009808
        %v404 = vunpack.c.0.s8 %v403
        %v405 = vlaneseq
        %v406 = vshrl.u32 %v405, 7
        %v407 = vsub.s32 %v404, %v406
        %v408 = vrot.slane %v401, %v407
        %v410 = vunpack.c.l.s4 1983009808
        %v411 = vunpack.c.0.s8 %v410
        %v412 = vlaneseq
        %v413 = vshrl.u32 %v412, 7
        %v414 = vsub.s32 %v411, %v413
        %v415 = vrot.slane %v381, %v414
        %v416 = vcombine.low %v382, %v382
        %v418 = vunpack.c.l.s4 1983009808
        %v419 = vunpack.c.0.s8 %v418
        %v420 = vlaneseq
        %v421 = vshrl.u32 %v420, 7
        %v422 = vsub.s32 %v419, %v421
        %v423 = vrot.slane %v416, %v422
        %424 = vrot.lane.b32.xlu0 %v393, 127
        %v425 = vpop.permute.xlu0 %424
        %426 = vrot.lane.b32.xlu0 %v400, 127
        %v427 = vpop.permute.xlu0 %426
        %428 = vrot.lane.b32.xlu0 %v408, 127
        %v429 = vpop.permute.xlu0 %428
        %430 = vrot.lane.b32.xlu0 %v415, 127
        %v431 = vpop.permute.xlu0 %430
        %432 = vrot.lane.b32.xlu0 %v423, 127
        %v433 = vpop.permute.xlu0 %432
        %v434 = vrot.slane %v425, 4
        %v435 = vrot.slane %v427, 4
        %v436 = vrot.slane %v429, 4
        %v437 = vrot.slane %v431, 4
        %v438 = vrot.slane %v433, 4
        %vm439 = vcmask 1043456
        %v440 = vsel %vm439, %v434, %v435
        %vm441 = vcmask 1039360
        %v442 = vsel %vm441, %v425, %v440
        %v443 = vsel %vm439, %v435, %v436
        %v444 = vsel %vm441, %v427, %v443
        %v445 = vsel %vm439, %v436, %v437
        %v446 = vsel %vm441, %v429, %v445
        %v447 = vsel %vm439, %v437, %v438
        %v448 = vsel %vm441, %v431, %v447
        %454 = vst [vmem:[#allocation3] sm:$0xcc] %v442
        %455 = vst [vmem:[#allocation3 + $0x8] sm:$0xcc] %v444
        %456 = vst [vmem:[#allocation3 + $0x10] sm:$0xcc] %v446
        %457 = vst [vmem:[#allocation3 + $0x18] sm:$0xcc] %v448
        %458 = vst.msk [vmem:[#allocation3 + $0x20] sm:$0xc] %vm310, %v433
        %v459 = vld [vmem:[#allocation2] sm:$0xff]
        %v460 = vld [vmem:[#allocation2 + $0x8] sm:$0xff]
        %v461 = vld [vmem:[#allocation2 + $0x10] sm:$0x3]
        %v465 = vcombine.high %v459, %v459
        %v467 = vunpack.c.l.s4 1983009808
        %v468 = vunpack.c.0.s8 %v467
        %v469 = vlaneseq
        %v470 = vshrl.u32 %v469, 7
        %v471 = vsub.s32 %v468, %v470
        %v472 = vrot.slane %v459, %v471
        %v474 = vunpack.c.l.s4 1983009808
        %v475 = vunpack.c.0.s8 %v474
        %v476 = vlaneseq
        %v477 = vshrl.u32 %v476, 7
        %v478 = vsub.s32 %v475, %v477
        %v479 = vrot.slane %v465, %v478
        %v480 = vcombine.high %v460, %v460
        %v482 = vunpack.c.l.s4 1983009808
        %v483 = vunpack.c.0.s8 %v482
        %v484 = vlaneseq
        %v485 = vshrl.u32 %v484, 7
        %v486 = vsub.s32 %v483, %v485
        %v487 = vrot.slane %v460, %v486
        %v489 = vunpack.c.l.s4 1983009808
        %v490 = vunpack.c.0.s8 %v489
        %v491 = vlaneseq
        %v492 = vshrl.u32 %v491, 7
        %v493 = vsub.s32 %v490, %v492
        %v494 = vrot.slane %v480, %v493
        %v496 = vunpack.c.l.s4 1983009808
        %v497 = vunpack.c.0.s8 %v496
        %v498 = vlaneseq
        %v499 = vshrl.u32 %v498, 7
        %v500 = vsub.s32 %v497, %v499
        %v501 = vrot.slane %v461, %v500
        %502 = vrot.lane.b32.xlu0 %v472, 126
        %v503 = vpop.permute.xlu0 %502
        %504 = vrot.lane.b32.xlu0 %v479, 126
        %v505 = vpop.permute.xlu0 %504
        %506 = vrot.lane.b32.xlu0 %v487, 126
        %v507 = vpop.permute.xlu0 %506
        %508 = vrot.lane.b32.xlu0 %v494, 126
        %v509 = vpop.permute.xlu0 %508
        %510 = vrot.lane.b32.xlu0 %v501, 126
        %v511 = vpop.permute.xlu0 %510
        %v512 = vrot.slane %v503, 4
        %v513 = vrot.slane %v505, 4
        %v514 = vrot.slane %v507, 4
        %v515 = vrot.slane %v509, 4
        %v516 = vrot.slane %v511, 4
        %v517 = vsel %vm439, %v512, %v513
        %vm518 = vcmask 1031168
        %v519 = vsel %vm518, %v503, %v517
        %v520 = vsel %vm439, %v513, %v514
        %v521 = vsel %vm518, %v505, %v520
        %v522 = vsel %vm439, %v514, %v515
        %v523 = vsel %vm518, %v507, %v522
        %v524 = vsel %vm439, %v515, %v516
        %v525 = vsel %vm518, %v509, %v524
        %531 = vst [vmem:[#allocation3 + $0x24] sm:$0x33] %v519
        %532 = vst [vmem:[#allocation3 + $0x2c] sm:$0x33] %v521
        %533 = vst [vmem:[#allocation3 + $0x34] sm:$0x33] %v523
        %534 = vst [vmem:[#allocation3 + $0x3c] sm:$0x33] %v525
        %535 = vst.msk [vmem:[#allocation3 + $0x44] sm:$0x3] %vm378, %v511
        %v536 = vld [vmem:[#allocation2] sm:$0xff]
        %v537 = vld [vmem:[#allocation2 + $0x8] sm:$0xff]
        %v538 = vld [vmem:[#allocation2 + $0x10] sm:$0x3]
        %v542 = vcombine.low %v536, %v536
        %v544 = vunpack.c.l.s4 1983009808
        %v545 = vunpack.c.0.s8 %v544
        %v546 = vlaneseq
        %v547 = vshrl.u32 %v546, 7
        %v548 = vsub.s32 %v545, %v547
        %v549 = vrot.slane %v542, %v548
        %v551 = vunpack.c.l.s4 1983009808
        %v552 = vunpack.c.0.s8 %v551
        %v553 = vlaneseq
        %v554 = vshrl.u32 %v553, 7
        %v555 = vsub.s32 %v552, %v554
        %v556 = vrot.slane %v536, %v555
        %v557 = vcombine.low %v537, %v537
        %v559 = vunpack.c.l.s4 1983009808
        %v560 = vunpack.c.0.s8 %v559
        %v561 = vlaneseq
        %v562 = vshrl.u32 %v561, 7
        %v563 = vsub.s32 %v560, %v562
        %v564 = vrot.slane %v557, %v563
        %v566 = vunpack.c.l.s4 1983009808
        %v567 = vunpack.c.0.s8 %v566
        %v568 = vlaneseq
        %v569 = vshrl.u32 %v568, 7
        %v570 = vsub.s32 %v567, %v569
        %v571 = vrot.slane %v537, %v570
        %v572 = vcombine.low %v538, %v538
        %v574 = vunpack.c.l.s4 1983009808
        %v575 = vunpack.c.0.s8 %v574
        %v576 = vlaneseq
        %v577 = vshrl.u32 %v576, 7
        %v578 = vsub.s32 %v575, %v577
        %v579 = vrot.slane %v572, %v578
        %580 = vrot.lane.b32.xlu0 %v549, 125
        %v581 = vpop.permute.xlu0 %580
        %582 = vrot.lane.b32.xlu0 %v556, 125
        %v583 = vpop.permute.xlu0 %582
        %584 = vrot.lane.b32.xlu0 %v564, 125
        %v585 = vpop.permute.xlu0 %584
        %586 = vrot.lane.b32.xlu0 %v571, 125
        %v587 = vpop.permute.xlu0 %586
        %588 = vrot.lane.b32.xlu0 %v579, 125
        %v589 = vpop.permute.xlu0 %588
        %v590 = vrot.slane %v581, 4
        %v591 = vrot.slane %v583, 4
        %v592 = vrot.slane %v585, 4
        %v593 = vrot.slane %v587, 4
        %v594 = vrot.slane %v589, 4
        %v595 = vsel %vm439, %v590, %v591
        %vm596 = vcmask 1022976
        %v597 = vsel %vm596, %v581, %v595
        %v598 = vsel %vm439, %v591, %v592
        %v599 = vsel %vm596, %v583, %v598
        %v600 = vsel %vm439, %v592, %v593
        %v601 = vsel %vm596, %v585, %v600
        %v602 = vsel %vm439, %v593, %v594
        %v603 = vsel %vm596, %v587, %v602
        %609 = vst [vmem:[#allocation3 + $0x24] sm:$0xcc] %v597
        %610 = vst [vmem:[#allocation3 + $0x2c] sm:$0xcc] %v599
        %611 = vst [vmem:[#allocation3 + $0x34] sm:$0xcc] %v601
        %612 = vst [vmem:[#allocation3 + $0x3c] sm:$0xcc] %v603
        %613 = vst.msk [vmem:[#allocation3 + $0x44] sm:$0xc] %vm310, %v589
        %v614 = vld [vmem:[#allocation2] sm:$0xff]
        %v615 = vld [vmem:[#allocation2 + $0x8] sm:$0xff]
        %v616 = vld [vmem:[#allocation2 + $0x10] sm:$0x3]
        %v620 = vcombine.high %v614, %v614
        %v622 = vunpack.c.l.s4 1983009808
        %v623 = vunpack.c.0.s8 %v622
        %v624 = vlaneseq
        %v625 = vshrl.u32 %v624, 7
        %v626 = vsub.s32 %v623, %v625
        %v627 = vrot.slane %v614, %v626
        %v629 = vunpack.c.l.s4 1983009808
        %v630 = vunpack.c.0.s8 %v629
        %v631 = vlaneseq
        %v632 = vshrl.u32 %v631, 7
        %v633 = vsub.s32 %v630, %v632
        %v634 = vrot.slane %v620, %v633
        %v635 = vcombine.high %v615, %v615
        %v637 = vunpack.c.l.s4 1983009808
        %v638 = vunpack.c.0.s8 %v637
        %v639 = vlaneseq
        %v640 = vshrl.u32 %v639, 7
        %v641 = vsub.s32 %v638, %v640
        %v642 = vrot.slane %v615, %v641
        %v644 = vunpack.c.l.s4 1983009808
        %v645 = vunpack.c.0.s8 %v644
        %v646 = vlaneseq
        %v647 = vshrl.u32 %v646, 7
        %v648 = vsub.s32 %v645, %v647
        %v649 = vrot.slane %v635, %v648
        %v651 = vunpack.c.l.s4 1983009808
        %v652 = vunpack.c.0.s8 %v651
        %v653 = vlaneseq
        %v654 = vshrl.u32 %v653, 7
        %v655 = vsub.s32 %v652, %v654
        %v656 = vrot.slane %v616, %v655
        %657 = vrot.lane.b32.xlu0 %v627, 124
        %v658 = vpop.permute.xlu0 %657
        %659 = vrot.lane.b32.xlu0 %v634, 124
        %v660 = vpop.permute.xlu0 %659
        %661 = vrot.lane.b32.xlu0 %v642, 124
        %v662 = vpop.permute.xlu0 %661
        %663 = vrot.lane.b32.xlu0 %v649, 124
        %v664 = vpop.permute.xlu0 %663
        %665 = vrot.lane.b32.xlu0 %v656, 124
        %v666 = vpop.permute.xlu0 %665
        %v667 = vrot.slane %v658, 4
        %v668 = vrot.slane %v660, 4
        %v669 = vrot.slane %v662, 4
        %v670 = vrot.slane %v664, 4
        %v671 = vrot.slane %v666, 4
        %v672 = vsel %vm439, %v667, %v668
        %vm673 = vcmask 1014784
        %v674 = vsel %vm673, %v658, %v672
        %v675 = vsel %vm439, %v668, %v669
        %v676 = vsel %vm673, %v660, %v675
        %v677 = vsel %vm439, %v669, %v670
        %v678 = vsel %vm673, %v662, %v677
        %v679 = vsel %vm439, %v670, %v671
        %v680 = vsel %vm673, %v664, %v679
        %686 = vst [vmem:[#allocation3 + $0x48] sm:$0x33] %v674
        %687 = vst [vmem:[#allocation3 + $0x50] sm:$0x33] %v676
        %688 = vst [vmem:[#allocation3 + $0x58] sm:$0x33] %v678
        %689 = vst [vmem:[#allocation3 + $0x60] sm:$0x33] %v680
        %690 = vst.msk [vmem:[#allocation3 + $0x68] sm:$0x3] %vm378, %v666
        %v691 = vld [vmem:[#allocation2] sm:$0xff]
        %v692 = vld [vmem:[#allocation2 + $0x8] sm:$0xff]
        %v693 = vld [vmem:[#allocation2 + $0x10] sm:$0x3]
        %v697 = vcombine.low %v691, %v691
        %v699 = vunpack.c.l.s4 1983009808
        %v700 = vunpack.c.0.s8 %v699
        %v701 = vlaneseq
        %v702 = vshrl.u32 %v701, 7
        %v703 = vsub.s32 %v700, %v702
        %v704 = vrot.slane %v697, %v703
        %v706 = vunpack.c.l.s4 1983009808
        %v707 = vunpack.c.0.s8 %v706
        %v708 = vlaneseq
        %v709 = vshrl.u32 %v708, 7
        %v710 = vsub.s32 %v707, %v709
        %v711 = vrot.slane %v691, %v710
        %v712 = vcombine.low %v692, %v692
        %v714 = vunpack.c.l.s4 1983009808
        %v715 = vunpack.c.0.s8 %v714
        %v716 = vlaneseq
        %v717 = vshrl.u32 %v716, 7
        %v718 = vsub.s32 %v715, %v717
        %v719 = vrot.slane %v712, %v718
        %v721 = vunpack.c.l.s4 1983009808
        %v722 = vunpack.c.0.s8 %v721
        %v723 = vlaneseq
        %v724 = vshrl.u32 %v723, 7
        %v725 = vsub.s32 %v722, %v724
        %v726 = vrot.slane %v692, %v725
        %v727 = vcombine.low %v693, %v693
        %v729 = vunpack.c.l.s4 1983009808
        %v730 = vunpack.c.0.s8 %v729
        %v731 = vlaneseq
        %v732 = vshrl.u32 %v731, 7
        %v733 = vsub.s32 %v730, %v732
        %v734 = vrot.slane %v727, %v733
        %735 = vrot.lane.b32.xlu0 %v704, 123
        %v736 = vpop.permute.xlu0 %735
        %737 = vrot.lane.b32.xlu0 %v711, 123
        %v738 = vpop.permute.xlu0 %737
        %739 = vrot.lane.b32.xlu0 %v719, 123
        %v740 = vpop.permute.xlu0 %739
        %741 = vrot.lane.b32.xlu0 %v726, 123
        %v742 = vpop.permute.xlu0 %741
        %743 = vrot.lane.b32.xlu0 %v734, 123
        %v744 = vpop.permute.xlu0 %743
        %v745 = vrot.slane %v736, 4
        %v746 = vrot.slane %v738, 4
        %v747 = vrot.slane %v740, 4
        %v748 = vrot.slane %v742, 4
        %v749 = vrot.slane %v744, 4
        %v750 = vsel %vm439, %v745, %v746
        %vm751 = vcmask 1006592
        %v752 = vsel %vm751, %v736, %v750
        %v753 = vsel %vm439, %v746, %v747
        %v754 = vsel %vm751, %v738, %v753
        %v755 = vsel %vm439, %v747, %v748
        %v756 = vsel %vm751, %v740, %v755
        %v757 = vsel %vm439, %v748, %v749
        %v758 = vsel %vm751, %v742, %v757
        %764 = vst [vmem:[#allocation3 + $0x48] sm:$0xcc] %v752
        %765 = vst [vmem:[#allocation3 + $0x50] sm:$0xcc] %v754
        %766 = vst [vmem:[#allocation3 + $0x58] sm:$0xcc] %v756
        %767 = vst [vmem:[#allocation3 + $0x60] sm:$0xcc] %v758
        %768 = vst.msk [vmem:[#allocation3 + $0x68] sm:$0xc] %vm310, %v744
        %v769 = vld [vmem:[#allocation2] sm:$0xff]
        %v770 = vld [vmem:[#allocation2 + $0x8] sm:$0xff]
        %v771 = vld [vmem:[#allocation2 + $0x10] sm:$0x3]
        %v775 = vcombine.high %v769, %v769
        %v777 = vunpack.c.l.s4 1983009808
        %v778 = vunpack.c.0.s8 %v777
        %v779 = vlaneseq
        %v780 = vshrl.u32 %v779, 7
        %v781 = vsub.s32 %v778, %v780
        %v782 = vrot.slane %v769, %v781
        %v784 = vunpack.c.l.s4 1983009808
        %v785 = vunpack.c.0.s8 %v784
        %v786 = vlaneseq
        %v787 = vshrl.u32 %v786, 7
        %v788 = vsub.s32 %v785, %v787
        %v789 = vrot.slane %v775, %v788
        %v790 = vcombine.high %v770, %v770
        %v792 = vunpack.c.l.s4 1983009808
        %v793 = vunpack.c.0.s8 %v792
        %v794 = vlaneseq
        %v795 = vshrl.u32 %v794, 7
        %v796 = vsub.s32 %v793, %v795
        %v797 = vrot.slane %v770, %v796
        %v799 = vunpack.c.l.s4 1983009808
        %v800 = vunpack.c.0.s8 %v799
        %v801 = vlaneseq
        %v802 = vshrl.u32 %v801, 7
        %v803 = vsub.s32 %v800, %v802
        %v804 = vrot.slane %v790, %v803
        %v806 = vunpack.c.l.s4 1983009808
        %v807 = vunpack.c.0.s8 %v806
        %v808 = vlaneseq
        %v809 = vshrl.u32 %v808, 7
        %v810 = vsub.s32 %v807, %v809
        %v811 = vrot.slane %v771, %v810
        %812 = vrot.lane.b32.xlu0 %v782, 122
        %v813 = vpop.permute.xlu0 %812
        %814 = vrot.lane.b32.xlu0 %v789, 122
        %v815 = vpop.permute.xlu0 %814
        %816 = vrot.lane.b32.xlu0 %v797, 122
        %v817 = vpop.permute.xlu0 %816
        %818 = vrot.lane.b32.xlu0 %v804, 122
        %v819 = vpop.permute.xlu0 %818
        %820 = vrot.lane.b32.xlu0 %v811, 122
        %v821 = vpop.permute.xlu0 %820
        %v822 = vrot.slane %v813, 4
        %v823 = vrot.slane %v815, 4
        %v824 = vrot.slane %v817, 4
        %v825 = vrot.slane %v819, 4
        %v826 = vrot.slane %v821, 4
        %v827 = vsel %vm439, %v822, %v823
        %vm828 = vcmask 998400
        %v829 = vsel %vm828, %v813, %v827
        %v830 = vsel %vm439, %v823, %v824
        %v831 = vsel %vm828, %v815, %v830
        %v832 = vsel %vm439, %v824, %v825
        %v833 = vsel %vm828, %v817, %v832
        %v834 = vsel %vm439, %v825, %v826
        %v835 = vsel %vm828, %v819, %v834
        %841 = vst [vmem:[#allocation3 + $0x6c] sm:$0x33] %v829
        %842 = vst [vmem:[#allocation3 + $0x74] sm:$0x33] %v831
        %843 = vst [vmem:[#allocation3 + $0x7c] sm:$0x33] %v833
        %844 = vst [vmem:[#allocation3 + $0x84] sm:$0x33] %v835
        %845 = vst.msk [vmem:[#allocation3 + $0x8c] sm:$0x3] %vm378, %v821
        %v846 = vld [vmem:[#allocation2] sm:$0xff]
        %v847 = vld [vmem:[#allocation2 + $0x8] sm:$0xff]
        %v848 = vld [vmem:[#allocation2 + $0x10] sm:$0x3]
        %v852 = vcombine.low %v846, %v846
        %v854 = vunpack.c.l.s4 1983009808
        %v855 = vunpack.c.0.s8 %v854
        %v856 = vlaneseq
        %v857 = vshrl.u32 %v856, 7
        %v858 = vsub.s32 %v855, %v857
        %v859 = vrot.slane %v852, %v858
        %v861 = vunpack.c.l.s4 1983009808
        %v862 = vunpack.c.0.s8 %v861
        %v863 = vlaneseq
        %v864 = vshrl.u32 %v863, 7
        %v865 = vsub.s32 %v862, %v864
        %v866 = vrot.slane %v846, %v865
        %v867 = vcombine.low %v847, %v847
        %v869 = vunpack.c.l.s4 1983009808
        %v870 = vunpack.c.0.s8 %v869
        %v871 = vlaneseq
        %v872 = vshrl.u32 %v871, 7
        %v873 = vsub.s32 %v870, %v872
        %v874 = vrot.slane %v867, %v873
        %v876 = vunpack.c.l.s4 1983009808
        %v877 = vunpack.c.0.s8 %v876
        %v878 = vlaneseq
        %v879 = vshrl.u32 %v878, 7
        %v880 = vsub.s32 %v877, %v879
        %v881 = vrot.slane %v847, %v880
        %v882 = vcombine.low %v848, %v848
        %v884 = vunpack.c.l.s4 1983009808
        %v885 = vunpack.c.0.s8 %v884
        %v886 = vlaneseq
        %v887 = vshrl.u32 %v886, 7
        %v888 = vsub.s32 %v885, %v887
        %v889 = vrot.slane %v882, %v888
        %890 = vrot.lane.b32.xlu0 %v859, 121
        %v891 = vpop.permute.xlu0 %890
        %892 = vrot.lane.b32.xlu0 %v866, 121
        %v893 = vpop.permute.xlu0 %892
        %894 = vrot.lane.b32.xlu0 %v874, 121
        %v895 = vpop.permute.xlu0 %894
        %896 = vrot.lane.b32.xlu0 %v881, 121
        %v897 = vpop.permute.xlu0 %896
        %898 = vrot.lane.b32.xlu0 %v889, 121
        %v899 = vpop.permute.xlu0 %898
        %v900 = vrot.slane %v891, 4
        %v901 = vrot.slane %v893, 4
        %v902 = vrot.slane %v895, 4
        %v903 = vrot.slane %v897, 4
        %v904 = vrot.slane %v899, 4
        %v905 = vsel %vm439, %v900, %v901
        %vm906 = vcmask 990208
        %v907 = vsel %vm906, %v891, %v905
        %v908 = vsel %vm439, %v901, %v902
        %v909 = vsel %vm906, %v893, %v908
        %v910 = vsel %vm439, %v902, %v903
        %v911 = vsel %vm906, %v895, %v910
        %v912 = vsel %vm439, %v903, %v904
        %v913 = vsel %vm906, %v897, %v912
        %919 = vst [vmem:[#allocation3 + $0x6c] sm:$0xcc] %v907
        %920 = vst [vmem:[#allocation3 + $0x74] sm:$0xcc] %v909
        %921 = vst [vmem:[#allocation3 + $0x7c] sm:$0xcc] %v911
        %922 = vst [vmem:[#allocation3 + $0x84] sm:$0xcc] %v913
        %923 = vst.msk [vmem:[#allocation3 + $0x8c] sm:$0xc] %vm310, %v899
        %v924 = vld [vmem:[#allocation2] sm:$0xff]
        %v925 = vld [vmem:[#allocation2 + $0x8] sm:$0xff]
        %v926 = vld [vmem:[#allocation2 + $0x10] sm:$0x3]
        %v930 = vcombine.high %v924, %v924
        %v932 = vunpack.c.l.s4 1983009808
        %v933 = vunpack.c.0.s8 %v932
        %v934 = vlaneseq
        %v935 = vshrl.u32 %v934, 7
        %v936 = vsub.s32 %v933, %v935
        %v937 = vrot.slane %v924, %v936
        %v939 = vunpack.c.l.s4 1983009808
        %v940 = vunpack.c.0.s8 %v939
        %v941 = vlaneseq
        %v942 = vshrl.u32 %v941, 7
        %v943 = vsub.s32 %v940, %v942
        %v944 = vrot.slane %v930, %v943
        %v945 = vcombine.high %v925, %v925
        %v947 = vunpack.c.l.s4 1983009808
        %v948 = vunpack.c.0.s8 %v947
        %v949 = vlaneseq
        %v950 = vshrl.u32 %v949, 7
        %v951 = vsub.s32 %v948, %v950
        %v952 = vrot.slane %v925, %v951
        %v954 = vunpack.c.l.s4 1983009808
        %v955 = vunpack.c.0.s8 %v954
        %v956 = vlaneseq
        %v957 = vshrl.u32 %v956, 7
        %v958 = vsub.s32 %v955, %v957
        %v959 = vrot.slane %v945, %v958
        %v961 = vunpack.c.l.s4 1983009808
        %v962 = vunpack.c.0.s8 %v961
        %v963 = vlaneseq
        %v964 = vshrl.u32 %v963, 7
        %v965 = vsub.s32 %v962, %v964
        %v966 = vrot.slane %v926, %v965
        %967 = vrot.lane.b32.xlu0 %v937, 120
        %v968 = vpop.permute.xlu0 %967
        %969 = vrot.lane.b32.xlu0 %v944, 120
        %v970 = vpop.permute.xlu0 %969
        %971 = vrot.lane.b32.xlu0 %v952, 120
        %v972 = vpop.permute.xlu0 %971
        %973 = vrot.lane.b32.xlu0 %v959, 120
        %v974 = vpop.permute.xlu0 %973
        %975 = vrot.lane.b32.xlu0 %v966, 120
        %v976 = vpop.permute.xlu0 %975
        %v977 = vrot.slane %v968, 4
        %v978 = vrot.slane %v970, 4
        %v979 = vrot.slane %v972, 4
        %v980 = vrot.slane %v974, 4
        %v981 = vrot.slane %v976, 4
        %v982 = vsel %vm439, %v977, %v978
        %vm983 = vcmask 982016
        %v984 = vsel %vm983, %v968, %v982
        %v985 = vsel %vm439, %v978, %v979
        %v986 = vsel %vm983, %v970, %v985
        %v987 = vsel %vm439, %v979, %v980
        %v988 = vsel %vm983, %v972, %v987
        %v989 = vsel %vm439, %v980, %v981
        %v990 = vsel %vm983, %v974, %v989
        %996 = vst [vmem:[#allocation3 + $0x90] sm:$0x33] %v984
        %997 = vst [vmem:[#allocation3 + $0x98] sm:$0x33] %v986
        %998 = vst [vmem:[#allocation3 + $0xa0] sm:$0x33] %v988
        %999 = vst [vmem:[#allocation3 + $0xa8] sm:$0x33] %v990
        %1000 = vst.msk [vmem:[#allocation3 + $0xb0] sm:$0x3] %vm378, %v976
        %v1001 = vld [vmem:[%s1] sm:$0xf]
        %v1002 = vld [vmem:[#allocation3] sm:$0xff]
        %v1003 = vld [vmem:[#allocation3 + $0x8] sm:$0xff]
        %v1004 = vld [vmem:[#allocation3 + $0x10] sm:$0xff]
        %v1005 = vld [vmem:[#allocation3 + $0x18] sm:$0xff]
        %v1006 = vld [vmem:[#allocation3 + $0x20] sm:$0xf]
        %v1007 = vld [vmem:[#allocation3 + $0x24] sm:$0xff]
        %v1008 = vld [vmem:[#allocation3 + $0x2c] sm:$0xff]
        %v1009 = vld [vmem:[#allocation3 + $0x34] sm:$0xff]
        %v1010 = vld [vmem:[#allocation3 + $0x3c] sm:$0xff]
        %v1011 = vld [vmem:[#allocation3 + $0x44] sm:$0xf]
        %v1012 = vld [vmem:[#allocation3 + $0x48] sm:$0xff]
        %v1013 = vld [vmem:[#allocation3 + $0x50] sm:$0xff]
        %v1014 = vld [vmem:[#allocation3 + $0x58] sm:$0xff]
        %v1015 = vld [vmem:[#allocation3 + $0x60] sm:$0xff]
        %v1016 = vld [vmem:[#allocation3 + $0x68] sm:$0xf]
        %v1017 = vld [vmem:[#allocation3 + $0x6c] sm:$0xff]
        %v1018 = vld [vmem:[#allocation3 + $0x74] sm:$0xff]
        %v1019 = vld [vmem:[#allocation3 + $0x7c] sm:$0xff]
        %v1020 = vld [vmem:[#allocation3 + $0x84] sm:$0xff]
        %v1021 = vld [vmem:[#allocation3 + $0x8c] sm:$0xf]
        %v1022 = vld [vmem:[#allocation3 + $0x90] sm:$0x33]
        %v1023 = vld [vmem:[#allocation3 + $0x98] sm:$0x33]
        %v1024 = vld [vmem:[#allocation3 + $0xa0] sm:$0x33]
        %v1025 = vld [vmem:[#allocation3 + $0xa8] sm:$0x33]
        %v1026 = vld [vmem:[#allocation3 + $0xb0] sm:$0x3]
        %v1027 = vld [vmem:[%s2] sm:$0xff]
        %1029 = vset.pattern.permute.xlu0 0
        %1030 = vperm.xlu0 %1029, %v1027
        %v1031 = vpop.permute.xlu0 %1030
        %v1058 = vunpack.c.l.b16 %v1002
        %v1059 = vunpack.c.h.b16 %v1002
        %v1060 = vunpack.c.l.b16 %v1003
        %v1061 = vunpack.c.h.b16 %v1003
        %v1062 = vunpack.c.l.b16 %v1004
        %v1063 = vunpack.c.h.b16 %v1004
        %v1064 = vunpack.c.l.b16 %v1005
        %v1065 = vunpack.c.h.b16 %v1005
        %v1066 = vunpack.c.l.b16 %v1006
        %v1067 = vunpack.c.l.b16 %v1007
        %v1068 = vunpack.c.h.b16 %v1007
        %v1069 = vunpack.c.l.b16 %v1008
        %v1070 = vunpack.c.h.b16 %v1008
        %v1071 = vunpack.c.l.b16 %v1009
        %v1072 = vunpack.c.h.b16 %v1009
        %v1073 = vunpack.c.l.b16 %v1010
        %v1074 = vunpack.c.h.b16 %v1010
        %v1075 = vunpack.c.l.b16 %v1011
        %v1076 = vunpack.c.l.b16 %v1012
        %v1077 = vunpack.c.h.b16 %v1012
        %v1078 = vunpack.c.l.b16 %v1013
        %v1079 = vunpack.c.h.b16 %v1013
        %v1080 = vunpack.c.l.b16 %v1014
        %v1081 = vunpack.c.h.b16 %v1014
        %v1082 = vunpack.c.l.b16 %v1015
        %v1083 = vunpack.c.h.b16 %v1015
        %v1084 = vunpack.c.l.b16 %v1016
        %v1085 = vunpack.c.l.b16 %v1017
        %v1086 = vunpack.c.h.b16 %v1017
        %v1087 = vunpack.c.l.b16 %v1018
        %v1088 = vunpack.c.h.b16 %v1018
        %v1089 = vunpack.c.l.b16 %v1019
        %v1090 = vunpack.c.h.b16 %v1019
        %v1091 = vunpack.c.l.b16 %v1020
        %v1092 = vunpack.c.h.b16 %v1020
        %v1093 = vunpack.c.l.b16 %v1021
        %v1094 = vunpack.c.l.b16 %v1022
        %v1095 = vunpack.c.h.b16 %v1022
        %v1096 = vunpack.c.l.b16 %v1023
        %v1097 = vunpack.c.h.b16 %v1023
        %v1098 = vunpack.c.l.b16 %v1024
        %v1099 = vunpack.c.h.b16 %v1024
        %v1100 = vunpack.c.l.b16 %v1025
        %v1101 = vunpack.c.h.b16 %v1025
        %v1102 = vunpack.c.l.b16 %v1026
        %v1103 = vpack.c.b16 %v1067, %v1058
        %v1104 = vpack.c.b16 %v1068, %v1059
        %v1105 = vpack.c.b16 %v1069, %v1060
        %v1106 = vpack.c.b16 %v1070, %v1061
        %v1107 = vpack.c.b16 %v1071, %v1062
        %v1108 = vpack.c.b16 %v1072, %v1063
        %v1109 = vpack.c.b16 %v1073, %v1064
        %v1110 = vpack.c.b16 %v1074, %v1065
        %v1111 = vpack.c.b16 %v1075, %v1066
        %v1112 = vpack.c.b16 %v1085, %v1076
        %v1113 = vpack.c.b16 %v1086, %v1077
        %v1114 = vpack.c.b16 %v1087, %v1078
        %v1115 = vpack.c.b16 %v1088, %v1079
        %v1116 = vpack.c.b16 %v1089, %v1080
        %v1117 = vpack.c.b16 %v1090, %v1081
        %v1118 = vpack.c.b16 %v1091, %v1082
        %v1119 = vpack.c.b16 %v1092, %v1083
        %v1120 = vpack.c.b16 %v1093, %v1084
        %v1121 = vpack.c.b16 %v1094, %v1094
        %v1122 = vpack.c.b16 %v1095, %v1095
        %v1123 = vpack.c.b16 %v1096, %v1096
        %v1124 = vpack.c.b16 %v1097, %v1097
        %v1125 = vpack.c.b16 %v1098, %v1098
        %v1126 = vpack.c.b16 %v1099, %v1099
        %v1127 = vpack.c.b16 %v1100, %v1100
        %v1128 = vpack.c.b16 %v1101, %v1101
        %v1129 = vpack.c.b16 %v1102, %v1102
        %vm1148 = vcmask 293888
        %v1150 = vsel %vm1148, %v1001, 0
        %v1153 = vsel %vm231, %v1121, 0
        %v1156 = vsel %vm231, %v1122, 0
        %v1159 = vsel %vm231, %v1123, 0
        %v1162 = vsel %vm231, %v1124, 0
        %v1165 = vsel %vm231, %v1125, 0
        %v1168 = vsel %vm231, %v1126, 0
        %v1171 = vsel %vm231, %v1127, 0
        %v1174 = vsel %vm231, %v1128, 0
        %v1177 = vsel %vm231, %v1129, 0
        %1179 = vmatprep.subr.bf16.mxu0 0
        %1180 = vmatpush1.bf16.msra.mxu0 0
        %1181 = vmatprep.subr.bf16.mxu0 0
        %1182 = vmatpush1.bf16.msra.mxu0 0
        %1183 = vmatprep.subr.bf16.mxu0 0
        %1184 = vmatpush1.bf16.msra.mxu0 0
        %1185 = vmatprep.subr.bf16.mxu0 0
        %1186 = vmatpush1.bf16.msra.mxu0 0
        %1187 = vmatprep.subr.bf16.mxu0 0
        %1188 = vmatpush1.bf16.msra.mxu0 0
        %1189 = vmatprep.subr.bf16.mxu0 %v1156
        %1190 = vmatpush1.bf16.msra.mxu0 %v1153
        %1191 = vmatprep.subr.bf16.mxu0 %v1113
        %1192 = vmatpush1.bf16.msra.mxu0 %v1112
        %1193 = vmatprep.subr.bf16.mxu0 %v1104
        %1194 = vmatpush1.bf16.msra.mxu0 %v1103
        %1195 = vmatprep.subr.bf16.mxu0 0
        %1196 = vmatpush2.bf16.msra.mxu0 0
        %1197 = vmatprep.subr.bf16.mxu0 0
        %1198 = vmatpush2.bf16.msra.mxu0 0
        %1199 = vmatprep.subr.bf16.mxu0 0
        %1200 = vmatpush2.bf16.msra.mxu0 0
        %1201 = vmatprep.subr.bf16.mxu0 0
        %1202 = vmatpush2.bf16.msra.mxu0 0
        %1203 = vmatprep.subr.bf16.mxu0 0
        %1204 = vmatpush2.bf16.msra.mxu0 0
        %1205 = vmatprep.subr.bf16.mxu0 0
        %1206 = vmatpush2.bf16.msra.mxu0 0
        %1207 = vmatprep.subr.bf16.mxu0 0
        %1208 = vmatpush2.bf16.msra.mxu0 0
        %1209 = vmatprep.subr.bf16.mxu0 0
        %1210 = vmatpush2.bf16.msra.mxu0 0
        %1211 = vmatprep.mubr.bf16.mxu0 0
        %1212 = vmatmul.mubr.bf16.gmra.mxu0 %v1150
        %v1213 = vpop.f32.mrf.mxu0
        %v1214 = vadd.f32 %v1031, %v1213
        %v1215 = vpop.f32.mrf.mxu0
        %v1216 = vadd.f32 %v1031, %v1215
        %v1217 = vpop.f32.mrf.mxu0
        %v1218 = vpop.f32.mrf.mxu0
        %1219 = vdwg.mxu0
        %1220 = vmatprep.subr.bf16.mxu0 0
        %1221 = vmatpush1.bf16.msra.mxu0 0
        %1222 = vmatprep.subr.bf16.mxu0 0
        %1223 = vmatpush1.bf16.msra.mxu0 0
        %1224 = vmatprep.subr.bf16.mxu0 0
        %1225 = vmatpush1.bf16.msra.mxu0 0
        %1226 = vmatprep.subr.bf16.mxu0 0
        %1227 = vmatpush1.bf16.msra.mxu0 0
        %1228 = vmatprep.subr.bf16.mxu0 0
        %1229 = vmatpush1.bf16.msra.mxu0 0
        %1230 = vmatprep.subr.bf16.mxu0 %v1162
        %1231 = vmatpush1.bf16.msra.mxu0 %v1159
        %1232 = vmatprep.subr.bf16.mxu0 %v1115
        %1233 = vmatpush1.bf16.msra.mxu0 %v1114
        %1234 = vmatprep.subr.bf16.mxu0 %v1106
        %1235 = vmatpush1.bf16.msra.mxu0 %v1105
        %1236 = vmatprep.subr.bf16.mxu0 0
        %1237 = vmatpush2.bf16.msra.mxu0 0
        %1238 = vmatprep.subr.bf16.mxu0 0
        %1239 = vmatpush2.bf16.msra.mxu0 0
        %1240 = vmatprep.subr.bf16.mxu0 0
        %1241 = vmatpush2.bf16.msra.mxu0 0
        %1242 = vmatprep.subr.bf16.mxu0 0
        %1243 = vmatpush2.bf16.msra.mxu0 0
        %1244 = vmatprep.subr.bf16.mxu0 0
        %1245 = vmatpush2.bf16.msra.mxu0 0
        %1246 = vmatprep.subr.bf16.mxu0 0
        %1247 = vmatpush2.bf16.msra.mxu0 0
        %1248 = vmatprep.subr.bf16.mxu0 0
        %1249 = vmatpush2.bf16.msra.mxu0 0
        %1250 = vmatprep.subr.bf16.mxu0 0
        %1251 = vmatpush2.bf16.msra.mxu0 0
        %1252 = vmatprep.mubr.bf16.mxu0 0
        %1253 = vmatmul.mubr.bf16.gmra.mxu0 %v1150
        %v1254 = vpop.f32.mrf.mxu0
        %v1255 = vadd.f32 %v1031, %v1254
        %v1256 = vpop.f32.mrf.mxu0
        %v1257 = vadd.f32 %v1031, %v1256
        %v1258 = vpop.f32.mrf.mxu0
        %v1259 = vpop.f32.mrf.mxu0
        %1260 = vdwg.mxu0
        %1261 = vmatprep.subr.bf16.mxu0 0
        %1262 = vmatpush1.bf16.msra.mxu0 0
        %1263 = vmatprep.subr.bf16.mxu0 0
        %1264 = vmatpush1.bf16.msra.mxu0 0
        %1265 = vmatprep.subr.bf16.mxu0 0
        %1266 = vmatpush1.bf16.msra.mxu0 0
        %1267 = vmatprep.subr.bf16.mxu0 0
        %1268 = vmatpush1.bf16.msra.mxu0 0
        %1269 = vmatprep.subr.bf16.mxu0 0
        %1270 = vmatpush1.bf16.msra.mxu0 0
        %1271 = vmatprep.subr.bf16.mxu0 %v1168
        %1272 = vmatpush1.bf16.msra.mxu0 %v1165
        %1273 = vmatprep.subr.bf16.mxu0 %v1117
        %1274 = vmatpush1.bf16.msra.mxu0 %v1116
        %1275 = vmatprep.subr.bf16.mxu0 %v1108
        %1276 = vmatpush1.bf16.msra.mxu0 %v1107
        %1277 = vmatprep.subr.bf16.mxu0 0
        %1278 = vmatpush2.bf16.msra.mxu0 0
        %1279 = vmatprep.subr.bf16.mxu0 0
        %1280 = vmatpush2.bf16.msra.mxu0 0
        %1281 = vmatprep.subr.bf16.mxu0 0
        %1282 = vmatpush2.bf16.msra.mxu0 0
        %1283 = vmatprep.subr.bf16.mxu0 0
        %1284 = vmatpush2.bf16.msra.mxu0 0
        %1285 = vmatprep.subr.bf16.mxu0 0
        %1286 = vmatpush2.bf16.msra.mxu0 0
        %1287 = vmatprep.subr.bf16.mxu0 0
        %1288 = vmatpush2.bf16.msra.mxu0 0
        %1289 = vmatprep.subr.bf16.mxu0 0
        %1290 = vmatpush2.bf16.msra.mxu0 0
        %1291 = vmatprep.subr.bf16.mxu0 0
        %1292 = vmatpush2.bf16.msra.mxu0 0
        %1293 = vmatprep.mubr.bf16.mxu0 0
        %1294 = vmatmul.mubr.bf16.gmra.mxu0 %v1150
        %v1295 = vpop.f32.mrf.mxu0
        %v1296 = vadd.f32 %v1031, %v1295
        %v1297 = vpop.f32.mrf.mxu0
        %v1298 = vadd.f32 %v1031, %v1297
        %v1299 = vpop.f32.mrf.mxu0
        %v1300 = vpop.f32.mrf.mxu0
        %1301 = vdwg.mxu0
        %1302 = vmatprep.subr.bf16.mxu0 0
        %1303 = vmatpush1.bf16.msra.mxu0 0
        %1304 = vmatprep.subr.bf16.mxu0 0
        %1305 = vmatpush1.bf16.msra.mxu0 0
        %1306 = vmatprep.subr.bf16.mxu0 0
        %1307 = vmatpush1.bf16.msra.mxu0 0
        %1308 = vmatprep.subr.bf16.mxu0 0
        %1309 = vmatpush1.bf16.msra.mxu0 0
        %1310 = vmatprep.subr.bf16.mxu0 0
        %1311 = vmatpush1.bf16.msra.mxu0 0
        %1312 = vmatprep.subr.bf16.mxu0 %v1174
        %1313 = vmatpush1.bf16.msra.mxu0 %v1171
        %1314 = vmatprep.subr.bf16.mxu0 %v1119
        %1315 = vmatpush1.bf16.msra.mxu0 %v1118
        %1316 = vmatprep.subr.bf16.mxu0 %v1110
        %1317 = vmatpush1.bf16.msra.mxu0 %v1109
        %1318 = vmatprep.subr.bf16.mxu0 0
        %1319 = vmatpush2.bf16.msra.mxu0 0
        %1320 = vmatprep.subr.bf16.mxu0 0
        %1321 = vmatpush2.bf16.msra.mxu0 0
        %1322 = vmatprep.subr.bf16.mxu0 0
        %1323 = vmatpush2.bf16.msra.mxu0 0
        %1324 = vmatprep.subr.bf16.mxu0 0
        %1325 = vmatpush2.bf16.msra.mxu0 0
        %1326 = vmatprep.subr.bf16.mxu0 0
        %1327 = vmatpush2.bf16.msra.mxu0 0
        %1328 = vmatprep.subr.bf16.mxu0 0
        %1329 = vmatpush2.bf16.msra.mxu0 0
        %1330 = vmatprep.subr.bf16.mxu0 0
        %1331 = vmatpush2.bf16.msra.mxu0 0
        %1332 = vmatprep.subr.bf16.mxu0 0
        %1333 = vmatpush2.bf16.msra.mxu0 0
        %1334 = vmatprep.mubr.bf16.mxu0 0
        %1335 = vmatmul.mubr.bf16.gmra.mxu0 %v1150
        %v1336 = vpop.f32.mrf.mxu0
        %v1337 = vadd.f32 %v1031, %v1336
        %v1338 = vpop.f32.mrf.mxu0
        %v1339 = vadd.f32 %v1031, %v1338
        %v1340 = vpop.f32.mrf.mxu0
        %v1341 = vpop.f32.mrf.mxu0
        %1342 = vdwg.mxu0
        %1343 = vmatprep.subr.bf16.mxu0 0
        %1344 = vmatpush1.bf16.msra.mxu0 0
        %1345 = vmatprep.subr.bf16.mxu0 0
        %1346 = vmatpush1.bf16.msra.mxu0 0
        %1347 = vmatprep.subr.bf16.mxu0 0
        %1348 = vmatpush1.bf16.msra.mxu0 0
        %1349 = vmatprep.subr.bf16.mxu0 0
        %1350 = vmatpush1.bf16.msra.mxu0 0
        %1351 = vmatprep.subr.bf16.mxu0 0
        %1352 = vmatpush1.bf16.msra.mxu0 0
        %1353 = vmatprep.subr.bf16.mxu0 0
        %1354 = vmatpush1.bf16.msra.mxu0 %v1177
        %1355 = vmatprep.subr.bf16.mxu0 0
        %1356 = vmatpush1.bf16.msra.mxu0 %v1120
        %1357 = vmatprep.subr.bf16.mxu0 0
        %1358 = vmatpush1.bf16.msra.mxu0 %v1111
        %1359 = vmatprep.subr.bf16.mxu0 0
        %1360 = vmatpush2.bf16.msra.mxu0 0
        %1361 = vmatprep.subr.bf16.mxu0 0
        %1362 = vmatpush2.bf16.msra.mxu0 0
        %1363 = vmatprep.subr.bf16.mxu0 0
        %1364 = vmatpush2.bf16.msra.mxu0 0
        %1365 = vmatprep.subr.bf16.mxu0 0
        %1366 = vmatpush2.bf16.msra.mxu0 0
        %1367 = vmatprep.subr.bf16.mxu0 0
        %1368 = vmatpush2.bf16.msra.mxu0 0
        %1369 = vmatprep.subr.bf16.mxu0 0
        %1370 = vmatpush2.bf16.msra.mxu0 0
        %1371 = vmatprep.subr.bf16.mxu0 0
        %1372 = vmatpush2.bf16.msra.mxu0 0
        %1373 = vmatprep.subr.bf16.mxu0 0
        %1374 = vmatpush2.bf16.msra.mxu0 0
        %1375 = vmatprep.mubr.bf16.mxu0 0
        %1376 = vmatmul.mubr.bf16.gmra.mxu0 %v1150
        %v1377 = vpop.f32.mrf.mxu0
        %v1378 = vadd.f32 %v1031, %v1377
        %v1379 = vpop.f32.mrf.mxu0
        %v1380 = vpop.f32.mrf.mxu0
        %v1381 = vpop.f32.mrf.mxu0
        %1382 = vdwg.mxu0
        %v1383 = vmax.f32 %v1214, 0.0
        %v1384 = vmax.f32 %v1216, 0.0
        %v1385 = vmax.f32 %v1255, 0.0
        %v1386 = vmax.f32 %v1257, 0.0
        %v1387 = vmax.f32 %v1296, 0.0
        %v1388 = vmax.f32 %v1298, 0.0
        %v1389 = vmax.f32 %v1337, 0.0
        %v1390 = vmax.f32 %v1339, 0.0
        %v1391 = vmax.f32 %v1378, 0.0
        %v1392 = vpack.c.bf16 %v1383, %v1383
        %v1393 = vpack.c.bf16 %v1384, %v1384
        %v1394 = vpack.c.bf16 %v1385, %v1385
        %v1395 = vpack.c.bf16 %v1386, %v1386
        %v1396 = vpack.c.bf16 %v1387, %v1387
        %v1397 = vpack.c.bf16 %v1388, %v1388
        %v1398 = vpack.c.bf16 %v1389, %v1389
        %v1399 = vpack.c.bf16 %v1390, %v1390
        %v1400 = vpack.c.bf16 %v1391, %v1391
        %v1410 = vunpack.c.l.b16 %v1392
        %v1411 = vunpack.c.l.b16 %v1393
        %v1412 = vunpack.c.l.b16 %v1394
        %v1413 = vunpack.c.l.b16 %v1395
        %v1414 = vunpack.c.l.b16 %v1396
        %v1415 = vunpack.c.l.b16 %v1397
        %v1416 = vunpack.c.l.b16 %v1398
        %v1417 = vunpack.c.l.b16 %v1399
        %v1418 = vunpack.c.l.b16 %v1400
        %v1419 = vpack.c.b16 %v1411, %v1410
        %v1420 = vpack.c.b16 %v1413, %v1412
        %v1421 = vpack.c.b16 %v1415, %v1414
        %v1422 = vpack.c.b16 %v1417, %v1416
        %v1423 = vpack.c.b16 %v1418, %v1418
        %1424 = vrot.lane.b32.xlu0 %v1419, 4
        %v1425 = vpop.permute.xlu0 %1424
        %1426 = vrot.lane.b32.xlu0 %v1420, 4
        %v1427 = vpop.permute.xlu0 %1426
        %1428 = vrot.lane.b32.xlu0 %v1421, 4
        %v1429 = vpop.permute.xlu0 %1428
        %1430 = vrot.lane.b32.xlu0 %v1422, 4
        %v1431 = vpop.permute.xlu0 %1430
        %1432 = vrot.lane.b32.xlu0 %v1423, 4
        %v1433 = vpop.permute.xlu0 %1432
        %v1434 = vrot.slane %v1425, 4
        %v1435 = vrot.slane %v1427, 4
        %v1436 = vrot.slane %v1429, 4
        %v1437 = vrot.slane %v1431, 4
        %vm1438 = vcmask 31744
        %v1439 = vsel %vm1438, %v1434, %v1425
        %v1440 = vsel %vm439, %v1434, %v1435
        %v1441 = vsel %vm1438, %v1440, %v1427
        %v1442 = vsel %vm439, %v1435, %v1436
        %v1443 = vsel %vm1438, %v1442, %v1429
        %v1444 = vsel %vm439, %v1436, %v1437
        %v1445 = vsel %vm1438, %v1444, %v1431
        %v1446 = vsel %vm1438, %v1437, %v1433
        %vm1452 = vcmask 1043488
        %vm1453 = vcmask 1047556
        %vm1454 = vmor %vm1453, %vm1452
        %1455 = vst.msk [vmem:[#allocation4] sm:$0xff] %vm1454, %v1439
        %1456 = vst [vmem:[#allocation4 + $0x8] sm:$0xff] %v1441
        %1457 = vst [vmem:[#allocation4 + $0x10] sm:$0xff] %v1443
        %1458 = vst [vmem:[#allocation4 + $0x18] sm:$0xff] %v1445
        %vm1459 = vcmask 486400
        %1460 = vst.msk [vmem:[#allocation4 + $0x20] sm:$0xf] %vm1459, %v1446
        %v1461 = vpack.c.b16 %v1410, %v1410
        %1462 = vrot.lane.b32.xlu0 %v1461, 124
        %v1463 = vpop.permute.xlu0 %1462
        %vm1465 = vcmask 3072
        %1466 = vst.msk [vmem:[#allocation4] sm:$0xf] %vm1465, %v1463
        %1467 = vrot.lane.b32.xlu0 %v1461, 6
        %v1468 = vpop.permute.xlu0 %1467
        %vm1470 = vcmask 35872
        %1471 = vst.msk [vmem:[#allocation4 + $0x4] sm:$0xf] %vm1470, %v1468
        %1472 = vrot.lane.b32.xlu0 %v1461, 126
        %v1473 = vpop.permute.xlu0 %1472
        %vm1475 = vcmask 11272
        %1476 = vst.msk [vmem:[#allocation4] sm:$0xf] %vm1475, %v1473
        %1477 = vrot.lane.b32.xlu0 %v1461, 8
        %v1478 = vpop.permute.xlu0 %1477
        %vm1480 = vcmask 44072
        %1481 = vst.msk [vmem:[#allocation4 + $0x4] sm:$0xf] %vm1480, %v1478
        %vm1482 = vcmask 19472
        %1483 = vst.msk [vmem:[#allocation4] sm:$0xf] %vm1482, %v1392
        %1484 = vrot.lane.b32.xlu0 %v1461, 10
        %v1485 = vpop.permute.xlu0 %1484
        %vm1487 = vcmask 52272
        %1488 = vst.msk [vmem:[#allocation4 + $0x4] sm:$0xf] %vm1487, %v1485
        %1489 = vrot.lane.b32.xlu0 %v1461, 2
        %v1490 = vpop.permute.xlu0 %1489
        %vm1492 = vcmask 27672
        %1493 = vst.msk [vmem:[#allocation4] sm:$0xf] %vm1492, %v1490
        %1494 = vrot.lane.b32.xlu0 %v1461, 12
        %v1495 = vpop.permute.xlu0 %1494
        %vm1497 = vcmask 60472
        %1498 = vst.msk [vmem:[#allocation4 + $0x4] sm:$0xf] %vm1497, %v1495
        %v1499 = vpack.c.b16 %v1411, %v1411
        %1500 = vrot.lane.b32.xlu0 %v1499, 124
        %v1501 = vpop.permute.xlu0 %1500
        %vm1503 = vcmask 68672
        %1504 = vst.msk [vmem:[#allocation4 + $0x4] sm:$0xf] %vm1503, %v1501
        %v1505 = vpack.c.b16 %v1412, %v1412
        %1506 = vrot.lane.b32.xlu0 %v1505, 6
        %v1507 = vpop.permute.xlu0 %1506
        %vm1509 = vcmask 101472
        %1510 = vst.msk [vmem:[#allocation4 + $0x8] sm:$0xf] %vm1509, %v1507
        %1511 = vrot.lane.b32.xlu0 %v1499, 126
        %v1512 = vpop.permute.xlu0 %1511
        %vm1514 = vcmask 76872
        %1515 = vst.msk [vmem:[#allocation4 + $0x4] sm:$0xf] %vm1514, %v1512
        %1516 = vrot.lane.b32.xlu0 %v1505, 8
        %v1517 = vpop.permute.xlu0 %1516
        %vm1519 = vcmask 109672
        %1520 = vst.msk [vmem:[#allocation4 + $0x8] sm:$0xf] %vm1519, %v1517
        %vm1521 = vcmask 85072
        %1522 = vst.msk [vmem:[#allocation4 + $0x4] sm:$0xf] %vm1521, %v1393
        %1523 = vrot.lane.b32.xlu0 %v1505, 10
        %v1524 = vpop.permute.xlu0 %1523
        %vm1526 = vcmask 117872
        %1527 = vst.msk [vmem:[#allocation4 + $0x8] sm:$0xf] %vm1526, %v1524
        %1528 = vrot.lane.b32.xlu0 %v1499, 2
        %v1529 = vpop.permute.xlu0 %1528
        %vm1531 = vcmask 93272
        %1532 = vst.msk [vmem:[#allocation4 + $0x4] sm:$0xf] %vm1531, %v1529
        %1533 = vrot.lane.b32.xlu0 %v1505, 12
        %v1534 = vpop.permute.xlu0 %1533
        %vm1536 = vcmask 126072
        %1537 = vst.msk [vmem:[#allocation4 + $0x8] sm:$0xf] %vm1536, %v1534
        %1538 = vrot.lane.b32.xlu0 %v1505, 124
        %v1539 = vpop.permute.xlu0 %1538
        %vm1541 = vcmask 134272
        %1542 = vst.msk [vmem:[#allocation4 + $0x8] sm:$0xf] %vm1541, %v1539
        %v1543 = vpack.c.b16 %v1413, %v1413
        %1544 = vrot.lane.b32.xlu0 %v1543, 6
        %v1545 = vpop.permute.xlu0 %1544
        %vm1547 = vcmask 167072
        %1548 = vst.msk [vmem:[#allocation4 + $0xc] sm:$0xf] %vm1547, %v1545
        %1549 = vrot.lane.b32.xlu0 %v1505, 126
        %v1550 = vpop.permute.xlu0 %1549
        %vm1552 = vcmask 142472
        %1553 = vst.msk [vmem:[#allocation4 + $0x8] sm:$0xf] %vm1552, %v1550
        %1554 = vrot.lane.b32.xlu0 %v1543, 8
        %v1555 = vpop.permute.xlu0 %1554
        %vm1557 = vcmask 175272
        %1558 = vst.msk [vmem:[#allocation4 + $0xc] sm:$0xf] %vm1557, %v1555
        %vm1559 = vcmask 150672
        %1560 = vst.msk [vmem:[#allocation4 + $0x8] sm:$0xf] %vm1559, %v1394
        %1561 = vrot.lane.b32.xlu0 %v1543, 10
        %v1562 = vpop.permute.xlu0 %1561
        %vm1564 = vcmask 183472
        %1565 = vst.msk [vmem:[#allocation4 + $0xc] sm:$0xf] %vm1564, %v1562
        %1566 = vrot.lane.b32.xlu0 %v1505, 2
        %v1567 = vpop.permute.xlu0 %1566
        %vm1569 = vcmask 158872
        %1570 = vst.msk [vmem:[#allocation4 + $0x8] sm:$0xf] %vm1569, %v1567
        %1571 = vrot.lane.b32.xlu0 %v1543, 12
        %v1572 = vpop.permute.xlu0 %1571
        %vm1574 = vcmask 191672
        %1575 = vst.msk [vmem:[#allocation4 + $0xc] sm:$0xf] %vm1574, %v1572
        %1576 = vrot.lane.b32.xlu0 %v1543, 124
        %v1577 = vpop.permute.xlu0 %1576
        %vm1579 = vcmask 199872
        %1580 = vst.msk [vmem:[#allocation4 + $0xc] sm:$0xf] %vm1579, %v1577
        %v1581 = vpack.c.b16 %v1414, %v1414
        %1582 = vrot.lane.b32.xlu0 %v1581, 6
        %v1583 = vpop.permute.xlu0 %1582
        %vm1585 = vcmask 232672
        %1586 = vst.msk [vmem:[#allocation4 + $0x10] sm:$0xf] %vm1585, %v1583
        %1587 = vrot.lane.b32.xlu0 %v1543, 126
        %v1588 = vpop.permute.xlu0 %1587
        %vm1590 = vcmask 208072
        %1591 = vst.msk [vmem:[#allocation4 + $0xc] sm:$0xf] %vm1590, %v1588
        %1592 = vrot.lane.b32.xlu0 %v1581, 8
        %v1593 = vpop.permute.xlu0 %1592
        %vm1595 = vcmask 240872
        %1596 = vst.msk [vmem:[#allocation4 + $0x10] sm:$0xf] %vm1595, %v1593
        %vm1597 = vcmask 216272
        %1598 = vst.msk [vmem:[#allocation4 + $0xc] sm:$0xf] %vm1597, %v1395
        %1599 = vrot.lane.b32.xlu0 %v1581, 10
        %v1600 = vpop.permute.xlu0 %1599
        %vm1602 = vcmask 249072
        %1603 = vst.msk [vmem:[#allocation4 + $0x10] sm:$0xf] %vm1602, %v1600
        %1604 = vrot.lane.b32.xlu0 %v1543, 2
        %v1605 = vpop.permute.xlu0 %1604
        %vm1607 = vcmask 224472
        %1608 = vst.msk [vmem:[#allocation4 + $0xc] sm:$0xf] %vm1607, %v1605
        %1609 = vrot.lane.b32.xlu0 %v1581, 12
        %v1610 = vpop.permute.xlu0 %1609
        %vm1612 = vcmask 257272
        %1613 = vst.msk [vmem:[#allocation4 + $0x10] sm:$0xf] %vm1612, %v1610
        %1614 = vrot.lane.b32.xlu0 %v1581, 124
        %v1615 = vpop.permute.xlu0 %1614
        %vm1617 = vcmask 265472
        %1618 = vst.msk [vmem:[#allocation4 + $0x10] sm:$0xf] %vm1617, %v1615
        %v1619 = vpack.c.b16 %v1415, %v1415
        %1620 = vrot.lane.b32.xlu0 %v1619, 6
        %v1621 = vpop.permute.xlu0 %1620
        %vm1623 = vcmask 298272
        %1624 = vst.msk [vmem:[#allocation4 + $0x14] sm:$0xf] %vm1623, %v1621
        %1625 = vrot.lane.b32.xlu0 %v1581, 126
        %v1626 = vpop.permute.xlu0 %1625
        %vm1628 = vcmask 273672
        %1629 = vst.msk [vmem:[#allocation4 + $0x10] sm:$0xf] %vm1628, %v1626
        %1630 = vrot.lane.b32.xlu0 %v1619, 8
        %v1631 = vpop.permute.xlu0 %1630
        %vm1633 = vcmask 306472
        %1634 = vst.msk [vmem:[#allocation4 + $0x14] sm:$0xf] %vm1633, %v1631
        %vm1635 = vcmask 281872
        %1636 = vst.msk [vmem:[#allocation4 + $0x10] sm:$0xf] %vm1635, %v1396
        %1637 = vrot.lane.b32.xlu0 %v1619, 10
        %v1638 = vpop.permute.xlu0 %1637
        %vm1640 = vcmask 314672
        %1641 = vst.msk [vmem:[#allocation4 + $0x14] sm:$0xf] %vm1640, %v1638
        %1642 = vrot.lane.b32.xlu0 %v1581, 2
        %v1643 = vpop.permute.xlu0 %1642
        %vm1645 = vcmask 290072
        %1646 = vst.msk [vmem:[#allocation4 + $0x10] sm:$0xf] %vm1645, %v1643
        %1647 = vrot.lane.b32.xlu0 %v1619, 12
        %v1648 = vpop.permute.xlu0 %1647
        %vm1650 = vcmask 322872
        %1651 = vst.msk [vmem:[#allocation4 + $0x14] sm:$0xf] %vm1650, %v1648
        %1652 = vrot.lane.b32.xlu0 %v1619, 124
        %v1653 = vpop.permute.xlu0 %1652
        %vm1655 = vcmask 331072
        %1656 = vst.msk [vmem:[#allocation4 + $0x14] sm:$0xf] %vm1655, %v1653
        %v1657 = vpack.c.b16 %v1416, %v1416
        %1658 = vrot.lane.b32.xlu0 %v1657, 6
        %v1659 = vpop.permute.xlu0 %1658
        %vm1661 = vcmask 363872
        %1662 = vst.msk [vmem:[#allocation4 + $0x18] sm:$0xf] %vm1661, %v1659
        %1663 = vrot.lane.b32.xlu0 %v1619, 126
        %v1664 = vpop.permute.xlu0 %1663
        %vm1666 = vcmask 339272
        %1667 = vst.msk [vmem:[#allocation4 + $0x14] sm:$0xf] %vm1666, %v1664
        %1668 = vrot.lane.b32.xlu0 %v1657, 8
        %v1669 = vpop.permute.xlu0 %1668
        %vm1671 = vcmask 372072
        %1672 = vst.msk [vmem:[#allocation4 + $0x18] sm:$0xf] %vm1671, %v1669
        %vm1673 = vcmask 347472
        %1674 = vst.msk [vmem:[#allocation4 + $0x14] sm:$0xf] %vm1673, %v1397
        %1675 = vrot.lane.b32.xlu0 %v1657, 10
        %v1676 = vpop.permute.xlu0 %1675
        %vm1678 = vcmask 380272
        %1679 = vst.msk [vmem:[#allocation4 + $0x18] sm:$0xf] %vm1678, %v1676
        %1680 = vrot.lane.b32.xlu0 %v1619, 2
        %v1681 = vpop.permute.xlu0 %1680
        %vm1683 = vcmask 355672
        %1684 = vst.msk [vmem:[#allocation4 + $0x14] sm:$0xf] %vm1683, %v1681
        %1685 = vrot.lane.b32.xlu0 %v1657, 12
        %v1686 = vpop.permute.xlu0 %1685
        %vm1688 = vcmask 388472
        %1689 = vst.msk [vmem:[#allocation4 + $0x18] sm:$0xf] %vm1688, %v1686
        %1690 = vrot.lane.b32.xlu0 %v1657, 124
        %v1691 = vpop.permute.xlu0 %1690
        %vm1693 = vcmask 396672
        %1694 = vst.msk [vmem:[#allocation4 + $0x18] sm:$0xf] %vm1693, %v1691
        %v1695 = vpack.c.b16 %v1417, %v1417
        %1696 = vrot.lane.b32.xlu0 %v1695, 6
        %v1697 = vpop.permute.xlu0 %1696
        %vm1699 = vcmask 429472
        %1700 = vst.msk [vmem:[#allocation4 + $0x1c] sm:$0xf] %vm1699, %v1697
        %1701 = vrot.lane.b32.xlu0 %v1657, 126
        %v1702 = vpop.permute.xlu0 %1701
        %vm1704 = vcmask 404872
        %1705 = vst.msk [vmem:[#allocation4 + $0x18] sm:$0xf] %vm1704, %v1702
        %1706 = vrot.lane.b32.xlu0 %v1695, 8
        %v1707 = vpop.permute.xlu0 %1706
        %vm1709 = vcmask 437672
        %1710 = vst.msk [vmem:[#allocation4 + $0x1c] sm:$0xf] %vm1709, %v1707
        %vm1711 = vcmask 413072
        %1712 = vst.msk [vmem:[#allocation4 + $0x18] sm:$0xf] %vm1711, %v1398
        %1713 = vrot.lane.b32.xlu0 %v1695, 10
        %v1714 = vpop.permute.xlu0 %1713
        %vm1716 = vcmask 445872
        %1717 = vst.msk [vmem:[#allocation4 + $0x1c] sm:$0xf] %vm1716, %v1714
        %1718 = vrot.lane.b32.xlu0 %v1657, 2
        %v1719 = vpop.permute.xlu0 %1718
        %vm1721 = vcmask 421272
        %1722 = vst.msk [vmem:[#allocation4 + $0x18] sm:$0xf] %vm1721, %v1719
        %1723 = vrot.lane.b32.xlu0 %v1695, 12
        %v1724 = vpop.permute.xlu0 %1723
        %vm1726 = vcmask 454072
        %1727 = vst.msk [vmem:[#allocation4 + $0x1c] sm:$0xf] %vm1726, %v1724
        %1728 = vrot.lane.b32.xlu0 %v1695, 124
        %v1729 = vpop.permute.xlu0 %1728
        %vm1731 = vcmask 462272
        %1732 = vst.msk [vmem:[#allocation4 + $0x1c] sm:$0xf] %vm1731, %v1729
        %1733 = vrot.lane.b32.xlu0 %v1423, 6
        %v1734 = vpop.permute.xlu0 %1733
        %vm1736 = vcmask 495072
        %1737 = vst.msk [vmem:[#allocation4 + $0x20] sm:$0xf] %vm1736, %v1734
        %1738 = vrot.lane.b32.xlu0 %v1695, 126
        %v1739 = vpop.permute.xlu0 %1738
        %vm1741 = vcmask 470472
        %1742 = vst.msk [vmem:[#allocation4 + $0x1c] sm:$0xf] %vm1741, %v1739
        %1743 = vrot.lane.b32.xlu0 %v1423, 8
        %v1744 = vpop.permute.xlu0 %1743
        %vm1746 = vcmask 503272
        %1747 = vst.msk [vmem:[#allocation4 + $0x20] sm:$0xf] %vm1746, %v1744
        %vm1748 = vcmask 478672
        %1749 = vst.msk [vmem:[#allocation4 + $0x1c] sm:$0xf] %vm1748, %v1399
        %1750 = vrot.lane.b32.xlu0 %v1423, 10
        %v1751 = vpop.permute.xlu0 %1750
        %vm1753 = vcmask 511472
        %1754 = vst.msk [vmem:[#allocation4 + $0x20] sm:$0xf] %vm1753, %v1751
        %1755 = vrot.lane.b32.xlu0 %v1695, 2
        %v1756 = vpop.permute.xlu0 %1755
        %vm1758 = vcmask 486872
        %1759 = vst.msk [vmem:[#allocation4 + $0x1c] sm:$0xf] %vm1758, %v1756
        %1760 = vrot.lane.b32.xlu0 %v1423, 12
        %v1761 = vpop.permute.xlu0 %1760
        %vm1763 = vcmask 519672
        %1764 = vst.msk [vmem:[#allocation4 + $0x20] sm:$0xf] %vm1763, %v1761
        %v1765 = vld [vmem:[#allocation4] sm:$0xff]
        %v1766 = vld [vmem:[#allocation4 + $0x8] sm:$0xff]
        %v1767 = vld [vmem:[#allocation4 + $0x10] sm:$0xff]
        %v1768 = vld [vmem:[#allocation4 + $0x18] sm:$0xff]
        %v1769 = vld [vmem:[#allocation4 + $0x20] sm:$0xf]
        %1770 = vst [vmem:[#allocation5] sm:$0xff] %v1765
        %1771 = vst [vmem:[#allocation5 + $0x8] sm:$0xff] %v1766
        %1772 = vst [vmem:[#allocation5 + $0x10] sm:$0xff] %v1767
        %1773 = vst [vmem:[#allocation5 + $0x18] sm:$0xff] %v1768
        %vm1774 = vcmask 453632
        %1775 = vst.msk [vmem:[#allocation5 + $0x20] sm:$0xf] %vm1774, %v1769
        %v1776 = vld [vmem:[#allocation4] sm:$0xff]
        %v1777 = vld [vmem:[#allocation4 + $0x8] sm:$0xff]
        %v1778 = vld [vmem:[#allocation4 + $0x10] sm:$0xff]
        %v1779 = vld [vmem:[#allocation4 + $0x18] sm:$0xff]
        %v1780 = vld [vmem:[#allocation4 + $0x20] sm:$0xf]
        %1786 = vrot.lane.b32.xlu0 %v1776, 127
        %v1787 = vpop.permute.xlu0 %1786
        %1788 = vrot.lane.b32.xlu0 %v1777, 127
        %v1789 = vpop.permute.xlu0 %1788
        %1790 = vrot.lane.b32.xlu0 %v1778, 127
        %v1791 = vpop.permute.xlu0 %1790
        %1792 = vrot.lane.b32.xlu0 %v1779, 127
        %v1793 = vpop.permute.xlu0 %1792
        %1794 = vrot.lane.b32.xlu0 %v1780, 127
        %v1795 = vpop.permute.xlu0 %1794
        %v1796 = vrot.slane %v1787, 4
        %v1797 = vrot.slane %v1789, 4
        %v1798 = vrot.slane %v1791, 4
        %v1799 = vrot.slane %v1793, 4
        %v1800 = vrot.slane %v1795, 4
        %v1801 = vsel %vm439, %v1796, %v1797
        %v1802 = vsel %vm441, %v1787, %v1801
        %v1803 = vsel %vm439, %v1797, %v1798
        %v1804 = vsel %vm441, %v1789, %v1803
        %v1805 = vsel %vm439, %v1798, %v1799
        %v1806 = vsel %vm441, %v1791, %v1805
        %v1807 = vsel %vm439, %v1799, %v1800
        %v1808 = vsel %vm441, %v1793, %v1807
        %1814 = vst [vmem:[#allocation5 + $0x24] sm:$0xff] %v1802
        %1815 = vst [vmem:[#allocation5 + $0x2c] sm:$0xff] %v1804
        %1816 = vst [vmem:[#allocation5 + $0x34] sm:$0xff] %v1806
        %1817 = vst [vmem:[#allocation5 + $0x3c] sm:$0xff] %v1808
        %1818 = vst.msk [vmem:[#allocation5 + $0x44] sm:$0xf] %vm1774, %v1795
        %v1819 = vld [vmem:[#allocation4] sm:$0xff]
        %v1820 = vld [vmem:[#allocation4 + $0x8] sm:$0xff]
        %v1821 = vld [vmem:[#allocation4 + $0x10] sm:$0xff]
        %v1822 = vld [vmem:[#allocation4 + $0x18] sm:$0xff]
        %v1823 = vld [vmem:[#allocation4 + $0x20] sm:$0xf]
        %1829 = vrot.lane.b32.xlu0 %v1819, 126
        %v1830 = vpop.permute.xlu0 %1829
        %1831 = vrot.lane.b32.xlu0 %v1820, 126
        %v1832 = vpop.permute.xlu0 %1831
        %1833 = vrot.lane.b32.xlu0 %v1821, 126
        %v1834 = vpop.permute.xlu0 %1833
        %1835 = vrot.lane.b32.xlu0 %v1822, 126
        %v1836 = vpop.permute.xlu0 %1835
        %1837 = vrot.lane.b32.xlu0 %v1823, 126
        %v1838 = vpop.permute.xlu0 %1837
        %v1839 = vrot.slane %v1830, 4
        %v1840 = vrot.slane %v1832, 4
        %v1841 = vrot.slane %v1834, 4
        %v1842 = vrot.slane %v1836, 4
        %v1843 = vrot.slane %v1838, 4
        %v1844 = vsel %vm439, %v1839, %v1840
        %v1845 = vsel %vm518, %v1830, %v1844
        %v1846 = vsel %vm439, %v1840, %v1841
        %v1847 = vsel %vm518, %v1832, %v1846
        %v1848 = vsel %vm439, %v1841, %v1842
        %v1849 = vsel %vm518, %v1834, %v1848
        %v1850 = vsel %vm439, %v1842, %v1843
        %v1851 = vsel %vm518, %v1836, %v1850
        %1857 = vst [vmem:[#allocation5 + $0x48] sm:$0xff] %v1845
        %1858 = vst [vmem:[#allocation5 + $0x50] sm:$0xff] %v1847
        %1859 = vst [vmem:[#allocation5 + $0x58] sm:$0xff] %v1849
        %1860 = vst [vmem:[#allocation5 + $0x60] sm:$0xff] %v1851
        %1861 = vst.msk [vmem:[#allocation5 + $0x68] sm:$0xf] %vm1774, %v1838
        %v1862 = vld [vmem:[#allocation4] sm:$0xff]
        %v1863 = vld [vmem:[#allocation4 + $0x8] sm:$0xff]
        %v1864 = vld [vmem:[#allocation4 + $0x10] sm:$0xff]
        %v1865 = vld [vmem:[#allocation4 + $0x18] sm:$0xff]
        %v1866 = vld [vmem:[#allocation4 + $0x20] sm:$0xf]
        %1872 = vrot.lane.b32.xlu0 %v1862, 125
        %v1873 = vpop.permute.xlu0 %1872
        %1874 = vrot.lane.b32.xlu0 %v1863, 125
        %v1875 = vpop.permute.xlu0 %1874
        %1876 = vrot.lane.b32.xlu0 %v1864, 125
        %v1877 = vpop.permute.xlu0 %1876
        %1878 = vrot.lane.b32.xlu0 %v1865, 125
        %v1879 = vpop.permute.xlu0 %1878
        %1880 = vrot.lane.b32.xlu0 %v1866, 125
        %v1881 = vpop.permute.xlu0 %1880
        %v1882 = vrot.slane %v1873, 4
        %v1883 = vrot.slane %v1875, 4
        %v1884 = vrot.slane %v1877, 4
        %v1885 = vrot.slane %v1879, 4
        %v1886 = vrot.slane %v1881, 4
        %v1887 = vsel %vm439, %v1882, %v1883
        %v1888 = vsel %vm596, %v1873, %v1887
        %v1889 = vsel %vm439, %v1883, %v1884
        %v1890 = vsel %vm596, %v1875, %v1889
        %v1891 = vsel %vm439, %v1884, %v1885
        %v1892 = vsel %vm596, %v1877, %v1891
        %v1893 = vsel %vm439, %v1885, %v1886
        %v1894 = vsel %vm596, %v1879, %v1893
        %1900 = vst [vmem:[#allocation5 + $0x6c] sm:$0xff] %v1888
        %1901 = vst [vmem:[#allocation5 + $0x74] sm:$0xff] %v1890
        %1902 = vst [vmem:[#allocation5 + $0x7c] sm:$0xff] %v1892
        %1903 = vst [vmem:[#allocation5 + $0x84] sm:$0xff] %v1894
        %1904 = vst.msk [vmem:[#allocation5 + $0x8c] sm:$0xf] %vm1774, %v1881
        %v1905 = vld [vmem:[#allocation4] sm:$0xff]
        %v1906 = vld [vmem:[#allocation4 + $0x8] sm:$0xff]
        %v1907 = vld [vmem:[#allocation4 + $0x10] sm:$0xff]
        %v1908 = vld [vmem:[#allocation4 + $0x18] sm:$0xff]
        %v1909 = vld [vmem:[#allocation4 + $0x20] sm:$0xf]
        %1915 = vrot.lane.b32.xlu0 %v1905, 124
        %v1916 = vpop.permute.xlu0 %1915
        %1917 = vrot.lane.b32.xlu0 %v1906, 124
        %v1918 = vpop.permute.xlu0 %1917
        %1919 = vrot.lane.b32.xlu0 %v1907, 124
        %v1920 = vpop.permute.xlu0 %1919
        %1921 = vrot.lane.b32.xlu0 %v1908, 124
        %v1922 = vpop.permute.xlu0 %1921
        %1923 = vrot.lane.b32.xlu0 %v1909, 124
        %v1924 = vpop.permute.xlu0 %1923
        %v1925 = vrot.slane %v1916, 4
        %v1926 = vrot.slane %v1918, 4
        %v1927 = vrot.slane %v1920, 4
        %v1928 = vrot.slane %v1922, 4
        %v1929 = vrot.slane %v1924, 4
        %v1930 = vsel %vm439, %v1925, %v1926
        %v1931 = vsel %vm673, %v1916, %v1930
        %v1932 = vsel %vm439, %v1926, %v1927
        %v1933 = vsel %vm673, %v1918, %v1932
        %v1934 = vsel %vm439, %v1927, %v1928
        %v1935 = vsel %vm673, %v1920, %v1934
        %v1936 = vsel %vm439, %v1928, %v1929
        %v1937 = vsel %vm673, %v1922, %v1936
        %1943 = vst [vmem:[#allocation5 + $0x90] sm:$0xff] %v1931
        %1944 = vst [vmem:[#allocation5 + $0x98] sm:$0xff] %v1933
        %1945 = vst [vmem:[#allocation5 + $0xa0] sm:$0xff] %v1935
        %1946 = vst [vmem:[#allocation5 + $0xa8] sm:$0xff] %v1937
        %1947 = vst.msk [vmem:[#allocation5 + $0xb0] sm:$0xf] %vm1774, %v1924
        %v1948 = vld [vmem:[#allocation4] sm:$0xff]
        %v1949 = vld [vmem:[#allocation4 + $0x8] sm:$0xff]
        %v1950 = vld [vmem:[#allocation4 + $0x10] sm:$0xff]
        %v1951 = vld [vmem:[#allocation4 + $0x18] sm:$0xff]
        %v1952 = vld [vmem:[#allocation4 + $0x20] sm:$0xf]
        %1958 = vrot.lane.b32.xlu0 %v1948, 123
        %v1959 = vpop.permute.xlu0 %1958
        %1960 = vrot.lane.b32.xlu0 %v1949, 123
        %v1961 = vpop.permute.xlu0 %1960
        %1962 = vrot.lane.b32.xlu0 %v1950, 123
        %v1963 = vpop.permute.xlu0 %1962
        %1964 = vrot.lane.b32.xlu0 %v1951, 123
        %v1965 = vpop.permute.xlu0 %1964
        %1966 = vrot.lane.b32.xlu0 %v1952, 123
        %v1967 = vpop.permute.xlu0 %1966
        %v1968 = vrot.slane %v1959, 4
        %v1969 = vrot.slane %v1961, 4
        %v1970 = vrot.slane %v1963, 4
        %v1971 = vrot.slane %v1965, 4
        %v1972 = vrot.slane %v1967, 4
        %v1973 = vsel %vm439, %v1968, %v1969
        %v1974 = vsel %vm751, %v1959, %v1973
        %v1975 = vsel %vm439, %v1969, %v1970
        %v1976 = vsel %vm751, %v1961, %v1975
        %v1977 = vsel %vm439, %v1970, %v1971
        %v1978 = vsel %vm751, %v1963, %v1977
        %v1979 = vsel %vm439, %v1971, %v1972
        %v1980 = vsel %vm751, %v1965, %v1979
        %1986 = vst [vmem:[#allocation5 + $0xb4] sm:$0xff] %v1974
        %1987 = vst [vmem:[#allocation5 + $0xbc] sm:$0xff] %v1976
        %1988 = vst [vmem:[#allocation5 + $0xc4] sm:$0xff] %v1978
        %1989 = vst [vmem:[#allocation5 + $0xcc] sm:$0xff] %v1980
        %1990 = vst.msk [vmem:[#allocation5 + $0xd4] sm:$0xf] %vm1774, %v1967
        %v1991 = vld [vmem:[#allocation4] sm:$0xff]
        %v1992 = vld [vmem:[#allocation4 + $0x8] sm:$0xff]
        %v1993 = vld [vmem:[#allocation4 + $0x10] sm:$0xff]
        %v1994 = vld [vmem:[#allocation4 + $0x18] sm:$0xff]
        %v1995 = vld [vmem:[#allocation4 + $0x20] sm:$0xf]
        %2001 = vrot.lane.b32.xlu0 %v1991, 122
        %v2002 = vpop.permute.xlu0 %2001
        %2003 = vrot.lane.b32.xlu0 %v1992, 122
        %v2004 = vpop.permute.xlu0 %2003
        %2005 = vrot.lane.b32.xlu0 %v1993, 122
        %v2006 = vpop.permute.xlu0 %2005
        %2007 = vrot.lane.b32.xlu0 %v1994, 122
        %v2008 = vpop.permute.xlu0 %2007
        %2009 = vrot.lane.b32.xlu0 %v1995, 122
        %v2010 = vpop.permute.xlu0 %2009
        %v2011 = vrot.slane %v2002, 4
        %v2012 = vrot.slane %v2004, 4
        %v2013 = vrot.slane %v2006, 4
        %v2014 = vrot.slane %v2008, 4
        %v2015 = vrot.slane %v2010, 4
        %v2016 = vsel %vm439, %v2011, %v2012
        %v2017 = vsel %vm828, %v2002, %v2016
        %v2018 = vsel %vm439, %v2012, %v2013
        %v2019 = vsel %vm828, %v2004, %v2018
        %v2020 = vsel %vm439, %v2013, %v2014
        %v2021 = vsel %vm828, %v2006, %v2020
        %v2022 = vsel %vm439, %v2014, %v2015
        %v2023 = vsel %vm828, %v2008, %v2022
        %2029 = vst [vmem:[#allocation5 + $0xd8] sm:$0xff] %v2017
        %2030 = vst [vmem:[#allocation5 + $0xe0] sm:$0xff] %v2019
        %2031 = vst [vmem:[#allocation5 + $0xe8] sm:$0xff] %v2021
        %2032 = vst [vmem:[#allocation5 + $0xf0] sm:$0xff] %v2023
        %2033 = vst.msk [vmem:[#allocation5 + $0xf8] sm:$0xf] %vm1774, %v2010
        %v2034 = vld [vmem:[#allocation4] sm:$0xff]
        %v2035 = vld [vmem:[#allocation4 + $0x8] sm:$0xff]
        %v2036 = vld [vmem:[#allocation4 + $0x10] sm:$0xff]
        %v2037 = vld [vmem:[#allocation4 + $0x18] sm:$0xff]
        %v2038 = vld [vmem:[#allocation4 + $0x20] sm:$0xf]
        %2044 = vrot.lane.b32.xlu0 %v2034, 121
        %v2045 = vpop.permute.xlu0 %2044
        %2046 = vrot.lane.b32.xlu0 %v2035, 121
        %v2047 = vpop.permute.xlu0 %2046
        %2048 = vrot.lane.b32.xlu0 %v2036, 121
        %v2049 = vpop.permute.xlu0 %2048
        %2050 = vrot.lane.b32.xlu0 %v2037, 121
        %v2051 = vpop.permute.xlu0 %2050
        %2052 = vrot.lane.b32.xlu0 %v2038, 121
        %v2053 = vpop.permute.xlu0 %2052
        %v2054 = vrot.slane %v2045, 4
        %v2055 = vrot.slane %v2047, 4
        %v2056 = vrot.slane %v2049, 4
        %v2057 = vrot.slane %v2051, 4
        %v2058 = vrot.slane %v2053, 4
        %v2059 = vsel %vm439, %v2054, %v2055
        %v2060 = vsel %vm906, %v2045, %v2059
        %v2061 = vsel %vm439, %v2055, %v2056
        %v2062 = vsel %vm906, %v2047, %v2061
        %v2063 = vsel %vm439, %v2056, %v2057
        %v2064 = vsel %vm906, %v2049, %v2063
        %v2065 = vsel %vm439, %v2057, %v2058
        %v2066 = vsel %vm906, %v2051, %v2065
        %2072 = vst [vmem:[#allocation5 + $0xfc] sm:$0xff] %v2060
        %2073 = vst [vmem:[#allocation5 + $0x104] sm:$0xff] %v2062
        %2074 = vst [vmem:[#allocation5 + $0x10c] sm:$0xff] %v2064
        %2075 = vst [vmem:[#allocation5 + $0x114] sm:$0xff] %v2066
        %2076 = vst.msk [vmem:[#allocation5 + $0x11c] sm:$0xf] %vm1774, %v2053
        %v2077 = vld [vmem:[#allocation4] sm:$0xff]
        %v2078 = vld [vmem:[#allocation4 + $0x8] sm:$0xff]
        %v2079 = vld [vmem:[#allocation4 + $0x10] sm:$0xff]
        %v2080 = vld [vmem:[#allocation4 + $0x18] sm:$0xff]
        %v2081 = vld [vmem:[#allocation4 + $0x20] sm:$0xf]
        %2087 = vrot.lane.b32.xlu0 %v2077, 120
        %v2088 = vpop.permute.xlu0 %2087
        %2089 = vrot.lane.b32.xlu0 %v2078, 120
        %v2090 = vpop.permute.xlu0 %2089
        %2091 = vrot.lane.b32.xlu0 %v2079, 120
        %v2092 = vpop.permute.xlu0 %2091
        %2093 = vrot.lane.b32.xlu0 %v2080, 120
        %v2094 = vpop.permute.xlu0 %2093
        %2095 = vrot.lane.b32.xlu0 %v2081, 120
        %v2096 = vpop.permute.xlu0 %2095
        %v2097 = vrot.slane %v2088, 4
        %v2098 = vrot.slane %v2090, 4
        %v2099 = vrot.slane %v2092, 4
        %v2100 = vrot.slane %v2094, 4
        %v2101 = vrot.slane %v2096, 4
        %v2102 = vsel %vm439, %v2097, %v2098
        %v2103 = vsel %vm983, %v2088, %v2102
        %v2104 = vsel %vm439, %v2098, %v2099
        %v2105 = vsel %vm983, %v2090, %v2104
        %v2106 = vsel %vm439, %v2099, %v2100
        %v2107 = vsel %vm983, %v2092, %v2106
        %v2108 = vsel %vm439, %v2100, %v2101
        %v2109 = vsel %vm983, %v2094, %v2108
        %2115 = vst [vmem:[#allocation5 + $0x120] sm:$0xff] %v2103
        %2116 = vst [vmem:[#allocation5 + $0x128] sm:$0xff] %v2105
        %2117 = vst [vmem:[#allocation5 + $0x130] sm:$0xff] %v2107
        %2118 = vst [vmem:[#allocation5 + $0x138] sm:$0xff] %v2109
        %2119 = vst.msk [vmem:[#allocation5 + $0x140] sm:$0xf] %vm1774, %v2096
        %v2120 = vld [vmem:[%s3] sm:$0xf]
        %v2121 = vld [vmem:[#allocation5] sm:$0xff]
        %v2122 = vld [vmem:[#allocation5 + $0x8] sm:$0xff]
        %v2123 = vld [vmem:[#allocation5 + $0x10] sm:$0xff]
        %v2124 = vld [vmem:[#allocation5 + $0x18] sm:$0xff]
        %v2125 = vld [vmem:[#allocation5 + $0x20] sm:$0xf]
        %v2126 = vld [vmem:[#allocation5 + $0x24] sm:$0xff]
        %v2127 = vld [vmem:[#allocation5 + $0x2c] sm:$0xff]
        %v2128 = vld [vmem:[#allocation5 + $0x34] sm:$0xff]
        %v2129 = vld [vmem:[#allocation5 + $0x3c] sm:$0xff]
        %v2130 = vld [vmem:[#allocation5 + $0x44] sm:$0xf]
        %v2131 = vld [vmem:[#allocation5 + $0x48] sm:$0xff]
        %v2132 = vld [vmem:[#allocation5 + $0x50] sm:$0xff]
        %v2133 = vld [vmem:[#allocation5 + $0x58] sm:$0xff]
        %v2134 = vld [vmem:[#allocation5 + $0x60] sm:$0xff]
        %v2135 = vld [vmem:[#allocation5 + $0x68] sm:$0xf]
        %v2136 = vld [vmem:[#allocation5 + $0x6c] sm:$0xff]
        %v2137 = vld [vmem:[#allocation5 + $0x74] sm:$0xff]
        %v2138 = vld [vmem:[#allocation5 + $0x7c] sm:$0xff]
        %v2139 = vld [vmem:[#allocation5 + $0x84] sm:$0xff]
        %v2140 = vld [vmem:[#allocation5 + $0x8c] sm:$0xf]
        %v2141 = vld [vmem:[#allocation5 + $0x90] sm:$0xff]
        %v2142 = vld [vmem:[#allocation5 + $0x98] sm:$0xff]
        %v2143 = vld [vmem:[#allocation5 + $0xa0] sm:$0xff]
        %v2144 = vld [vmem:[#allocation5 + $0xa8] sm:$0xff]
        %v2145 = vld [vmem:[#allocation5 + $0xb0] sm:$0xf]
        %v2146 = vld [vmem:[#allocation5 + $0xb4] sm:$0xff]
        %v2147 = vld [vmem:[#allocation5 + $0xbc] sm:$0xff]
        %v2148 = vld [vmem:[#allocation5 + $0xc4] sm:$0xff]
        %v2149 = vld [vmem:[#allocation5 + $0xcc] sm:$0xff]
        %v2150 = vld [vmem:[#allocation5 + $0xd4] sm:$0xf]
        %v2151 = vld [vmem:[#allocation5 + $0xd8] sm:$0xff]
        %v2152 = vld [vmem:[#allocation5 + $0xe0] sm:$0xff]
        %v2153 = vld [vmem:[#allocation5 + $0xe8] sm:$0xff]
        %v2154 = vld [vmem:[#allocation5 + $0xf0] sm:$0xff]
        %v2155 = vld [vmem:[#allocation5 + $0xf8] sm:$0xf]
        %v2156 = vld [vmem:[#allocation5 + $0xfc] sm:$0xff]
        %v2157 = vld [vmem:[#allocation5 + $0x104] sm:$0xff]
        %v2158 = vld [vmem:[#allocation5 + $0x10c] sm:$0xff]
        %v2159 = vld [vmem:[#allocation5 + $0x114] sm:$0xff]
        %v2160 = vld [vmem:[#allocation5 + $0x11c] sm:$0xf]
        %v2161 = vld [vmem:[#allocation5 + $0x120] sm:$0xff]
        %v2162 = vld [vmem:[#allocation5 + $0x128] sm:$0xff]
        %v2163 = vld [vmem:[#allocation5 + $0x130] sm:$0xff]
        %v2164 = vld [vmem:[#allocation5 + $0x138] sm:$0xff]
        %v2165 = vld [vmem:[#allocation5 + $0x140] sm:$0xf]
        %v2166 = vld [vmem:[%s4] sm:$0xff]
        %2168 = vset.pattern.permute.xlu0 0
        %2169 = vperm.xlu0 %2168, %v2166
        %v2170 = vpop.permute.xlu0 %2169
        %v2217 = vunpack.c.l.b16 %v2121
        %v2218 = vunpack.c.h.b16 %v2121
        %v2219 = vunpack.c.l.b16 %v2122
        %v2220 = vunpack.c.h.b16 %v2122
        %v2221 = vunpack.c.l.b16 %v2123
        %v2222 = vunpack.c.h.b16 %v2123
        %v2223 = vunpack.c.l.b16 %v2124
        %v2224 = vunpack.c.h.b16 %v2124
        %v2225 = vunpack.c.l.b16 %v2125
        %v2226 = vunpack.c.l.b16 %v2126
        %v2227 = vunpack.c.h.b16 %v2126
        %v2228 = vunpack.c.l.b16 %v2127
        %v2229 = vunpack.c.h.b16 %v2127
        %v2230 = vunpack.c.l.b16 %v2128
        %v2231 = vunpack.c.h.b16 %v2128
        %v2232 = vunpack.c.l.b16 %v2129
        %v2233 = vunpack.c.h.b16 %v2129
        %v2234 = vunpack.c.l.b16 %v2130
        %v2235 = vunpack.c.l.b16 %v2131
        %v2236 = vunpack.c.h.b16 %v2131
        %v2237 = vunpack.c.l.b16 %v2132
        %v2238 = vunpack.c.h.b16 %v2132
        %v2239 = vunpack.c.l.b16 %v2133
        %v2240 = vunpack.c.h.b16 %v2133
        %v2241 = vunpack.c.l.b16 %v2134
        %v2242 = vunpack.c.h.b16 %v2134
        %v2243 = vunpack.c.l.b16 %v2135
        %v2244 = vunpack.c.l.b16 %v2136
        %v2245 = vunpack.c.h.b16 %v2136
        %v2246 = vunpack.c.l.b16 %v2137
        %v2247 = vunpack.c.h.b16 %v2137
        %v2248 = vunpack.c.l.b16 %v2138
        %v2249 = vunpack.c.h.b16 %v2138
        %v2250 = vunpack.c.l.b16 %v2139
        %v2251 = vunpack.c.h.b16 %v2139
        %v2252 = vunpack.c.l.b16 %v2140
        %v2253 = vunpack.c.l.b16 %v2141
        %v2254 = vunpack.c.h.b16 %v2141
        %v2255 = vunpack.c.l.b16 %v2142
        %v2256 = vunpack.c.h.b16 %v2142
        %v2257 = vunpack.c.l.b16 %v2143
        %v2258 = vunpack.c.h.b16 %v2143
        %v2259 = vunpack.c.l.b16 %v2144
        %v2260 = vunpack.c.h.b16 %v2144
        %v2261 = vunpack.c.l.b16 %v2145
        %v2262 = vunpack.c.l.b16 %v2146
        %v2263 = vunpack.c.h.b16 %v2146
        %v2264 = vunpack.c.l.b16 %v2147
        %v2265 = vunpack.c.h.b16 %v2147
        %v2266 = vunpack.c.l.b16 %v2148
        %v2267 = vunpack.c.h.b16 %v2148
        %v2268 = vunpack.c.l.b16 %v2149
        %v2269 = vunpack.c.h.b16 %v2149
        %v2270 = vunpack.c.l.b16 %v2150
        %v2271 = vunpack.c.l.b16 %v2151
        %v2272 = vunpack.c.h.b16 %v2151
        %v2273 = vunpack.c.l.b16 %v2152
        %v2274 = vunpack.c.h.b16 %v2152
        %v2275 = vunpack.c.l.b16 %v2153
        %v2276 = vunpack.c.h.b16 %v2153
        %v2277 = vunpack.c.l.b16 %v2154
        %v2278 = vunpack.c.h.b16 %v2154
        %v2279 = vunpack.c.l.b16 %v2155
        %v2280 = vunpack.c.l.b16 %v2156
        %v2281 = vunpack.c.h.b16 %v2156
        %v2282 = vunpack.c.l.b16 %v2157
        %v2283 = vunpack.c.h.b16 %v2157
        %v2284 = vunpack.c.l.b16 %v2158
        %v2285 = vunpack.c.h.b16 %v2158
        %v2286 = vunpack.c.l.b16 %v2159
        %v2287 = vunpack.c.h.b16 %v2159
        %v2288 = vunpack.c.l.b16 %v2160
        %v2289 = vunpack.c.l.b16 %v2161
        %v2290 = vunpack.c.h.b16 %v2161
        %v2291 = vunpack.c.l.b16 %v2162
        %v2292 = vunpack.c.h.b16 %v2162
        %v2293 = vunpack.c.l.b16 %v2163
        %v2294 = vunpack.c.h.b16 %v2163
        %v2295 = vunpack.c.l.b16 %v2164
        %v2296 = vunpack.c.h.b16 %v2164
        %v2297 = vunpack.c.l.b16 %v2165
        %v2298 = vpack.c.b16 %v2226, %v2217
        %v2299 = vpack.c.b16 %v2227, %v2218
        %v2300 = vpack.c.b16 %v2228, %v2219
        %v2301 = vpack.c.b16 %v2229, %v2220
        %v2302 = vpack.c.b16 %v2230, %v2221
        %v2303 = vpack.c.b16 %v2231, %v2222
        %v2304 = vpack.c.b16 %v2232, %v2223
        %v2305 = vpack.c.b16 %v2233, %v2224
        %v2306 = vpack.c.b16 %v2234, %v2225
        %v2307 = vpack.c.b16 %v2244, %v2235
        %v2308 = vpack.c.b16 %v2245, %v2236
        %v2309 = vpack.c.b16 %v2246, %v2237
        %v2310 = vpack.c.b16 %v2247, %v2238
        %v2311 = vpack.c.b16 %v2248, %v2239
        %v2312 = vpack.c.b16 %v2249, %v2240
        %v2313 = vpack.c.b16 %v2250, %v2241
        %v2314 = vpack.c.b16 %v2251, %v2242
        %v2315 = vpack.c.b16 %v2252, %v2243
        %v2316 = vpack.c.b16 %v2262, %v2253
        %v2317 = vpack.c.b16 %v2263, %v2254
        %v2318 = vpack.c.b16 %v2264, %v2255
        %v2319 = vpack.c.b16 %v2265, %v2256
        %v2320 = vpack.c.b16 %v2266, %v2257
        %v2321 = vpack.c.b16 %v2267, %v2258
        %v2322 = vpack.c.b16 %v2268, %v2259
        %v2323 = vpack.c.b16 %v2269, %v2260
        %v2324 = vpack.c.b16 %v2270, %v2261
        %v2325 = vpack.c.b16 %v2280, %v2271
        %v2326 = vpack.c.b16 %v2281, %v2272
        %v2327 = vpack.c.b16 %v2282, %v2273
        %v2328 = vpack.c.b16 %v2283, %v2274
        %v2329 = vpack.c.b16 %v2284, %v2275
        %v2330 = vpack.c.b16 %v2285, %v2276
        %v2331 = vpack.c.b16 %v2286, %v2277
        %v2332 = vpack.c.b16 %v2287, %v2278
        %v2333 = vpack.c.b16 %v2288, %v2279
        %v2334 = vpack.c.b16 %v2289, %v2289
        %v2335 = vpack.c.b16 %v2290, %v2290
        %v2336 = vpack.c.b16 %v2291, %v2291
        %v2337 = vpack.c.b16 %v2292, %v2292
        %v2338 = vpack.c.b16 %v2293, %v2293
        %v2339 = vpack.c.b16 %v2294, %v2294
        %v2340 = vpack.c.b16 %v2295, %v2295
        %v2341 = vpack.c.b16 %v2296, %v2296
        %v2342 = vpack.c.b16 %v2297, %v2297
        %vm2379 = vcmask 588800
        %v2381 = vsel %vm2379, %v2120, 0
        %vm2383 = vcmask 1043456
        %v2385 = vsel %vm2383, %v2334, 0
        %v2388 = vsel %vm2383, %v2335, 0
        %v2391 = vsel %vm2383, %v2336, 0
        %v2394 = vsel %vm2383, %v2337, 0
        %v2397 = vsel %vm2383, %v2338, 0
        %v2400 = vsel %vm2383, %v2339, 0
        %v2403 = vsel %vm2383, %v2340, 0
        %v2406 = vsel %vm2383, %v2341, 0
        %v2409 = vsel %vm2383, %v2342, 0
        %2411 = vmatprep.subr.bf16.mxu0 0
        %2412 = vmatpush1.bf16.msra.mxu0 0
        %2413 = vmatprep.subr.bf16.mxu0 0
        %2414 = vmatpush1.bf16.msra.mxu0 0
        %2415 = vmatprep.subr.bf16.mxu0 0
        %2416 = vmatpush1.bf16.msra.mxu0 0
        %2417 = vmatprep.subr.bf16.mxu0 %v2388
        %2418 = vmatpush1.bf16.msra.mxu0 %v2385
        %2419 = vmatprep.subr.bf16.mxu0 %v2326
        %2420 = vmatpush1.bf16.msra.mxu0 %v2325
        %2421 = vmatprep.subr.bf16.mxu0 %v2317
        %2422 = vmatpush1.bf16.msra.mxu0 %v2316
        %2423 = vmatprep.subr.bf16.mxu0 %v2308
        %2424 = vmatpush1.bf16.msra.mxu0 %v2307
        %2425 = vmatprep.subr.bf16.mxu0 %v2299
        %2426 = vmatpush1.bf16.msra.mxu0 %v2298
        %2427 = vmatprep.subr.bf16.mxu0 0
        %2428 = vmatpush2.bf16.msra.mxu0 0
        %2429 = vmatprep.subr.bf16.mxu0 0
        %2430 = vmatpush2.bf16.msra.mxu0 0
        %2431 = vmatprep.subr.bf16.mxu0 0
        %2432 = vmatpush2.bf16.msra.mxu0 0
        %2433 = vmatprep.subr.bf16.mxu0 0
        %2434 = vmatpush2.bf16.msra.mxu0 0
        %2435 = vmatprep.subr.bf16.mxu0 0
        %2436 = vmatpush2.bf16.msra.mxu0 0
        %2437 = vmatprep.subr.bf16.mxu0 0
        %2438 = vmatpush2.bf16.msra.mxu0 0
        %2439 = vmatprep.subr.bf16.mxu0 0
        %2440 = vmatpush2.bf16.msra.mxu0 0
        %2441 = vmatprep.subr.bf16.mxu0 0
        %2442 = vmatpush2.bf16.msra.mxu0 0
        %2443 = vmatprep.mubr.bf16.mxu0 0
        %2444 = vmatmul.mubr.bf16.gmra.mxu0 %v2381
        %v2445 = vpop.f32.mrf.mxu0
        %v2446 = vadd.f32 %v2170, %v2445
        %v2447 = vpop.f32.mrf.mxu0
        %v2448 = vadd.f32 %v2170, %v2447
        %v2449 = vpop.f32.mrf.mxu0
        %v2450 = vpop.f32.mrf.mxu0
        %2451 = vdwg.mxu0
        %2452 = vmatprep.subr.bf16.mxu0 0
        %2453 = vmatpush1.bf16.msra.mxu0 0
        %2454 = vmatprep.subr.bf16.mxu0 0
        %2455 = vmatpush1.bf16.msra.mxu0 0
        %2456 = vmatprep.subr.bf16.mxu0 0
        %2457 = vmatpush1.bf16.msra.mxu0 0
        %2458 = vmatprep.subr.bf16.mxu0 %v2394
        %2459 = vmatpush1.bf16.msra.mxu0 %v2391
        %2460 = vmatprep.subr.bf16.mxu0 %v2328
        %2461 = vmatpush1.bf16.msra.mxu0 %v2327
        %2462 = vmatprep.subr.bf16.mxu0 %v2319
        %2463 = vmatpush1.bf16.msra.mxu0 %v2318
        %2464 = vmatprep.subr.bf16.mxu0 %v2310
        %2465 = vmatpush1.bf16.msra.mxu0 %v2309
        %2466 = vmatprep.subr.bf16.mxu0 %v2301
        %2467 = vmatpush1.bf16.msra.mxu0 %v2300
        %2468 = vmatprep.subr.bf16.mxu0 0
        %2469 = vmatpush2.bf16.msra.mxu0 0
        %2470 = vmatprep.subr.bf16.mxu0 0
        %2471 = vmatpush2.bf16.msra.mxu0 0
        %2472 = vmatprep.subr.bf16.mxu0 0
        %2473 = vmatpush2.bf16.msra.mxu0 0
        %2474 = vmatprep.subr.bf16.mxu0 0
        %2475 = vmatpush2.bf16.msra.mxu0 0
        %2476 = vmatprep.subr.bf16.mxu0 0
        %2477 = vmatpush2.bf16.msra.mxu0 0
        %2478 = vmatprep.subr.bf16.mxu0 0
        %2479 = vmatpush2.bf16.msra.mxu0 0
        %2480 = vmatprep.subr.bf16.mxu0 0
        %2481 = vmatpush2.bf16.msra.mxu0 0
        %2482 = vmatprep.subr.bf16.mxu0 0
        %2483 = vmatpush2.bf16.msra.mxu0 0
        %2484 = vmatprep.mubr.bf16.mxu0 0
        %2485 = vmatmul.mubr.bf16.gmra.mxu0 %v2381
        %v2486 = vpop.f32.mrf.mxu0
        %v2487 = vadd.f32 %v2170, %v2486
        %v2488 = vpop.f32.mrf.mxu0
        %v2489 = vadd.f32 %v2170, %v2488
        %v2490 = vpop.f32.mrf.mxu0
        %v2491 = vpop.f32.mrf.mxu0
        %2492 = vdwg.mxu0
        %2493 = vmatprep.subr.bf16.mxu0 0
        %2494 = vmatpush1.bf16.msra.mxu0 0
        %2495 = vmatprep.subr.bf16.mxu0 0
        %2496 = vmatpush1.bf16.msra.mxu0 0
        %2497 = vmatprep.subr.bf16.mxu0 0
        %2498 = vmatpush1.bf16.msra.mxu0 0
        %2499 = vmatprep.subr.bf16.mxu0 %v2400
        %2500 = vmatpush1.bf16.msra.mxu0 %v2397
        %2501 = vmatprep.subr.bf16.mxu0 %v2330
        %2502 = vmatpush1.bf16.msra.mxu0 %v2329
        %2503 = vmatprep.subr.bf16.mxu0 %v2321
        %2504 = vmatpush1.bf16.msra.mxu0 %v2320
        %2505 = vmatprep.subr.bf16.mxu0 %v2312
        %2506 = vmatpush1.bf16.msra.mxu0 %v2311
        %2507 = vmatprep.subr.bf16.mxu0 %v2303
        %2508 = vmatpush1.bf16.msra.mxu0 %v2302
        %2509 = vmatprep.subr.bf16.mxu0 0
        %2510 = vmatpush2.bf16.msra.mxu0 0
        %2511 = vmatprep.subr.bf16.mxu0 0
        %2512 = vmatpush2.bf16.msra.mxu0 0
        %2513 = vmatprep.subr.bf16.mxu0 0
        %2514 = vmatpush2.bf16.msra.mxu0 0
        %2515 = vmatprep.subr.bf16.mxu0 0
        %2516 = vmatpush2.bf16.msra.mxu0 0
        %2517 = vmatprep.subr.bf16.mxu0 0
        %2518 = vmatpush2.bf16.msra.mxu0 0
        %2519 = vmatprep.subr.bf16.mxu0 0
        %2520 = vmatpush2.bf16.msra.mxu0 0
        %2521 = vmatprep.subr.bf16.mxu0 0
        %2522 = vmatpush2.bf16.msra.mxu0 0
        %2523 = vmatprep.subr.bf16.mxu0 0
        %2524 = vmatpush2.bf16.msra.mxu0 0
        %2525 = vmatprep.mubr.bf16.mxu0 0
        %2526 = vmatmul.mubr.bf16.gmra.mxu0 %v2381
        %v2527 = vpop.f32.mrf.mxu0
        %v2528 = vadd.f32 %v2170, %v2527
        %v2529 = vpop.f32.mrf.mxu0
        %v2530 = vadd.f32 %v2170, %v2529
        %v2531 = vpop.f32.mrf.mxu0
        %v2532 = vpop.f32.mrf.mxu0
        %2533 = vdwg.mxu0
        %2534 = vmatprep.subr.bf16.mxu0 0
        %2535 = vmatpush1.bf16.msra.mxu0 0
        %2536 = vmatprep.subr.bf16.mxu0 0
        %2537 = vmatpush1.bf16.msra.mxu0 0
        %2538 = vmatprep.subr.bf16.mxu0 0
        %2539 = vmatpush1.bf16.msra.mxu0 0
        %2540 = vmatprep.subr.bf16.mxu0 %v2406
        %2541 = vmatpush1.bf16.msra.mxu0 %v2403
        %2542 = vmatprep.subr.bf16.mxu0 %v2332
        %2543 = vmatpush1.bf16.msra.mxu0 %v2331
        %2544 = vmatprep.subr.bf16.mxu0 %v2323
        %2545 = vmatpush1.bf16.msra.mxu0 %v2322
        %2546 = vmatprep.subr.bf16.mxu0 %v2314
        %2547 = vmatpush1.bf16.msra.mxu0 %v2313
        %2548 = vmatprep.subr.bf16.mxu0 %v2305
        %2549 = vmatpush1.bf16.msra.mxu0 %v2304
        %2550 = vmatprep.subr.bf16.mxu0 0
        %2551 = vmatpush2.bf16.msra.mxu0 0
        %2552 = vmatprep.subr.bf16.mxu0 0
        %2553 = vmatpush2.bf16.msra.mxu0 0
        %2554 = vmatprep.subr.bf16.mxu0 0
        %2555 = vmatpush2.bf16.msra.mxu0 0
        %2556 = vmatprep.subr.bf16.mxu0 0
        %2557 = vmatpush2.bf16.msra.mxu0 0
        %2558 = vmatprep.subr.bf16.mxu0 0
        %2559 = vmatpush2.bf16.msra.mxu0 0
        %2560 = vmatprep.subr.bf16.mxu0 0
        %2561 = vmatpush2.bf16.msra.mxu0 0
        %2562 = vmatprep.subr.bf16.mxu0 0
        %2563 = vmatpush2.bf16.msra.mxu0 0
        %2564 = vmatprep.subr.bf16.mxu0 0
        %2565 = vmatpush2.bf16.msra.mxu0 0
        %2566 = vmatprep.mubr.bf16.mxu0 0
        %2567 = vmatmul.mubr.bf16.gmra.mxu0 %v2381
        %v2568 = vpop.f32.mrf.mxu0
        %v2569 = vadd.f32 %v2170, %v2568
        %v2570 = vpop.f32.mrf.mxu0
        %v2571 = vadd.f32 %v2170, %v2570
        %v2572 = vpop.f32.mrf.mxu0
        %v2573 = vpop.f32.mrf.mxu0
        %2574 = vdwg.mxu0
        %2575 = vmatprep.subr.bf16.mxu0 0
        %2576 = vmatpush1.bf16.msra.mxu0 0
        %2577 = vmatprep.subr.bf16.mxu0 0
        %2578 = vmatpush1.bf16.msra.mxu0 0
        %2579 = vmatprep.subr.bf16.mxu0 0
        %2580 = vmatpush1.bf16.msra.mxu0 0
        %2581 = vmatprep.subr.bf16.mxu0 0
        %2582 = vmatpush1.bf16.msra.mxu0 %v2409
        %2583 = vmatprep.subr.bf16.mxu0 0
        %2584 = vmatpush1.bf16.msra.mxu0 %v2333
        %2585 = vmatprep.subr.bf16.mxu0 0
        %2586 = vmatpush1.bf16.msra.mxu0 %v2324
        %2587 = vmatprep.subr.bf16.mxu0 0
        %2588 = vmatpush1.bf16.msra.mxu0 %v2315
        %2589 = vmatprep.subr.bf16.mxu0 0
        %2590 = vmatpush1.bf16.msra.mxu0 %v2306
        %2591 = vmatprep.subr.bf16.mxu0 0
        %2592 = vmatpush2.bf16.msra.mxu0 0
        %2593 = vmatprep.subr.bf16.mxu0 0
        %2594 = vmatpush2.bf16.msra.mxu0 0
        %2595 = vmatprep.subr.bf16.mxu0 0
        %2596 = vmatpush2.bf16.msra.mxu0 0
        %2597 = vmatprep.subr.bf16.mxu0 0
        %2598 = vmatpush2.bf16.msra.mxu0 0
        %2599 = vmatprep.subr.bf16.mxu0 0
        %2600 = vmatpush2.bf16.msra.mxu0 0
        %2601 = vmatprep.subr.bf16.mxu0 0
        %2602 = vmatpush2.bf16.msra.mxu0 0
        %2603 = vmatprep.subr.bf16.mxu0 0
        %2604 = vmatpush2.bf16.msra.mxu0 0
        %2605 = vmatprep.subr.bf16.mxu0 0
        %2606 = vmatpush2.bf16.msra.mxu0 0
        %2607 = vmatprep.mubr.bf16.mxu0 0
        %2608 = vmatmul.mubr.bf16.gmra.mxu0 %v2381
        %v2609 = vpop.f32.mrf.mxu0
        %v2610 = vadd.f32 %v2170, %v2609
        %v2611 = vpop.f32.mrf.mxu0
        %v2612 = vpop.f32.mrf.mxu0
        %v2613 = vpop.f32.mrf.mxu0
        %2614 = vdwg.mxu0
        %v2615 = vmax.f32 %v2446, 0.0
        %v2616 = vmax.f32 %v2448, 0.0
        %v2617 = vmax.f32 %v2487, 0.0
        %v2618 = vmax.f32 %v2489, 0.0
        %v2619 = vmax.f32 %v2528, 0.0
        %v2620 = vmax.f32 %v2530, 0.0
        %v2621 = vmax.f32 %v2569, 0.0
        %v2622 = vmax.f32 %v2571, 0.0
        %v2623 = vmax.f32 %v2610, 0.0
        %2624 = vst [vmem:[%s220] sm:$0xff] %v2615
        %2627 = vrot.lane.b32.xlu0 %v2616, 120
        %v2628 = vpop.permute.xlu0 %2627
        %2629 = vrot.lane.b32.xlu0 %v2617, 120
        %v2630 = vpop.permute.xlu0 %2629
        %vm2631 = vcmask 982016
        %v2632 = vsel %vm2631, %v2628, %v2630
        %s2634 = scalar_lea.vmem %s220, 8 [#allocation6]
        %2635 = vst [vmem:[%s2634] sm:$0xff] %v2632
        %2637 = vrot.lane.b32.xlu0 %v2617, 112
        %v2638 = vpop.permute.xlu0 %2637
        %2639 = vrot.lane.b32.xlu0 %v2618, 112
        %v2640 = vpop.permute.xlu0 %2639
        %vm2641 = vcmask 916480
        %v2642 = vsel %vm2641, %v2638, %v2640
        %s2644 = scalar_lea.vmem %s220, 16 [#allocation6]
        %2645 = vst [vmem:[%s2644] sm:$0xff] %v2642
        %2647 = vrot.lane.b32.xlu0 %v2618, 104
        %v2648 = vpop.permute.xlu0 %2647
        %2649 = vrot.lane.b32.xlu0 %v2619, 104
        %v2650 = vpop.permute.xlu0 %2649
        %vm2651 = vcmask 850944
        %v2652 = vsel %vm2651, %v2648, %v2650
        %s2654 = scalar_lea.vmem %s220, 24 [#allocation6]
        %2655 = vst [vmem:[%s2654] sm:$0xff] %v2652
        %2657 = vrot.lane.b32.xlu0 %v2619, 96
        %v2658 = vpop.permute.xlu0 %2657
        %2659 = vrot.lane.b32.xlu0 %v2620, 96
        %v2660 = vpop.permute.xlu0 %2659
        %vm2661 = vcmask 785408
        %v2662 = vsel %vm2661, %v2658, %v2660
        %s2664 = scalar_lea.vmem %s220, 32 [#allocation6]
        %2665 = vst [vmem:[%s2664] sm:$0xff] %v2662
        %2667 = vrot.lane.b32.xlu0 %v2620, 88
        %v2668 = vpop.permute.xlu0 %2667
        %2669 = vrot.lane.b32.xlu0 %v2621, 88
        %v2670 = vpop.permute.xlu0 %2669
        %vm2671 = vcmask 719872
        %v2672 = vsel %vm2671, %v2668, %v2670
        %s2674 = scalar_lea.vmem %s220, 40 [#allocation6]
        %2675 = vst [vmem:[%s2674] sm:$0xff] %v2672
        %2677 = vrot.lane.b32.xlu0 %v2621, 80
        %v2678 = vpop.permute.xlu0 %2677
        %2679 = vrot.lane.b32.xlu0 %v2622, 80
        %v2680 = vpop.permute.xlu0 %2679
        %vm2681 = vcmask 654336
        %v2682 = vsel %vm2681, %v2678, %v2680
        %s2684 = scalar_lea.vmem %s220, 48 [#allocation6]
        %2685 = vst [vmem:[%s2684] sm:$0xff] %v2682
        %2687 = vrot.lane.b32.xlu0 %v2622, 72
        %v2688 = vpop.permute.xlu0 %2687
        %2689 = vrot.lane.b32.xlu0 %v2623, 72
        %v2690 = vpop.permute.xlu0 %2689
        %v2691 = vsel %vm2379, %v2688, %v2690
        %s2693 = scalar_lea.vmem %s220, 56 [#allocation6]
        %2694 = vst [vmem:[%s2693] sm:$0xff] %v2691
        %s2695 = sand.u32 %s137, 1
        %s2696 = scalar_lea.sflag [#allocation7], %s2695
        %s2697 = sand.u32 %s137, 1
        %s2698 = smul.addr %s2697, 64
        %s2699 = scalar_lea.vmem [#allocation6], %s2698
        // Predicated region
        $region41: #{unet_conv_forward.1} parent=39 // pred_check
          %p2700 = pneg %p147
        $region42: #{unet_conv_forward.1} parent=39 // pred_check_branch
          %2702 = sbr.rel (%p2700) target = $region44
        $region43: #{unet_conv_forward.1} parent=39 // pred_region
          %s2703 = smul.u32 8, %s19
          %s2705 = ssub.s32 1024, 1024
          %2706 = vsyncadd %s2696, %s2705
          %s2707 = smul.addr %s2703, 128
          %s2708 = scalar_lea.hbm %s5, %s2707
          %s2709 = sshll.u32 %s2699, 4
          %s2710 = int_to_ptr.vmem [resolvable:$true] %s2709
          %2715 = dma.vmem_to_hbm [thread:$0]  %s2710, 1024, %s2708, %s2696, 128, 128, 8
        $region44: #{unet_conv_forward.1} parent=39 // pred_fallthru
          _
      $region40: #{unet_conv_forward.1} parent=5 // pred_fallthru
        _
      %p2716 = scmp.le.s32.totalorder 2, %s14
      // Predicated region
      $region45: #{unet_conv_forward.1} parent=5 // pred_check
        %p2717 = pneg %p2716
      $region46: #{unet_conv_forward.1} parent=5 // pred_check_branch
        %2719 = sbr.rel (%p2717) target = $region48
      $region47: #{unet_conv_forward.1} parent=5 // pred_region
        %s2720 = ssub.s32 %s14, 2
        // Predicated region
        $region49: #{unet_conv_forward.1} parent=47 // pred_check
          %p2721 = pneg %p153
        $region50: #{unet_conv_forward.1} parent=47 // pred_check_branch
          %2723 = sbr.rel (%p2721) target = $region52
        $region51: #{unet_conv_forward.1} parent=47 // pred_region
          %s2724 = sand.u32 %s138, 1
          %s2725 = scalar_lea.sflag [#allocation7], %s2724
          %s2726 = sand.u32 %s138, 1
          %s2727 = smul.addr %s2726, 64
          %s2728 = scalar_lea.vmem [#allocation6], %s2727
          %2729 = dma.done %s2725, 1024
        $region52: #{unet_conv_forward.1} parent=47 // pred_fallthru
          _
      $region48: #{unet_conv_forward.1} parent=5 // pred_fallthru
        _
    $region6: #{unet_conv_forward.1} parent=1 // loop_footer
      %s18 = sadd.s32 1, %s14
    $region7: #{unet_conv_forward.1} parent=1 // loop_footer_branch
      %13 = sbr.rel target = $region3
    $region8: #{unet_conv_forward.1} parent=1 // loop_exit
      _
    %2730 = vsyncpa [#allocation7], 1
    %s2731 = scalar_lea.sflag [#allocation7], 1
    %2732 = vsyncpa %s2731, 1

</llo_original>
